<compile_context>
chip_gen: v7x
topology: tpu7x:2x2x1
jax: 0.10.0
libtpu: 0.0.40
codegen_flags: <defaults>
</compile_context>

<pallas_src>
import math

import numpy as np

import jax
import jax.numpy as jnp
from jax.experimental import pallas as pl
from jax.experimental.pallas import tpu as pltpu

NEG_SLOPE = 0.2
BN_EPS = 1e-5


# ----------------------------------------------------------------------------
# Host-side helpers
# ----------------------------------------------------------------------------
def _reflect_index(i, n):
    """Single-reflection 'reflect' padding index (validated at build time)."""
    i = abs(i)
    if i >= n:
        i = 2 * (n - 1) - i
    assert 0 <= i < n, "reflection out of range (needs double reflection)"
    return i


def _conv_out_len(lin, k, stride, pad, dil):
    return (lin + 2 * pad - dil * (k - 1) - 1) // stride + 1


def _default_num_cores(batch):
    """2-way grid on v7x (2 TensorCores/chip), single fused step elsewhere."""
    try:
        kind = jax.devices()[0].device_kind.lower()
    except Exception:
        return 1
    cores = 2 if ("v7" in kind or "7x" in kind) else 1
    while cores > 1 and batch % cores:
        cores -= 1
    return max(cores, 1)


# ----------------------------------------------------------------------------
# In-kernel helpers (traced at kernel-build time; all shapes/indices static).
# ----------------------------------------------------------------------------
def _reflect_pad_rows(x, pad):
    """Reflect-pad a (L, C) value along rows with static 1-row slices + concat."""
    if pad == 0:
        return x
    L = x.shape[0]
    left = [x[j:j + 1, :] for j in range(pad, 0, -1)]        # x[pad] ... x[1]
    right = [x[L - 1 - j:L - j, :] for j in range(1, pad + 1)]  # x[L-2] ... x[L-1-pad]
    return jnp.concatenate(left + [x] + right, axis=0)


def _make_fused_kernel(cfgs, num_local):
    """Whole-network body; `cfgs` carry all static shapes (incl. lin/lout)."""

    def kernel(x_ref, w_ref, s_ref, g_ref, o_ref):
        cur = x_ref[...]                                  # (Bc*L0, C_in) f32, stacked
        saved = None

        for cfg in cfgs:
            K, dil, stride, pad = cfg["K"], cfg["dil"], cfg["stride"], cfg["pad"]
            cin, cout = cfg["cin"], cfg["cout"]
            lin, lout = cfg["lin"], cfg["lout"]
            li = cfg["idx"]

            if cfg["save_res"]:
                saved = cur                               # ResBlock input (f32)

            w = w_ref[li, 0:K * cin, 0:cout]              # (K*cin, cout) bf16, BN folded
            shift = s_ref[li:li + 1, 0:cout]              # (1, cout)     f32

            if K == 1 and stride == 1 and pad == 0:
                im = cur                                  # 1x1 conv: im2col is identity
            else:
                per_sample = []
                for b in range(num_local):
                    xb = cur[b * lin:(b + 1) * lin, :]    # (lin, cin) f32
                    if stride == 1:
                        xp = _reflect_pad_rows(xb, pad)   # (lin + 2*pad, cin)
                        taps = [xp[k * dil:k * dil + lout, :] for k in range(K)]
                    else:
                        # Down1d: one constant bf16 0/1 gather matmul realises
                        # reflect-pad + stride + dilation for all K taps at once.
                        g = g_ref[cfg["gidx"], 0:K * lout, 0:lin]     # (K*lout, lin)
                        t = jnp.dot(g, xb.astype(jnp.bfloat16),
                                    preferred_element_type=jnp.float32)
                        taps = [t[k * lout:(k + 1) * lout, :] for k in range(K)]
                    per_sample.append(jnp.concatenate(taps, axis=1))  # (lout, K*cin)
                im = (per_sample[0] if num_local == 1
                      else jnp.concatenate(per_sample, axis=0))       # (Bc*lout, K*cin)

            y = jnp.dot(im.astype(jnp.bfloat16), w,
                        preferred_element_type=jnp.float32)           # MXU, f32 acc
            y = y + shift                                             # folded BN shift
            if cfg["act"]:
                y = jnp.where(y >= 0.0, y, NEG_SLOPE * y)             # LeakyReLU(0.2)
            if cfg["add_res"]:
                y = y + saved                                         # residual add
            cur = y

        o_ref[...] = cur.astype(o_ref.dtype)

    return kernel


# ----------------------------------------------------------------------------
# Parameter construction (deterministic, mirrors the PyTorch __init__ shapes)
# ----------------------------------------------------------------------------
def _conv_w(key, cout, cin, k):
    bound = 1.0 / math.sqrt(cin * k)
    return jax.random.uniform(key, (cout, cin, k), jnp.float32, -bound, bound)


def _bn_fold(c):
    # TODO(synk): running_mean=0 / running_var=1 placeholders, not trained stats.
    gamma = 1.0 + 0.05 * np.cos(np.arange(c, dtype=np.float32))
    beta = 0.02 * np.sin(np.arange(c, dtype=np.float32))
    scale = gamma / np.sqrt(1.0 + BN_EPS)
    shift = beta
    return scale.astype(np.float32), shift.astype(np.float32)


def _make_layer(key, cin, cout, k, *, stride=1, dilation=1, pad=0, act=True,
                save_res=False, add_res=False):
    w = np.asarray(_conv_w(key, cout, cin, k))            # (Cout, Cin, K) torch layout
    scale, shift = _bn_fold(cout)
    # Pack to (K*Cin, Cout) so the K taps fuse into one matmul; fold BN scale.
    w_packed = np.transpose(w, (2, 1, 0)).reshape(k * cin, cout) * scale[None, :]
    return dict(
        w=w_packed.astype(np.float32),
        shift=shift,
        cfg=dict(K=k, dil=dilation, stride=stride, pad=pad, act=act,
                 save_res=save_res, add_res=add_res, cin=cin, cout=cout),
    )


def build_cnn_params(key, c_in, nf, factors=(2, 2, 2)):
    layers = []
    key, k0 = jax.random.split(key)
    # stem: Conv1d(c_in, nf, 5, 1, pad=2, reflect, bias=False) + BN + LReLU(0.2)
    layers.append(_make_layer(k0, c_in, nf, 5, stride=1, pad=2, act=True))
    for f in factors:
        key, kd = jax.random.split(key)
        # Down1d: Conv1d(nf, 2nf, f+1, stride=f, pad=(f+1)//2, reflect)+BN+LReLU
        layers.append(_make_layer(kd, nf, 2 * nf, f + 1, stride=f,
                                  pad=(f + 1) // 2, act=True))
        nf *= 2
        for dil in (1, 3):
            key, ka, kb = jax.random.split(key, 3)
            # ResBlock1d: x + BN(Conv1x1(LReLU(BN(Conv3_dilated(x)))))
            layers.append(_make_layer(ka, nf, nf, 3, dilation=dil, pad=dil,
                                      act=True, save_res=True))
            layers.append(_make_layer(kb, nf, nf, 1, pad=0, act=False,
                                      add_res=True))
    return layers


# ----------------------------------------------------------------------------
# Forward: one fused pallas_call for the whole network.
# ----------------------------------------------------------------------------
def cnn_forward(layers, x, *, num_cores=None):
    """x: (B, C_in, L) NCL -> (B, C_out, L_out); PyTorch CNN.forward semantics."""
    B, C0, L0 = x.shape
    if num_cores is None:
        num_cores = _default_num_cores(B)
    assert B % num_cores == 0
    Bc = B // num_cores

    # --- static shape trace + operand packing --------------------------------
    n_layers = len(layers)
    max_kc = max(p["cfg"]["K"] * p["cfg"]["cin"] for p in layers)
    max_co = max(p["cfg"]["cout"] for p in layers)
    w_pack = np.zeros((n_layers, max_kc, max_co), np.float32)
    s_pack = np.zeros((n_layers, max_co), np.float32)
    g_list = []

    cfgs = []
    l, c, flops = L0, C0, 0
    for li, p in enumerate(layers):
        cfg = dict(p["cfg"])
        K, dil, stride, pad = cfg["K"], cfg["dil"], cfg["stride"], cfg["pad"]
        cin, cout = cfg["cin"], cfg["cout"]
        assert cin == c
        assert pad <= l - 1, "reflect pad needs pad <= length - 1"
        lout = _conv_out_len(l, K, stride, pad, dil)
        assert (lout - 1) * stride + (K - 1) * dil - pad <= 2 * (l - 1), \
            "single reflection insufficient for this config"
        cfg.update(idx=li, lin=l, lout=lout, gidx=-1)

        w_pack[li, :K * cin, :cout] = p["w"]
        s_pack[li, :cout] = p["shift"]
        flops += 2 * B * lout * cout * K * cin
        if stride != 1:
            # Constant stacked gather: row k*lout+i picks x[reflect(i*s + k*d - p)].
            g = np.zeros((K * lout, l), np.float32)
            for k in range(K):
                for i in range(lout):
                    g[k * lout + i, _reflect_index(i * stride + k * dil - pad, l)] = 1.0
            cfg["gidx"] = len(g_list)
            g_list.append(g)
            flops += 2 * B * (K * lout) * l * cin

        cfgs.append(cfg)
        l, c = lout, cout
    Lf, Cf = l, c

    max_gr = max(g.shape[0] for g in g_list) if g_list else 8
    max_gc = max(g.shape[1] for g in g_list) if g_list else 128
    g_pack = np.zeros((max(len(g_list), 1), max_gr, max_gc), np.float32)
    for gi, g in enumerate(g_list):
        g_pack[gi, :g.shape[0], :g.shape[1]] = g

    w_pack = jnp.asarray(w_pack, jnp.bfloat16)
    s_pack = jnp.asarray(s_pack, jnp.float32)
    g_pack = jnp.asarray(g_pack, jnp.bfloat16)

    # (B, C, L) -> batch-stacked (B*L, C): channels on lanes, rows = samples x length.
    x2d = jnp.transpose(x, (0, 2, 1)).reshape(B * L0, C0).astype(jnp.float32)

    kernel = _make_fused_kernel(cfgs, Bc)

    bytes_accessed = (int(x2d.size) * 4 + int(w_pack.size) * 2
                      + int(s_pack.size) * 4 + int(g_pack.size) * 2
                      + B * Lf * Cf * 4)

    out2d = pl.pallas_call(
        kernel,
        out_shape=jax.ShapeDtypeStruct((B * Lf, Cf), jnp.float32),
        grid_spec=pltpu.PrefetchScalarGridSpec(
            num_scalar_prefetch=0,
            grid=(num_cores,),                    # 1 step (v5e/v6e) or 2 (v7x TCs)
            in_specs=[
                pl.BlockSpec((Bc * L0, C0), lambda g: (g, 0)),
                pl.BlockSpec(w_pack.shape, lambda g: (0, 0, 0)),
                pl.BlockSpec(s_pack.shape, lambda g: (0, 0)),
                pl.BlockSpec(g_pack.shape, lambda g: (0, 0, 0)),
            ],
            out_specs=pl.BlockSpec((Bc * Lf, Cf), lambda g: (g, 0)),
        ),
        compiler_params=pltpu.CompilerParams(
            dimension_semantics=("parallel",)),
        cost_estimate=pl.CostEstimate(flops=int(flops), transcendentals=0,
                                      bytes_accessed=int(bytes_accessed)),
    )(x2d, w_pack, s_pack, g_pack)

    return jnp.transpose(out2d.reshape(B, Lf, Cf), (0, 2, 1))   # back to NCL


# ----------------------------------------------------------------------------
if __name__ == "__main__":
    key = jax.random.PRNGKey(0)
    key, kx, kp = jax.random.split(key, 3)

    B, C_IN, L, NF = 2, 4, 64, 8
    x = jax.random.normal(kx, (B, C_IN, L), jnp.float32)     # (batch, chan, len)

    layers = build_cnn_params(kp, C_IN, NF, factors=(2, 2, 2))
    y = cnn_forward(layers, x)
    y = jax.block_until_ready(y)

    # 3 downsamples of factor 2: length 64 -> 8; channels 8 -> 64.
    assert y.shape == (B, NF * 8, L // 8), y.shape
    assert bool(jnp.all(jnp.isfinite(y)))
    print("KERNEL_OK")
</pallas_src>

<mosaic_0001>
module attributes {stable_mosaic.version = 11 : i64} {
  func.func @kernel(%arg0: i32, %arg1: memref<128x4xf32, #tpu.memory_space<vmem>>, %arg2: memref<16x192x64xbf16, #tpu.memory_space<vmem>>, %arg3: memref<16x64xf32, #tpu.memory_space<vmem>>, %arg4: memref<3x96x64xbf16, #tpu.memory_space<vmem>>, %arg5: memref<16x64xf32, #tpu.memory_space<vmem>>) attributes {dimension_semantics = [#tpu.dimension_semantics<parallel>], iteration_bounds = array<i64: 1>, scalar_prefetch = 0 : i64, scratch_operands = 0 : i64, tpu.core_type = #tpu.core_type<tc>, window_params = [{transform_indices = @transform_0, window_bounds = array<i64: 128, 4>}, {pipeline_mode = #tpu.pipeline_mode<synchronous>, transform_indices = @transform_1, window_bounds = array<i64: 16, 192, 64>}, {pipeline_mode = #tpu.pipeline_mode<synchronous>, transform_indices = @transform_2, window_bounds = array<i64: 16, 64>}, {pipeline_mode = #tpu.pipeline_mode<synchronous>, transform_indices = @transform_3, window_bounds = array<i64: 3, 96, 64>}, {transform_indices = @transform_4, window_bounds = array<i64: 16, 64>}]} {
    %c0 = arith.constant 0 : index
    %c0_0 = arith.constant 0 : index
    %0 = vector.load %arg1[%c0, %c0_0] : memref<128x4xf32, #tpu.memory_space<vmem>>, vector<128x4xf32>
    %c0_1 = arith.constant 0 : index
    %c0_2 = arith.constant 0 : index
    %c0_3 = arith.constant 0 : index
    %1 = vector.load %arg2[%c0_1, %c0_2, %c0_3] : memref<16x192x64xbf16, #tpu.memory_space<vmem>>, vector<1x20x8xbf16>
    %2 = vector.shape_cast %1 : vector<1x20x8xbf16> to vector<20x8xbf16>
    %c0_4 = arith.constant 0 : index
    %c0_5 = arith.constant 0 : index
    %3 = vector.load %arg3[%c0_4, %c0_5] : memref<16x64xf32, #tpu.memory_space<vmem>>, vector<1x8xf32>
    %4 = vector.extract_strided_slice %0 {offsets = [0, 0], sizes = [64, 4], strides = [1, 1]} : vector<128x4xf32> to vector<64x4xf32>
    %5 = vector.extract_strided_slice %4 {offsets = [2, 0], sizes = [1, 4], strides = [1, 1]} : vector<64x4xf32> to vector<1x4xf32>
    %6 = vector.extract_strided_slice %4 {offsets = [1, 0], sizes = [1, 4], strides = [1, 1]} : vector<64x4xf32> to vector<1x4xf32>
    %7 = vector.extract_strided_slice %4 {offsets = [62, 0], sizes = [1, 4], strides = [1, 1]} : vector<64x4xf32> to vector<1x4xf32>
    %8 = vector.extract_strided_slice %4 {offsets = [61, 0], sizes = [1, 4], strides = [1, 1]} : vector<64x4xf32> to vector<1x4xf32>
    %9 = tpu.concatenate %5, %6, %4, %7, %8 in 0 : vector<1x4xf32>, vector<1x4xf32>, vector<64x4xf32>, vector<1x4xf32>, vector<1x4xf32> -> vector<68x4xf32>
    %10 = vector.extract_strided_slice %9 {offsets = [0, 0], sizes = [64, 4], strides = [1, 1]} : vector<68x4xf32> to vector<64x4xf32>
    %11 = vector.extract_strided_slice %9 {offsets = [1, 0], sizes = [64, 4], strides = [1, 1]} : vector<68x4xf32> to vector<64x4xf32>
    %12 = vector.extract_strided_slice %9 {offsets = [2, 0], sizes = [64, 4], strides = [1, 1]} : vector<68x4xf32> to vector<64x4xf32>
    %13 = vector.extract_strided_slice %9 {offsets = [3, 0], sizes = [64, 4], strides = [1, 1]} : vector<68x4xf32> to vector<64x4xf32>
    %14 = vector.extract_strided_slice %9 {offsets = [4, 0], sizes = [64, 4], strides = [1, 1]} : vector<68x4xf32> to vector<64x4xf32>
    %15 = tpu.concatenate %10, %11, %12, %13, %14 in 1 : vector<64x4xf32>, vector<64x4xf32>, vector<64x4xf32>, vector<64x4xf32>, vector<64x4xf32> -> vector<64x20xf32>
    %16 = vector.extract_strided_slice %0 {offsets = [64, 0], sizes = [64, 4], strides = [1, 1]} : vector<128x4xf32> to vector<64x4xf32>
    %17 = vector.extract_strided_slice %16 {offsets = [2, 0], sizes = [1, 4], strides = [1, 1]} : vector<64x4xf32> to vector<1x4xf32>
    %18 = vector.extract_strided_slice %16 {offsets = [1, 0], sizes = [1, 4], strides = [1, 1]} : vector<64x4xf32> to vector<1x4xf32>
    %19 = vector.extract_strided_slice %16 {offsets = [62, 0], sizes = [1, 4], strides = [1, 1]} : vector<64x4xf32> to vector<1x4xf32>
    %20 = vector.extract_strided_slice %16 {offsets = [61, 0], sizes = [1, 4], strides = [1, 1]} : vector<64x4xf32> to vector<1x4xf32>
    %21 = tpu.concatenate %17, %18, %16, %19, %20 in 0 : vector<1x4xf32>, vector<1x4xf32>, vector<64x4xf32>, vector<1x4xf32>, vector<1x4xf32> -> vector<68x4xf32>
    %22 = vector.extract_strided_slice %21 {offsets = [0, 0], sizes = [64, 4], strides = [1, 1]} : vector<68x4xf32> to vector<64x4xf32>
    %23 = vector.extract_strided_slice %21 {offsets = [1, 0], sizes = [64, 4], strides = [1, 1]} : vector<68x4xf32> to vector<64x4xf32>
    %24 = vector.extract_strided_slice %21 {offsets = [2, 0], sizes = [64, 4], strides = [1, 1]} : vector<68x4xf32> to vector<64x4xf32>
    %25 = vector.extract_strided_slice %21 {offsets = [3, 0], sizes = [64, 4], strides = [1, 1]} : vector<68x4xf32> to vector<64x4xf32>
    %26 = vector.extract_strided_slice %21 {offsets = [4, 0], sizes = [64, 4], strides = [1, 1]} : vector<68x4xf32> to vector<64x4xf32>
    %27 = tpu.concatenate %22, %23, %24, %25, %26 in 1 : vector<64x4xf32>, vector<64x4xf32>, vector<64x4xf32>, vector<64x4xf32>, vector<64x4xf32> -> vector<64x20xf32>
    %28 = tpu.concatenate %15, %27 in 0 : vector<64x20xf32>, vector<64x20xf32> -> vector<128x20xf32>
    %29 = arith.truncf %28 : vector<128x20xf32> to vector<128x20xbf16>
    %cst = arith.constant dense<0.000000e+00> : vector<128x8xf32>
    %30 = tpu.matmul %29, %2, %cst {dimension_numbers = #tpu.dot_dimension_numbers<[1], [0], [0], [1], [0, 0, 1, 1], [], []>} : vector<128x20xbf16>, vector<20x8xbf16>, vector<128x8xf32> -> vector<128x8xf32>
    %31 = vector.broadcast %3 : vector<1x8xf32> to vector<128x8xf32>
    %32 = arith.addf %30, %31 : vector<128x8xf32>
    %cst_6 = arith.constant 0.000000e+00 : f32
    %33 = vector.broadcast %cst_6 : f32 to vector<128x8xf32>
    %34 = arith.cmpf oge, %32, %33 : vector<128x8xf32>
    %cst_7 = arith.constant 2.000000e-01 : f32
    %35 = vector.broadcast %cst_7 : f32 to vector<128x8xf32>
    %36 = arith.mulf %35, %32 : vector<128x8xf32>
    %37 = arith.select %34, %32, %36 : vector<128x8xi1>, vector<128x8xf32>
    %c1 = arith.constant 1 : index
    %c0_8 = arith.constant 0 : index
    %c0_9 = arith.constant 0 : index
    %38 = vector.load %arg2[%c1, %c0_8, %c0_9] : memref<16x192x64xbf16, #tpu.memory_space<vmem>>, vector<1x24x16xbf16>
    %39 = vector.shape_cast %38 : vector<1x24x16xbf16> to vector<24x16xbf16>
    %c1_10 = arith.constant 1 : index
    %c0_11 = arith.constant 0 : index
    %40 = vector.load %arg3[%c1_10, %c0_11] : memref<16x64xf32, #tpu.memory_space<vmem>>, vector<1x16xf32>
    %41 = vector.extract_strided_slice %37 {offsets = [0, 0], sizes = [64, 8], strides = [1, 1]} : vector<128x8xf32> to vector<64x8xf32>
    %c0_12 = arith.constant 0 : index
    %c0_13 = arith.constant 0 : index
    %c0_14 = arith.constant 0 : index
    %42 = vector.load %arg4[%c0_12, %c0_13, %c0_14] : memref<3x96x64xbf16, #tpu.memory_space<vmem>>, vector<1x96x64xbf16>
    %43 = vector.shape_cast %42 : vector<1x96x64xbf16> to vector<96x64xbf16>
    %44 = arith.truncf %41 : vector<64x8xf32> to vector<64x8xbf16>
    %cst_15 = arith.constant dense<0.000000e+00> : vector<96x8xf32>
    %45 = tpu.matmul %43, %44, %cst_15 {dimension_numbers = #tpu.dot_dimension_numbers<[1], [0], [0], [1], [0, 0, 1, 1], [], []>} : vector<96x64xbf16>, vector<64x8xbf16>, vector<96x8xf32> -> vector<96x8xf32>
    %46 = vector.extract_strided_slice %45 {offsets = [0, 0], sizes = [32, 8], strides = [1, 1]} : vector<96x8xf32> to vector<32x8xf32>
    %47 = vector.extract_strided_slice %45 {offsets = [32, 0], sizes = [32, 8], strides = [1, 1]} : vector<96x8xf32> to vector<32x8xf32>
    %48 = vector.extract_strided_slice %45 {offsets = [64, 0], sizes = [32, 8], strides = [1, 1]} : vector<96x8xf32> to vector<32x8xf32>
    %49 = tpu.concatenate %46, %47, %48 in 1 : vector<32x8xf32>, vector<32x8xf32>, vector<32x8xf32> -> vector<32x24xf32>
    %50 = vector.extract_strided_slice %37 {offsets = [64, 0], sizes = [64, 8], strides = [1, 1]} : vector<128x8xf32> to vector<64x8xf32>
    %c0_16 = arith.constant 0 : index
    %c0_17 = arith.constant 0 : index
    %c0_18 = arith.constant 0 : index
    %51 = vector.load %arg4[%c0_16, %c0_17, %c0_18] : memref<3x96x64xbf16, #tpu.memory_space<vmem>>, vector<1x96x64xbf16>
    %52 = vector.shape_cast %51 : vector<1x96x64xbf16> to vector<96x64xbf16>
    %53 = arith.truncf %50 : vector<64x8xf32> to vector<64x8xbf16>
    %cst_19 = arith.constant dense<0.000000e+00> : vector<96x8xf32>
    %54 = tpu.matmul %52, %53, %cst_19 {dimension_numbers = #tpu.dot_dimension_numbers<[1], [0], [0], [1], [0, 0, 1, 1], [], []>} : vector<96x64xbf16>, vector<64x8xbf16>, vector<96x8xf32> -> vector<96x8xf32>
    %55 = vector.extract_strided_slice %54 {offsets = [0, 0], sizes = [32, 8], strides = [1, 1]} : vector<96x8xf32> to vector<32x8xf32>
    %56 = vector.extract_strided_slice %54 {offsets = [32, 0], sizes = [32, 8], strides = [1, 1]} : vector<96x8xf32> to vector<32x8xf32>
    %57 = vector.extract_strided_slice %54 {offsets = [64, 0], sizes = [32, 8], strides = [1, 1]} : vector<96x8xf32> to vector<32x8xf32>
    %58 = tpu.concatenate %55, %56, %57 in 1 : vector<32x8xf32>, vector<32x8xf32>, vector<32x8xf32> -> vector<32x24xf32>
    %59 = tpu.concatenate %49, %58 in 0 : vector<32x24xf32>, vector<32x24xf32> -> vector<64x24xf32>
    %60 = arith.truncf %59 : vector<64x24xf32> to vector<64x24xbf16>
    %cst_20 = arith.constant dense<0.000000e+00> : vector<64x16xf32>
    %61 = tpu.matmul %60, %39, %cst_20 {dimension_numbers = #tpu.dot_dimension_numbers<[1], [0], [0], [1], [0, 0, 1, 1], [], []>} : vector<64x24xbf16>, vector<24x16xbf16>, vector<64x16xf32> -> vector<64x16xf32>
    %62 = vector.broadcast %40 : vector<1x16xf32> to vector<64x16xf32>
    %63 = arith.addf %61, %62 : vector<64x16xf32>
    %cst_21 = arith.constant 0.000000e+00 : f32
    %64 = vector.broadcast %cst_21 : f32 to vector<64x16xf32>
    %65 = arith.cmpf oge, %63, %64 : vector<64x16xf32>
    %cst_22 = arith.constant 2.000000e-01 : f32
    %66 = vector.broadcast %cst_22 : f32 to vector<64x16xf32>
    %67 = arith.mulf %66, %63 : vector<64x16xf32>
    %68 = arith.select %65, %63, %67 : vector<64x16xi1>, vector<64x16xf32>
    %c2 = arith.constant 2 : index
    %c0_23 = arith.constant 0 : index
    %c0_24 = arith.constant 0 : index
    %69 = vector.load %arg2[%c2, %c0_23, %c0_24] : memref<16x192x64xbf16, #tpu.memory_space<vmem>>, vector<1x48x16xbf16>
    %70 = vector.shape_cast %69 : vector<1x48x16xbf16> to vector<48x16xbf16>
    %c2_25 = arith.constant 2 : index
    %c0_26 = arith.constant 0 : index
    %71 = vector.load %arg3[%c2_25, %c0_26] : memref<16x64xf32, #tpu.memory_space<vmem>>, vector<1x16xf32>
    %72 = vector.extract_strided_slice %68 {offsets = [0, 0], sizes = [32, 16], strides = [1, 1]} : vector<64x16xf32> to vector<32x16xf32>
    %73 = vector.extract_strided_slice %72 {offsets = [1, 0], sizes = [1, 16], strides = [1, 1]} : vector<32x16xf32> to vector<1x16xf32>
    %74 = vector.extract_strided_slice %72 {offsets = [30, 0], sizes = [1, 16], strides = [1, 1]} : vector<32x16xf32> to vector<1x16xf32>
    %75 = tpu.concatenate %73, %72, %74 in 0 : vector<1x16xf32>, vector<32x16xf32>, vector<1x16xf32> -> vector<34x16xf32>
    %76 = vector.extract_strided_slice %75 {offsets = [0, 0], sizes = [32, 16], strides = [1, 1]} : vector<34x16xf32> to vector<32x16xf32>
    %77 = vector.extract_strided_slice %75 {offsets = [1, 0], sizes = [32, 16], strides = [1, 1]} : vector<34x16xf32> to vector<32x16xf32>
    %78 = vector.extract_strided_slice %75 {offsets = [2, 0], sizes = [32, 16], strides = [1, 1]} : vector<34x16xf32> to vector<32x16xf32>
    %79 = tpu.concatenate %76, %77, %78 in 1 : vector<32x16xf32>, vector<32x16xf32>, vector<32x16xf32> -> vector<32x48xf32>
    %80 = vector.extract_strided_slice %68 {offsets = [32, 0], sizes = [32, 16], strides = [1, 1]} : vector<64x16xf32> to vector<32x16xf32>
    %81 = vector.extract_strided_slice %80 {offsets = [1, 0], sizes = [1, 16], strides = [1, 1]} : vector<32x16xf32> to vector<1x16xf32>
    %82 = vector.extract_strided_slice %80 {offsets = [30, 0], sizes = [1, 16], strides = [1, 1]} : vector<32x16xf32> to vector<1x16xf32>
    %83 = tpu.concatenate %81, %80, %82 in 0 : vector<1x16xf32>, vector<32x16xf32>, vector<1x16xf32> -> vector<34x16xf32>
    %84 = vector.extract_strided_slice %83 {offsets = [0, 0], sizes = [32, 16], strides = [1, 1]} : vector<34x16xf32> to vector<32x16xf32>
    %85 = vector.extract_strided_slice %83 {offsets = [1, 0], sizes = [32, 16], strides = [1, 1]} : vector<34x16xf32> to vector<32x16xf32>
    %86 = vector.extract_strided_slice %83 {offsets = [2, 0], sizes = [32, 16], strides = [1, 1]} : vector<34x16xf32> to vector<32x16xf32>
    %87 = tpu.concatenate %84, %85, %86 in 1 : vector<32x16xf32>, vector<32x16xf32>, vector<32x16xf32> -> vector<32x48xf32>
    %88 = tpu.concatenate %79, %87 in 0 : vector<32x48xf32>, vector<32x48xf32> -> vector<64x48xf32>
    %89 = arith.truncf %88 : vector<64x48xf32> to vector<64x48xbf16>
    %cst_27 = arith.constant dense<0.000000e+00> : vector<64x16xf32>
    %90 = tpu.matmul %89, %70, %cst_27 {dimension_numbers = #tpu.dot_dimension_numbers<[1], [0], [0], [1], [0, 0, 1, 1], [], []>} : vector<64x48xbf16>, vector<48x16xbf16>, vector<64x16xf32> -> vector<64x16xf32>
    %91 = vector.broadcast %71 : vector<1x16xf32> to vector<64x16xf32>
    %92 = arith.addf %90, %91 : vector<64x16xf32>
    %cst_28 = arith.constant 0.000000e+00 : f32
    %93 = vector.broadcast %cst_28 : f32 to vector<64x16xf32>
    %94 = arith.cmpf oge, %92, %93 : vector<64x16xf32>
    %cst_29 = arith.constant 2.000000e-01 : f32
    %95 = vector.broadcast %cst_29 : f32 to vector<64x16xf32>
    %96 = arith.mulf %95, %92 : vector<64x16xf32>
    %97 = arith.select %94, %92, %96 : vector<64x16xi1>, vector<64x16xf32>
    %c3 = arith.constant 3 : index
    %c0_30 = arith.constant 0 : index
    %c0_31 = arith.constant 0 : index
    %98 = vector.load %arg2[%c3, %c0_30, %c0_31] : memref<16x192x64xbf16, #tpu.memory_space<vmem>>, vector<1x16x16xbf16>
    %99 = vector.shape_cast %98 : vector<1x16x16xbf16> to vector<16x16xbf16>
    %c3_32 = arith.constant 3 : index
    %c0_33 = arith.constant 0 : index
    %100 = vector.load %arg3[%c3_32, %c0_33] : memref<16x64xf32, #tpu.memory_space<vmem>>, vector<1x16xf32>
    %101 = arith.truncf %97 : vector<64x16xf32> to vector<64x16xbf16>
    %cst_34 = arith.constant dense<0.000000e+00> : vector<64x16xf32>
    %102 = tpu.matmul %101, %99, %cst_34 {dimension_numbers = #tpu.dot_dimension_numbers<[1], [0], [0], [1], [0, 0, 1, 1], [], []>} : vector<64x16xbf16>, vector<16x16xbf16>, vector<64x16xf32> -> vector<64x16xf32>
    %103 = vector.broadcast %100 : vector<1x16xf32> to vector<64x16xf32>
    %104 = arith.addf %102, %103 : vector<64x16xf32>
    %105 = arith.addf %104, %68 : vector<64x16xf32>
    %c4 = arith.constant 4 : index
    %c0_35 = arith.constant 0 : index
    %c0_36 = arith.constant 0 : index
    %106 = vector.load %arg2[%c4, %c0_35, %c0_36] : memref<16x192x64xbf16, #tpu.memory_space<vmem>>, vector<1x48x16xbf16>
    %107 = vector.shape_cast %106 : vector<1x48x16xbf16> to vector<48x16xbf16>
    %c4_37 = arith.constant 4 : index
    %c0_38 = arith.constant 0 : index
    %108 = vector.load %arg3[%c4_37, %c0_38] : memref<16x64xf32, #tpu.memory_space<vmem>>, vector<1x16xf32>
    %109 = vector.extract_strided_slice %105 {offsets = [0, 0], sizes = [32, 16], strides = [1, 1]} : vector<64x16xf32> to vector<32x16xf32>
    %110 = vector.extract_strided_slice %109 {offsets = [3, 0], sizes = [1, 16], strides = [1, 1]} : vector<32x16xf32> to vector<1x16xf32>
    %111 = vector.extract_strided_slice %109 {offsets = [2, 0], sizes = [1, 16], strides = [1, 1]} : vector<32x16xf32> to vector<1x16xf32>
    %112 = vector.extract_strided_slice %109 {offsets = [1, 0], sizes = [1, 16], strides = [1, 1]} : vector<32x16xf32> to vector<1x16xf32>
    %113 = vector.extract_strided_slice %109 {offsets = [30, 0], sizes = [1, 16], strides = [1, 1]} : vector<32x16xf32> to vector<1x16xf32>
    %114 = vector.extract_strided_slice %109 {offsets = [29, 0], sizes = [1, 16], strides = [1, 1]} : vector<32x16xf32> to vector<1x16xf32>
    %115 = vector.extract_strided_slice %109 {offsets = [28, 0], sizes = [1, 16], strides = [1, 1]} : vector<32x16xf32> to vector<1x16xf32>
    %116 = tpu.concatenate %110, %111, %112, %109, %113, %114, %115 in 0 : vector<1x16xf32>, vector<1x16xf32>, vector<1x16xf32>, vector<32x16xf32>, vector<1x16xf32>, vector<1x16xf32>, vector<1x16xf32> -> vector<38x16xf32>
    %117 = vector.extract_strided_slice %116 {offsets = [0, 0], sizes = [32, 16], strides = [1, 1]} : vector<38x16xf32> to vector<32x16xf32>
    %118 = vector.extract_strided_slice %116 {offsets = [3, 0], sizes = [32, 16], strides = [1, 1]} : vector<38x16xf32> to vector<32x16xf32>
    %119 = vector.extract_strided_slice %116 {offsets = [6, 0], sizes = [32, 16], strides = [1, 1]} : vector<38x16xf32> to vector<32x16xf32>
    %120 = tpu.concatenate %117, %118, %119 in 1 : vector<32x16xf32>, vector<32x16xf32>, vector<32x16xf32> -> vector<32x48xf32>
    %121 = vector.extract_strided_slice %105 {offsets = [32, 0], sizes = [32, 16], strides = [1, 1]} : vector<64x16xf32> to vector<32x16xf32>
    %122 = vector.extract_strided_slice %121 {offsets = [3, 0], sizes = [1, 16], strides = [1, 1]} : vector<32x16xf32> to vector<1x16xf32>
    %123 = vector.extract_strided_slice %121 {offsets = [2, 0], sizes = [1, 16], strides = [1, 1]} : vector<32x16xf32> to vector<1x16xf32>
    %124 = vector.extract_strided_slice %121 {offsets = [1, 0], sizes = [1, 16], strides = [1, 1]} : vector<32x16xf32> to vector<1x16xf32>
    %125 = vector.extract_strided_slice %121 {offsets = [30, 0], sizes = [1, 16], strides = [1, 1]} : vector<32x16xf32> to vector<1x16xf32>
    %126 = vector.extract_strided_slice %121 {offsets = [29, 0], sizes = [1, 16], strides = [1, 1]} : vector<32x16xf32> to vector<1x16xf32>
    %127 = vector.extract_strided_slice %121 {offsets = [28, 0], sizes = [1, 16], strides = [1, 1]} : vector<32x16xf32> to vector<1x16xf32>
    %128 = tpu.concatenate %122, %123, %124, %121, %125, %126, %127 in 0 : vector<1x16xf32>, vector<1x16xf32>, vector<1x16xf32>, vector<32x16xf32>, vector<1x16xf32>, vector<1x16xf32>, vector<1x16xf32> -> vector<38x16xf32>
    %129 = vector.extract_strided_slice %128 {offsets = [0, 0], sizes = [32, 16], strides = [1, 1]} : vector<38x16xf32> to vector<32x16xf32>
    %130 = vector.extract_strided_slice %128 {offsets = [3, 0], sizes = [32, 16], strides = [1, 1]} : vector<38x16xf32> to vector<32x16xf32>
    %131 = vector.extract_strided_slice %128 {offsets = [6, 0], sizes = [32, 16], strides = [1, 1]} : vector<38x16xf32> to vector<32x16xf32>
    %132 = tpu.concatenate %129, %130, %131 in 1 : vector<32x16xf32>, vector<32x16xf32>, vector<32x16xf32> -> vector<32x48xf32>
    %133 = tpu.concatenate %120, %132 in 0 : vector<32x48xf32>, vector<32x48xf32> -> vector<64x48xf32>
    %134 = arith.truncf %133 : vector<64x48xf32> to vector<64x48xbf16>
    %cst_39 = arith.constant dense<0.000000e+00> : vector<64x16xf32>
    %135 = tpu.matmul %134, %107, %cst_39 {dimension_numbers = #tpu.dot_dimension_numbers<[1], [0], [0], [1], [0, 0, 1, 1], [], []>} : vector<64x48xbf16>, vector<48x16xbf16>, vector<64x16xf32> -> vector<64x16xf32>
    %136 = vector.broadcast %108 : vector<1x16xf32> to vector<64x16xf32>
    %137 = arith.addf %135, %136 : vector<64x16xf32>
    %cst_40 = arith.constant 0.000000e+00 : f32
    %138 = vector.broadcast %cst_40 : f32 to vector<64x16xf32>
    %139 = arith.cmpf oge, %137, %138 : vector<64x16xf32>
    %cst_41 = arith.constant 2.000000e-01 : f32
    %140 = vector.broadcast %cst_41 : f32 to vector<64x16xf32>
    %141 = arith.mulf %140, %137 : vector<64x16xf32>
    %142 = arith.select %139, %137, %141 : vector<64x16xi1>, vector<64x16xf32>
    %c5 = arith.constant 5 : index
    %c0_42 = arith.constant 0 : index
    %c0_43 = arith.constant 0 : index
    %143 = vector.load %arg2[%c5, %c0_42, %c0_43] : memref<16x192x64xbf16, #tpu.memory_space<vmem>>, vector<1x16x16xbf16>
    %144 = vector.shape_cast %143 : vector<1x16x16xbf16> to vector<16x16xbf16>
    %c5_44 = arith.constant 5 : index
    %c0_45 = arith.constant 0 : index
    %145 = vector.load %arg3[%c5_44, %c0_45] : memref<16x64xf32, #tpu.memory_space<vmem>>, vector<1x16xf32>
    %146 = arith.truncf %142 : vector<64x16xf32> to vector<64x16xbf16>
    %cst_46 = arith.constant dense<0.000000e+00> : vector<64x16xf32>
    %147 = tpu.matmul %146, %144, %cst_46 {dimension_numbers = #tpu.dot_dimension_numbers<[1], [0], [0], [1], [0, 0, 1, 1], [], []>} : vector<64x16xbf16>, vector<16x16xbf16>, vector<64x16xf32> -> vector<64x16xf32>
    %148 = vector.broadcast %145 : vector<1x16xf32> to vector<64x16xf32>
    %149 = arith.addf %147, %148 : vector<64x16xf32>
    %150 = arith.addf %149, %105 : vector<64x16xf32>
    %c6 = arith.constant 6 : index
    %c0_47 = arith.constant 0 : index
    %c0_48 = arith.constant 0 : index
    %151 = vector.load %arg2[%c6, %c0_47, %c0_48] : memref<16x192x64xbf16, #tpu.memory_space<vmem>>, vector<1x48x32xbf16>
    %152 = vector.shape_cast %151 : vector<1x48x32xbf16> to vector<48x32xbf16>
    %c6_49 = arith.constant 6 : index
    %c0_50 = arith.constant 0 : index
    %153 = vector.load %arg3[%c6_49, %c0_50] : memref<16x64xf32, #tpu.memory_space<vmem>>, vector<1x32xf32>
    %154 = vector.extract_strided_slice %150 {offsets = [0, 0], sizes = [32, 16], strides = [1, 1]} : vector<64x16xf32> to vector<32x16xf32>
    %c1_51 = arith.constant 1 : index
    %c0_52 = arith.constant 0 : index
    %c0_53 = arith.constant 0 : index
    %155 = vector.load %arg4[%c1_51, %c0_52, %c0_53] : memref<3x96x64xbf16, #tpu.memory_space<vmem>>, vector<1x48x32xbf16>
    %156 = vector.shape_cast %155 : vector<1x48x32xbf16> to vector<48x32xbf16>
    %157 = arith.truncf %154 : vector<32x16xf32> to vector<32x16xbf16>
    %cst_54 = arith.constant dense<0.000000e+00> : vector<48x16xf32>
    %158 = tpu.matmul %156, %157, %cst_54 {dimension_numbers = #tpu.dot_dimension_numbers<[1], [0], [0], [1], [0, 0, 1, 1], [], []>} : vector<48x32xbf16>, vector<32x16xbf16>, vector<48x16xf32> -> vector<48x16xf32>
    %159 = vector.extract_strided_slice %158 {offsets = [0, 0], sizes = [16, 16], strides = [1, 1]} : vector<48x16xf32> to vector<16x16xf32>
    %160 = vector.extract_strided_slice %158 {offsets = [16, 0], sizes = [16, 16], strides = [1, 1]} : vector<48x16xf32> to vector<16x16xf32>
    %161 = vector.extract_strided_slice %158 {offsets = [32, 0], sizes = [16, 16], strides = [1, 1]} : vector<48x16xf32> to vector<16x16xf32>
    %162 = tpu.concatenate %159, %160, %161 in 1 : vector<16x16xf32>, vector<16x16xf32>, vector<16x16xf32> -> vector<16x48xf32>
    %163 = vector.extract_strided_slice %150 {offsets = [32, 0], sizes = [32, 16], strides = [1, 1]} : vector<64x16xf32> to vector<32x16xf32>
    %c1_55 = arith.constant 1 : index
    %c0_56 = arith.constant 0 : index
    %c0_57 = arith.constant 0 : index
    %164 = vector.load %arg4[%c1_55, %c0_56, %c0_57] : memref<3x96x64xbf16, #tpu.memory_space<vmem>>, vector<1x48x32xbf16>
    %165 = vector.shape_cast %164 : vector<1x48x32xbf16> to vector<48x32xbf16>
    %166 = arith.truncf %163 : vector<32x16xf32> to vector<32x16xbf16>
    %cst_58 = arith.constant dense<0.000000e+00> : vector<48x16xf32>
    %167 = tpu.matmul %165, %166, %cst_58 {dimension_numbers = #tpu.dot_dimension_numbers<[1], [0], [0], [1], [0, 0, 1, 1], [], []>} : vector<48x32xbf16>, vector<32x16xbf16>, vector<48x16xf32> -> vector<48x16xf32>
    %168 = vector.extract_strided_slice %167 {offsets = [0, 0], sizes = [16, 16], strides = [1, 1]} : vector<48x16xf32> to vector<16x16xf32>
    %169 = vector.extract_strided_slice %167 {offsets = [16, 0], sizes = [16, 16], strides = [1, 1]} : vector<48x16xf32> to vector<16x16xf32>
    %170 = vector.extract_strided_slice %167 {offsets = [32, 0], sizes = [16, 16], strides = [1, 1]} : vector<48x16xf32> to vector<16x16xf32>
    %171 = tpu.concatenate %168, %169, %170 in 1 : vector<16x16xf32>, vector<16x16xf32>, vector<16x16xf32> -> vector<16x48xf32>
    %172 = tpu.concatenate %162, %171 in 0 : vector<16x48xf32>, vector<16x48xf32> -> vector<32x48xf32>
    %173 = arith.truncf %172 : vector<32x48xf32> to vector<32x48xbf16>
    %cst_59 = arith.constant dense<0.000000e+00> : vector<32x32xf32>
    %174 = tpu.matmul %173, %152, %cst_59 {dimension_numbers = #tpu.dot_dimension_numbers<[1], [0], [0], [1], [0, 0, 1, 1], [], []>} : vector<32x48xbf16>, vector<48x32xbf16>, vector<32x32xf32> -> vector<32x32xf32>
    %175 = vector.broadcast %153 : vector<1x32xf32> to vector<32x32xf32>
    %176 = arith.addf %174, %175 : vector<32x32xf32>
    %cst_60 = arith.constant 0.000000e+00 : f32
    %177 = vector.broadcast %cst_60 : f32 to vector<32x32xf32>
    %178 = arith.cmpf oge, %176, %177 : vector<32x32xf32>
    %cst_61 = arith.constant 2.000000e-01 : f32
    %179 = vector.broadcast %cst_61 : f32 to vector<32x32xf32>
    %180 = arith.mulf %179, %176 : vector<32x32xf32>
    %181 = arith.select %178, %176, %180 : vector<32x32xi1>, vector<32x32xf32>
    %c7 = arith.constant 7 : index
    %c0_62 = arith.constant 0 : index
    %c0_63 = arith.constant 0 : index
    %182 = vector.load %arg2[%c7, %c0_62, %c0_63] : memref<16x192x64xbf16, #tpu.memory_space<vmem>>, vector<1x96x32xbf16>
    %183 = vector.shape_cast %182 : vector<1x96x32xbf16> to vector<96x32xbf16>
    %c7_64 = arith.constant 7 : index
    %c0_65 = arith.constant 0 : index
    %184 = vector.load %arg3[%c7_64, %c0_65] : memref<16x64xf32, #tpu.memory_space<vmem>>, vector<1x32xf32>
    %185 = vector.extract_strided_slice %181 {offsets = [0, 0], sizes = [16, 32], strides = [1, 1]} : vector<32x32xf32> to vector<16x32xf32>
    %186 = vector.extract_strided_slice %185 {offsets = [1, 0], sizes = [1, 32], strides = [1, 1]} : vector<16x32xf32> to vector<1x32xf32>
    %187 = vector.extract_strided_slice %185 {offsets = [14, 0], sizes = [1, 32], strides = [1, 1]} : vector<16x32xf32> to vector<1x32xf32>
    %188 = tpu.concatenate %186, %185, %187 in 0 : vector<1x32xf32>, vector<16x32xf32>, vector<1x32xf32> -> vector<18x32xf32>
    %189 = vector.extract_strided_slice %188 {offsets = [0, 0], sizes = [16, 32], strides = [1, 1]} : vector<18x32xf32> to vector<16x32xf32>
    %190 = vector.extract_strided_slice %188 {offsets = [1, 0], sizes = [16, 32], strides = [1, 1]} : vector<18x32xf32> to vector<16x32xf32>
    %191 = vector.extract_strided_slice %188 {offsets = [2, 0], sizes = [16, 32], strides = [1, 1]} : vector<18x32xf32> to vector<16x32xf32>
    %192 = tpu.concatenate %189, %190, %191 in 1 : vector<16x32xf32>, vector<16x32xf32>, vector<16x32xf32> -> vector<16x96xf32>
    %193 = vector.extract_strided_slice %181 {offsets = [16, 0], sizes = [16, 32], strides = [1, 1]} : vector<32x32xf32> to vector<16x32xf32>
    %194 = vector.extract_strided_slice %193 {offsets = [1, 0], sizes = [1, 32], strides = [1, 1]} : vector<16x32xf32> to vector<1x32xf32>
    %195 = vector.extract_strided_slice %193 {offsets = [14, 0], sizes = [1, 32], strides = [1, 1]} : vector<16x32xf32> to vector<1x32xf32>
    %196 = tpu.concatenate %194, %193, %195 in 0 : vector<1x32xf32>, vector<16x32xf32>, vector<1x32xf32> -> vector<18x32xf32>
    %197 = vector.extract_strided_slice %196 {offsets = [0, 0], sizes = [16, 32], strides = [1, 1]} : vector<18x32xf32> to vector<16x32xf32>
    %198 = vector.extract_strided_slice %196 {offsets = [1, 0], sizes = [16, 32], strides = [1, 1]} : vector<18x32xf32> to vector<16x32xf32>
    %199 = vector.extract_strided_slice %196 {offsets = [2, 0], sizes = [16, 32], strides = [1, 1]} : vector<18x32xf32> to vector<16x32xf32>
    %200 = tpu.concatenate %197, %198, %199 in 1 : vector<16x32xf32>, vector<16x32xf32>, vector<16x32xf32> -> vector<16x96xf32>
    %201 = tpu.concatenate %192, %200 in 0 : vector<16x96xf32>, vector<16x96xf32> -> vector<32x96xf32>
    %202 = arith.truncf %201 : vector<32x96xf32> to vector<32x96xbf16>
    %cst_66 = arith.constant dense<0.000000e+00> : vector<32x32xf32>
    %203 = tpu.matmul %202, %183, %cst_66 {dimension_numbers = #tpu.dot_dimension_numbers<[1], [0], [0], [1], [0, 0, 1, 1], [], []>} : vector<32x96xbf16>, vector<96x32xbf16>, vector<32x32xf32> -> vector<32x32xf32>
    %204 = vector.broadcast %184 : vector<1x32xf32> to vector<32x32xf32>
    %205 = arith.addf %203, %204 : vector<32x32xf32>
    %cst_67 = arith.constant 0.000000e+00 : f32
    %206 = vector.broadcast %cst_67 : f32 to vector<32x32xf32>
    %207 = arith.cmpf oge, %205, %206 : vector<32x32xf32>
    %cst_68 = arith.constant 2.000000e-01 : f32
    %208 = vector.broadcast %cst_68 : f32 to vector<32x32xf32>
    %209 = arith.mulf %208, %205 : vector<32x32xf32>
    %210 = arith.select %207, %205, %209 : vector<32x32xi1>, vector<32x32xf32>
    %c8 = arith.constant 8 : index
    %c0_69 = arith.constant 0 : index
    %c0_70 = arith.constant 0 : index
    %211 = vector.load %arg2[%c8, %c0_69, %c0_70] : memref<16x192x64xbf16, #tpu.memory_space<vmem>>, vector<1x32x32xbf16>
    %212 = vector.shape_cast %211 : vector<1x32x32xbf16> to vector<32x32xbf16>
    %c8_71 = arith.constant 8 : index
    %c0_72 = arith.constant 0 : index
    %213 = vector.load %arg3[%c8_71, %c0_72] : memref<16x64xf32, #tpu.memory_space<vmem>>, vector<1x32xf32>
    %214 = arith.truncf %210 : vector<32x32xf32> to vector<32x32xbf16>
    %cst_73 = arith.constant dense<0.000000e+00> : vector<32x32xf32>
    %215 = tpu.matmul %214, %212, %cst_73 {dimension_numbers = #tpu.dot_dimension_numbers<[1], [0], [0], [1], [0, 0, 1, 1], [], []>} : vector<32x32xbf16>, vector<32x32xbf16>, vector<32x32xf32> -> vector<32x32xf32>
    %216 = vector.broadcast %213 : vector<1x32xf32> to vector<32x32xf32>
    %217 = arith.addf %215, %216 : vector<32x32xf32>
    %218 = arith.addf %217, %181 : vector<32x32xf32>
    %c9 = arith.constant 9 : index
    %c0_74 = arith.constant 0 : index
    %c0_75 = arith.constant 0 : index
    %219 = vector.load %arg2[%c9, %c0_74, %c0_75] : memref<16x192x64xbf16, #tpu.memory_space<vmem>>, vector<1x96x32xbf16>
    %220 = vector.shape_cast %219 : vector<1x96x32xbf16> to vector<96x32xbf16>
    %c9_76 = arith.constant 9 : index
    %c0_77 = arith.constant 0 : index
    %221 = vector.load %arg3[%c9_76, %c0_77] : memref<16x64xf32, #tpu.memory_space<vmem>>, vector<1x32xf32>
    %222 = vector.extract_strided_slice %218 {offsets = [0, 0], sizes = [16, 32], strides = [1, 1]} : vector<32x32xf32> to vector<16x32xf32>
    %223 = vector.extract_strided_slice %222 {offsets = [3, 0], sizes = [1, 32], strides = [1, 1]} : vector<16x32xf32> to vector<1x32xf32>
    %224 = vector.extract_strided_slice %222 {offsets = [2, 0], sizes = [1, 32], strides = [1, 1]} : vector<16x32xf32> to vector<1x32xf32>
    %225 = vector.extract_strided_slice %222 {offsets = [1, 0], sizes = [1, 32], strides = [1, 1]} : vector<16x32xf32> to vector<1x32xf32>
    %226 = vector.extract_strided_slice %222 {offsets = [14, 0], sizes = [1, 32], strides = [1, 1]} : vector<16x32xf32> to vector<1x32xf32>
    %227 = vector.extract_strided_slice %222 {offsets = [13, 0], sizes = [1, 32], strides = [1, 1]} : vector<16x32xf32> to vector<1x32xf32>
    %228 = vector.extract_strided_slice %222 {offsets = [12, 0], sizes = [1, 32], strides = [1, 1]} : vector<16x32xf32> to vector<1x32xf32>
    %229 = tpu.concatenate %223, %224, %225, %222, %226, %227, %228 in 0 : vector<1x32xf32>, vector<1x32xf32>, vector<1x32xf32>, vector<16x32xf32>, vector<1x32xf32>, vector<1x32xf32>, vector<1x32xf32> -> vector<22x32xf32>
    %230 = vector.extract_strided_slice %229 {offsets = [0, 0], sizes = [16, 32], strides = [1, 1]} : vector<22x32xf32> to vector<16x32xf32>
    %231 = vector.extract_strided_slice %229 {offsets = [3, 0], sizes = [16, 32], strides = [1, 1]} : vector<22x32xf32> to vector<16x32xf32>
    %232 = vector.extract_strided_slice %229 {offsets = [6, 0], sizes = [16, 32], strides = [1, 1]} : vector<22x32xf32> to vector<16x32xf32>
    %233 = tpu.concatenate %230, %231, %232 in 1 : vector<16x32xf32>, vector<16x32xf32>, vector<16x32xf32> -> vector<16x96xf32>
    %234 = vector.extract_strided_slice %218 {offsets = [16, 0], sizes = [16, 32], strides = [1, 1]} : vector<32x32xf32> to vector<16x32xf32>
    %235 = vector.extract_strided_slice %234 {offsets = [3, 0], sizes = [1, 32], strides = [1, 1]} : vector<16x32xf32> to vector<1x32xf32>
    %236 = vector.extract_strided_slice %234 {offsets = [2, 0], sizes = [1, 32], strides = [1, 1]} : vector<16x32xf32> to vector<1x32xf32>
    %237 = vector.extract_strided_slice %234 {offsets = [1, 0], sizes = [1, 32], strides = [1, 1]} : vector<16x32xf32> to vector<1x32xf32>
    %238 = vector.extract_strided_slice %234 {offsets = [14, 0], sizes = [1, 32], strides = [1, 1]} : vector<16x32xf32> to vector<1x32xf32>
    %239 = vector.extract_strided_slice %234 {offsets = [13, 0], sizes = [1, 32], strides = [1, 1]} : vector<16x32xf32> to vector<1x32xf32>
    %240 = vector.extract_strided_slice %234 {offsets = [12, 0], sizes = [1, 32], strides = [1, 1]} : vector<16x32xf32> to vector<1x32xf32>
    %241 = tpu.concatenate %235, %236, %237, %234, %238, %239, %240 in 0 : vector<1x32xf32>, vector<1x32xf32>, vector<1x32xf32>, vector<16x32xf32>, vector<1x32xf32>, vector<1x32xf32>, vector<1x32xf32> -> vector<22x32xf32>
    %242 = vector.extract_strided_slice %241 {offsets = [0, 0], sizes = [16, 32], strides = [1, 1]} : vector<22x32xf32> to vector<16x32xf32>
    %243 = vector.extract_strided_slice %241 {offsets = [3, 0], sizes = [16, 32], strides = [1, 1]} : vector<22x32xf32> to vector<16x32xf32>
    %244 = vector.extract_strided_slice %241 {offsets = [6, 0], sizes = [16, 32], strides = [1, 1]} : vector<22x32xf32> to vector<16x32xf32>
    %245 = tpu.concatenate %242, %243, %244 in 1 : vector<16x32xf32>, vector<16x32xf32>, vector<16x32xf32> -> vector<16x96xf32>
    %246 = tpu.concatenate %233, %245 in 0 : vector<16x96xf32>, vector<16x96xf32> -> vector<32x96xf32>
    %247 = arith.truncf %246 : vector<32x96xf32> to vector<32x96xbf16>
    %cst_78 = arith.constant dense<0.000000e+00> : vector<32x32xf32>
    %248 = tpu.matmul %247, %220, %cst_78 {dimension_numbers = #tpu.dot_dimension_numbers<[1], [0], [0], [1], [0, 0, 1, 1], [], []>} : vector<32x96xbf16>, vector<96x32xbf16>, vector<32x32xf32> -> vector<32x32xf32>
    %249 = vector.broadcast %221 : vector<1x32xf32> to vector<32x32xf32>
    %250 = arith.addf %248, %249 : vector<32x32xf32>
    %cst_79 = arith.constant 0.000000e+00 : f32
    %251 = vector.broadcast %cst_79 : f32 to vector<32x32xf32>
    %252 = arith.cmpf oge, %250, %251 : vector<32x32xf32>
    %cst_80 = arith.constant 2.000000e-01 : f32
    %253 = vector.broadcast %cst_80 : f32 to vector<32x32xf32>
    %254 = arith.mulf %253, %250 : vector<32x32xf32>
    %255 = arith.select %252, %250, %254 : vector<32x32xi1>, vector<32x32xf32>
    %c10 = arith.constant 10 : index
    %c0_81 = arith.constant 0 : index
    %c0_82 = arith.constant 0 : index
    %256 = vector.load %arg2[%c10, %c0_81, %c0_82] : memref<16x192x64xbf16, #tpu.memory_space<vmem>>, vector<1x32x32xbf16>
    %257 = vector.shape_cast %256 : vector<1x32x32xbf16> to vector<32x32xbf16>
    %c10_83 = arith.constant 10 : index
    %c0_84 = arith.constant 0 : index
    %258 = vector.load %arg3[%c10_83, %c0_84] : memref<16x64xf32, #tpu.memory_space<vmem>>, vector<1x32xf32>
    %259 = arith.truncf %255 : vector<32x32xf32> to vector<32x32xbf16>
    %cst_85 = arith.constant dense<0.000000e+00> : vector<32x32xf32>
    %260 = tpu.matmul %259, %257, %cst_85 {dimension_numbers = #tpu.dot_dimension_numbers<[1], [0], [0], [1], [0, 0, 1, 1], [], []>} : vector<32x32xbf16>, vector<32x32xbf16>, vector<32x32xf32> -> vector<32x32xf32>
    %261 = vector.broadcast %258 : vector<1x32xf32> to vector<32x32xf32>
    %262 = arith.addf %260, %261 : vector<32x32xf32>
    %263 = arith.addf %262, %218 : vector<32x32xf32>
    %c11 = arith.constant 11 : index
    %c0_86 = arith.constant 0 : index
    %c0_87 = arith.constant 0 : index
    %264 = vector.load %arg2[%c11, %c0_86, %c0_87] : memref<16x192x64xbf16, #tpu.memory_space<vmem>>, vector<1x96x64xbf16>
    %265 = vector.shape_cast %264 : vector<1x96x64xbf16> to vector<96x64xbf16>
    %c11_88 = arith.constant 11 : index
    %c0_89 = arith.constant 0 : index
    %266 = vector.load %arg3[%c11_88, %c0_89] : memref<16x64xf32, #tpu.memory_space<vmem>>, vector<1x64xf32>
    %267 = vector.extract_strided_slice %263 {offsets = [0, 0], sizes = [16, 32], strides = [1, 1]} : vector<32x32xf32> to vector<16x32xf32>
    %c2_90 = arith.constant 2 : index
    %c0_91 = arith.constant 0 : index
    %c0_92 = arith.constant 0 : index
    %268 = vector.load %arg4[%c2_90, %c0_91, %c0_92] : memref<3x96x64xbf16, #tpu.memory_space<vmem>>, vector<1x24x16xbf16>
    %269 = vector.shape_cast %268 : vector<1x24x16xbf16> to vector<24x16xbf16>
    %270 = arith.truncf %267 : vector<16x32xf32> to vector<16x32xbf16>
    %cst_93 = arith.constant dense<0.000000e+00> : vector<24x32xf32>
    %271 = tpu.matmul %269, %270, %cst_93 {dimension_numbers = #tpu.dot_dimension_numbers<[1], [0], [0], [1], [0, 0, 1, 1], [], []>} : vector<24x16xbf16>, vector<16x32xbf16>, vector<24x32xf32> -> vector<24x32xf32>
    %272 = vector.extract_strided_slice %271 {offsets = [0, 0], sizes = [8, 32], strides = [1, 1]} : vector<24x32xf32> to vector<8x32xf32>
    %273 = vector.extract_strided_slice %271 {offsets = [8, 0], sizes = [8, 32], strides = [1, 1]} : vector<24x32xf32> to vector<8x32xf32>
    %274 = vector.extract_strided_slice %271 {offsets = [16, 0], sizes = [8, 32], strides = [1, 1]} : vector<24x32xf32> to vector<8x32xf32>
    %275 = tpu.concatenate %272, %273, %274 in 1 : vector<8x32xf32>, vector<8x32xf32>, vector<8x32xf32> -> vector<8x96xf32>
    %276 = vector.extract_strided_slice %263 {offsets = [16, 0], sizes = [16, 32], strides = [1, 1]} : vector<32x32xf32> to vector<16x32xf32>
    %c2_94 = arith.constant 2 : index
    %c0_95 = arith.constant 0 : index
    %c0_96 = arith.constant 0 : index
    %277 = vector.load %arg4[%c2_94, %c0_95, %c0_96] : memref<3x96x64xbf16, #tpu.memory_space<vmem>>, vector<1x24x16xbf16>
    %278 = vector.shape_cast %277 : vector<1x24x16xbf16> to vector<24x16xbf16>
    %279 = arith.truncf %276 : vector<16x32xf32> to vector<16x32xbf16>
    %cst_97 = arith.constant dense<0.000000e+00> : vector<24x32xf32>
    %280 = tpu.matmul %278, %279, %cst_97 {dimension_numbers = #tpu.dot_dimension_numbers<[1], [0], [0], [1], [0, 0, 1, 1], [], []>} : vector<24x16xbf16>, vector<16x32xbf16>, vector<24x32xf32> -> vector<24x32xf32>
    %281 = vector.extract_strided_slice %280 {offsets = [0, 0], sizes = [8, 32], strides = [1, 1]} : vector<24x32xf32> to vector<8x32xf32>
    %282 = vector.extract_strided_slice %280 {offsets = [8, 0], sizes = [8, 32], strides = [1, 1]} : vector<24x32xf32> to vector<8x32xf32>
    %283 = vector.extract_strided_slice %280 {offsets = [16, 0], sizes = [8, 32], strides = [1, 1]} : vector<24x32xf32> to vector<8x32xf32>
    %284 = tpu.concatenate %281, %282, %283 in 1 : vector<8x32xf32>, vector<8x32xf32>, vector<8x32xf32> -> vector<8x96xf32>
    %285 = tpu.concatenate %275, %284 in 0 : vector<8x96xf32>, vector<8x96xf32> -> vector<16x96xf32>
    %286 = arith.truncf %285 : vector<16x96xf32> to vector<16x96xbf16>
    %cst_98 = arith.constant dense<0.000000e+00> : vector<16x64xf32>
    %287 = tpu.matmul %286, %265, %cst_98 {dimension_numbers = #tpu.dot_dimension_numbers<[1], [0], [0], [1], [0, 0, 1, 1], [], []>} : vector<16x96xbf16>, vector<96x64xbf16>, vector<16x64xf32> -> vector<16x64xf32>
    %288 = vector.broadcast %266 : vector<1x64xf32> to vector<16x64xf32>
    %289 = arith.addf %287, %288 : vector<16x64xf32>
    %cst_99 = arith.constant 0.000000e+00 : f32
    %290 = vector.broadcast %cst_99 : f32 to vector<16x64xf32>
    %291 = arith.cmpf oge, %289, %290 : vector<16x64xf32>
    %cst_100 = arith.constant 2.000000e-01 : f32
    %292 = vector.broadcast %cst_100 : f32 to vector<16x64xf32>
    %293 = arith.mulf %292, %289 : vector<16x64xf32>
    %294 = arith.select %291, %289, %293 : vector<16x64xi1>, vector<16x64xf32>
    %c12 = arith.constant 12 : index
    %c0_101 = arith.constant 0 : index
    %c0_102 = arith.constant 0 : index
    %295 = vector.load %arg2[%c12, %c0_101, %c0_102] : memref<16x192x64xbf16, #tpu.memory_space<vmem>>, vector<1x192x64xbf16>
    %296 = vector.shape_cast %295 : vector<1x192x64xbf16> to vector<192x64xbf16>
    %c12_103 = arith.constant 12 : index
    %c0_104 = arith.constant 0 : index
    %297 = vector.load %arg3[%c12_103, %c0_104] : memref<16x64xf32, #tpu.memory_space<vmem>>, vector<1x64xf32>
    %298 = vector.extract_strided_slice %294 {offsets = [0, 0], sizes = [8, 64], strides = [1, 1]} : vector<16x64xf32> to vector<8x64xf32>
    %299 = vector.extract_strided_slice %298 {offsets = [1, 0], sizes = [1, 64], strides = [1, 1]} : vector<8x64xf32> to vector<1x64xf32>
    %300 = vector.extract_strided_slice %298 {offsets = [6, 0], sizes = [1, 64], strides = [1, 1]} : vector<8x64xf32> to vector<1x64xf32>
    %301 = tpu.concatenate %299, %298, %300 in 0 : vector<1x64xf32>, vector<8x64xf32>, vector<1x64xf32> -> vector<10x64xf32>
    %302 = vector.extract_strided_slice %301 {offsets = [0, 0], sizes = [8, 64], strides = [1, 1]} : vector<10x64xf32> to vector<8x64xf32>
    %303 = vector.extract_strided_slice %301 {offsets = [1, 0], sizes = [8, 64], strides = [1, 1]} : vector<10x64xf32> to vector<8x64xf32>
    %304 = vector.extract_strided_slice %301 {offsets = [2, 0], sizes = [8, 64], strides = [1, 1]} : vector<10x64xf32> to vector<8x64xf32>
    %305 = tpu.concatenate %302, %303, %304 in 1 : vector<8x64xf32>, vector<8x64xf32>, vector<8x64xf32> -> vector<8x192xf32>
    %306 = vector.extract_strided_slice %294 {offsets = [8, 0], sizes = [8, 64], strides = [1, 1]} : vector<16x64xf32> to vector<8x64xf32>
    %307 = vector.extract_strided_slice %306 {offsets = [1, 0], sizes = [1, 64], strides = [1, 1]} : vector<8x64xf32> to vector<1x64xf32>
    %308 = vector.extract_strided_slice %306 {offsets = [6, 0], sizes = [1, 64], strides = [1, 1]} : vector<8x64xf32> to vector<1x64xf32>
    %309 = tpu.concatenate %307, %306, %308 in 0 : vector<1x64xf32>, vector<8x64xf32>, vector<1x64xf32> -> vector<10x64xf32>
    %310 = vector.extract_strided_slice %309 {offsets = [0, 0], sizes = [8, 64], strides = [1, 1]} : vector<10x64xf32> to vector<8x64xf32>
    %311 = vector.extract_strided_slice %309 {offsets = [1, 0], sizes = [8, 64], strides = [1, 1]} : vector<10x64xf32> to vector<8x64xf32>
    %312 = vector.extract_strided_slice %309 {offsets = [2, 0], sizes = [8, 64], strides = [1, 1]} : vector<10x64xf32> to vector<8x64xf32>
    %313 = tpu.concatenate %310, %311, %312 in 1 : vector<8x64xf32>, vector<8x64xf32>, vector<8x64xf32> -> vector<8x192xf32>
    %314 = tpu.concatenate %305, %313 in 0 : vector<8x192xf32>, vector<8x192xf32> -> vector<16x192xf32>
    %315 = arith.truncf %314 : vector<16x192xf32> to vector<16x192xbf16>
    %cst_105 = arith.constant dense<0.000000e+00> : vector<16x64xf32>
    %316 = tpu.matmul %315, %296, %cst_105 {dimension_numbers = #tpu.dot_dimension_numbers<[1], [0], [0], [1], [0, 0, 1, 1], [], []>} : vector<16x192xbf16>, vector<192x64xbf16>, vector<16x64xf32> -> vector<16x64xf32>
    %317 = vector.broadcast %297 : vector<1x64xf32> to vector<16x64xf32>
    %318 = arith.addf %316, %317 : vector<16x64xf32>
    %cst_106 = arith.constant 0.000000e+00 : f32
    %319 = vector.broadcast %cst_106 : f32 to vector<16x64xf32>
    %320 = arith.cmpf oge, %318, %319 : vector<16x64xf32>
    %cst_107 = arith.constant 2.000000e-01 : f32
    %321 = vector.broadcast %cst_107 : f32 to vector<16x64xf32>
    %322 = arith.mulf %321, %318 : vector<16x64xf32>
    %323 = arith.select %320, %318, %322 : vector<16x64xi1>, vector<16x64xf32>
    %c13 = arith.constant 13 : index
    %c0_108 = arith.constant 0 : index
    %c0_109 = arith.constant 0 : index
    %324 = vector.load %arg2[%c13, %c0_108, %c0_109] : memref<16x192x64xbf16, #tpu.memory_space<vmem>>, vector<1x64x64xbf16>
    %325 = vector.shape_cast %324 : vector<1x64x64xbf16> to vector<64x64xbf16>
    %c13_110 = arith.constant 13 : index
    %c0_111 = arith.constant 0 : index
    %326 = vector.load %arg3[%c13_110, %c0_111] : memref<16x64xf32, #tpu.memory_space<vmem>>, vector<1x64xf32>
    %327 = arith.truncf %323 : vector<16x64xf32> to vector<16x64xbf16>
    %cst_112 = arith.constant dense<0.000000e+00> : vector<16x64xf32>
    %328 = tpu.matmul %327, %325, %cst_112 {dimension_numbers = #tpu.dot_dimension_numbers<[1], [0], [0], [1], [0, 0, 1, 1], [], []>} : vector<16x64xbf16>, vector<64x64xbf16>, vector<16x64xf32> -> vector<16x64xf32>
    %329 = vector.broadcast %326 : vector<1x64xf32> to vector<16x64xf32>
    %330 = arith.addf %328, %329 : vector<16x64xf32>
    %331 = arith.addf %330, %294 : vector<16x64xf32>
    %c14 = arith.constant 14 : index
    %c0_113 = arith.constant 0 : index
    %c0_114 = arith.constant 0 : index
    %332 = vector.load %arg2[%c14, %c0_113, %c0_114] : memref<16x192x64xbf16, #tpu.memory_space<vmem>>, vector<1x192x64xbf16>
    %333 = vector.shape_cast %332 : vector<1x192x64xbf16> to vector<192x64xbf16>
    %c14_115 = arith.constant 14 : index
    %c0_116 = arith.constant 0 : index
    %334 = vector.load %arg3[%c14_115, %c0_116] : memref<16x64xf32, #tpu.memory_space<vmem>>, vector<1x64xf32>
    %335 = vector.extract_strided_slice %331 {offsets = [0, 0], sizes = [8, 64], strides = [1, 1]} : vector<16x64xf32> to vector<8x64xf32>
    %336 = vector.extract_strided_slice %335 {offsets = [3, 0], sizes = [1, 64], strides = [1, 1]} : vector<8x64xf32> to vector<1x64xf32>
    %337 = vector.extract_strided_slice %335 {offsets = [2, 0], sizes = [1, 64], strides = [1, 1]} : vector<8x64xf32> to vector<1x64xf32>
    %338 = vector.extract_strided_slice %335 {offsets = [1, 0], sizes = [1, 64], strides = [1, 1]} : vector<8x64xf32> to vector<1x64xf32>
    %339 = vector.extract_strided_slice %335 {offsets = [6, 0], sizes = [1, 64], strides = [1, 1]} : vector<8x64xf32> to vector<1x64xf32>
    %340 = vector.extract_strided_slice %335 {offsets = [5, 0], sizes = [1, 64], strides = [1, 1]} : vector<8x64xf32> to vector<1x64xf32>
    %341 = vector.extract_strided_slice %335 {offsets = [4, 0], sizes = [1, 64], strides = [1, 1]} : vector<8x64xf32> to vector<1x64xf32>
    %342 = tpu.concatenate %336, %337, %338, %335, %339, %340, %341 in 0 : vector<1x64xf32>, vector<1x64xf32>, vector<1x64xf32>, vector<8x64xf32>, vector<1x64xf32>, vector<1x64xf32>, vector<1x64xf32> -> vector<14x64xf32>
    %343 = vector.extract_strided_slice %342 {offsets = [0, 0], sizes = [8, 64], strides = [1, 1]} : vector<14x64xf32> to vector<8x64xf32>
    %344 = vector.extract_strided_slice %342 {offsets = [3, 0], sizes = [8, 64], strides = [1, 1]} : vector<14x64xf32> to vector<8x64xf32>
    %345 = vector.extract_strided_slice %342 {offsets = [6, 0], sizes = [8, 64], strides = [1, 1]} : vector<14x64xf32> to vector<8x64xf32>
    %346 = tpu.concatenate %343, %344, %345 in 1 : vector<8x64xf32>, vector<8x64xf32>, vector<8x64xf32> -> vector<8x192xf32>
    %347 = vector.extract_strided_slice %331 {offsets = [8, 0], sizes = [8, 64], strides = [1, 1]} : vector<16x64xf32> to vector<8x64xf32>
    %348 = vector.extract_strided_slice %347 {offsets = [3, 0], sizes = [1, 64], strides = [1, 1]} : vector<8x64xf32> to vector<1x64xf32>
    %349 = vector.extract_strided_slice %347 {offsets = [2, 0], sizes = [1, 64], strides = [1, 1]} : vector<8x64xf32> to vector<1x64xf32>
    %350 = vector.extract_strided_slice %347 {offsets = [1, 0], sizes = [1, 64], strides = [1, 1]} : vector<8x64xf32> to vector<1x64xf32>
    %351 = vector.extract_strided_slice %347 {offsets = [6, 0], sizes = [1, 64], strides = [1, 1]} : vector<8x64xf32> to vector<1x64xf32>
    %352 = vector.extract_strided_slice %347 {offsets = [5, 0], sizes = [1, 64], strides = [1, 1]} : vector<8x64xf32> to vector<1x64xf32>
    %353 = vector.extract_strided_slice %347 {offsets = [4, 0], sizes = [1, 64], strides = [1, 1]} : vector<8x64xf32> to vector<1x64xf32>
    %354 = tpu.concatenate %348, %349, %350, %347, %351, %352, %353 in 0 : vector<1x64xf32>, vector<1x64xf32>, vector<1x64xf32>, vector<8x64xf32>, vector<1x64xf32>, vector<1x64xf32>, vector<1x64xf32> -> vector<14x64xf32>
    %355 = vector.extract_strided_slice %354 {offsets = [0, 0], sizes = [8, 64], strides = [1, 1]} : vector<14x64xf32> to vector<8x64xf32>
    %356 = vector.extract_strided_slice %354 {offsets = [3, 0], sizes = [8, 64], strides = [1, 1]} : vector<14x64xf32> to vector<8x64xf32>
    %357 = vector.extract_strided_slice %354 {offsets = [6, 0], sizes = [8, 64], strides = [1, 1]} : vector<14x64xf32> to vector<8x64xf32>
    %358 = tpu.concatenate %355, %356, %357 in 1 : vector<8x64xf32>, vector<8x64xf32>, vector<8x64xf32> -> vector<8x192xf32>
    %359 = tpu.concatenate %346, %358 in 0 : vector<8x192xf32>, vector<8x192xf32> -> vector<16x192xf32>
    %360 = arith.truncf %359 : vector<16x192xf32> to vector<16x192xbf16>
    %cst_117 = arith.constant dense<0.000000e+00> : vector<16x64xf32>
    %361 = tpu.matmul %360, %333, %cst_117 {dimension_numbers = #tpu.dot_dimension_numbers<[1], [0], [0], [1], [0, 0, 1, 1], [], []>} : vector<16x192xbf16>, vector<192x64xbf16>, vector<16x64xf32> -> vector<16x64xf32>
    %362 = vector.broadcast %334 : vector<1x64xf32> to vector<16x64xf32>
    %363 = arith.addf %361, %362 : vector<16x64xf32>
    %cst_118 = arith.constant 0.000000e+00 : f32
    %364 = vector.broadcast %cst_118 : f32 to vector<16x64xf32>
    %365 = arith.cmpf oge, %363, %364 : vector<16x64xf32>
    %cst_119 = arith.constant 2.000000e-01 : f32
    %366 = vector.broadcast %cst_119 : f32 to vector<16x64xf32>
    %367 = arith.mulf %366, %363 : vector<16x64xf32>
    %368 = arith.select %365, %363, %367 : vector<16x64xi1>, vector<16x64xf32>
    %c15 = arith.constant 15 : index
    %c0_120 = arith.constant 0 : index
    %c0_121 = arith.constant 0 : index
    %369 = vector.load %arg2[%c15, %c0_120, %c0_121] : memref<16x192x64xbf16, #tpu.memory_space<vmem>>, vector<1x64x64xbf16>
    %370 = vector.shape_cast %369 : vector<1x64x64xbf16> to vector<64x64xbf16>
    %c15_122 = arith.constant 15 : index
    %c0_123 = arith.constant 0 : index
    %371 = vector.load %arg3[%c15_122, %c0_123] : memref<16x64xf32, #tpu.memory_space<vmem>>, vector<1x64xf32>
    %372 = arith.truncf %368 : vector<16x64xf32> to vector<16x64xbf16>
    %cst_124 = arith.constant dense<0.000000e+00> : vector<16x64xf32>
    %373 = tpu.matmul %372, %370, %cst_124 {dimension_numbers = #tpu.dot_dimension_numbers<[1], [0], [0], [1], [0, 0, 1, 1], [], []>} : vector<16x64xbf16>, vector<64x64xbf16>, vector<16x64xf32> -> vector<16x64xf32>
    %374 = vector.broadcast %371 : vector<1x64xf32> to vector<16x64xf32>
    %375 = arith.addf %373, %374 : vector<16x64xf32>
    %376 = arith.addf %375, %331 : vector<16x64xf32>
    %c0_125 = arith.constant 0 : index
    %c0_126 = arith.constant 0 : index
    %377 = vector.load %arg5[%c0_125, %c0_126] : memref<16x64xf32, #tpu.memory_space<vmem>>, vector<16x64xf32>
    tpu.vector_store %arg5[%c0_125, %c0_126], %376 {strides = array<i32>} : memref<16x64xf32, #tpu.memory_space<vmem>>, vector<16x64xf32>,
    return
  }
  func.func @transform_0(%arg0: i32) -> (i32, i32) {
    %c0_i32 = arith.constant 0 : i32
    %c0_i32_0 = arith.constant 0 : i32
    return %arg0, %c0_i32 : i32, i32
  }
  func.func @transform_1(%arg0: i32) -> (i32, i32, i32) {
    %c0_i32 = arith.constant 0 : i32
    %c0_i32_0 = arith.constant 0 : i32
    %c0_i32_1 = arith.constant 0 : i32
    %c0_i32_2 = arith.constant 0 : i32
    return %c0_i32, %c0_i32_0, %c0_i32_1 : i32, i32, i32
  }
  func.func @transform_2(%arg0: i32) -> (i32, i32) {
    %c0_i32 = arith.constant 0 : i32
    %c0_i32_0 = arith.constant 0 : i32
    %c0_i32_1 = arith.constant 0 : i32
    return %c0_i32, %c0_i32_0 : i32, i32
  }
  func.func @transform_3(%arg0: i32) -> (i32, i32, i32) {
    %c0_i32 = arith.constant 0 : i32
    %c0_i32_0 = arith.constant 0 : i32
    %c0_i32_1 = arith.constant 0 : i32
    %c0_i32_2 = arith.constant 0 : i32
    return %c0_i32, %c0_i32_0, %c0_i32_1 : i32, i32, i32
  }
  func.func @transform_4(%arg0: i32) -> (i32, i32) {
    %c0_i32 = arith.constant 0 : i32
    %c0_i32_0 = arith.constant 0 : i32
    return %arg0, %c0_i32 : i32, i32
  }
}

</mosaic_0001>

<llo_original>
// kernel: tpu_custom_call.1
$region0: #{tpu_custom_call.1}
  #allocation0 [shape = 'u32[]', space=smem, size = 0x4, offset = 0x4, fixed_abs, tag = 'smem constant byte address 0x4 - core index']
  #allocation1 [shape = 'u32[144,128]{1,0:T(1,128)}', space=vmem, size = 0x12000, scoped, tag = 'internal scratch']
  %s0 = inlined_call_operand.vmem [shape: f32[128,4], index: 0, kind: input, shape index: {}]
  %s1 = inlined_call_operand.vmem [shape: bf16[16,192,64], index: 1, kind: input, shape index: {}]
  %s2 = inlined_call_operand.vmem [shape: f32[16,64], index: 2, kind: input, shape index: {}]
  %s3 = inlined_call_operand.vmem [shape: bf16[3,96,64], index: 3, kind: input, shape index: {}]
  %s4 = inlined_call_operand.hbm [shape: f32[16,64], index: 4, kind: output, shape index: {}]
  %s5 = sld [smem:[#allocation0]]
  $region26: #{tpu_custom_call.1} parent=0
    _
  %s7 = ssub.s32 1, %s5
  %s8 = scalar_select 0, %s7, %s5
  $region1: #{tpu_custom_call.1} parent=0
    #allocation2 [shape = 'u8[8192]{0}', space=vmem, size = 0x2000, scoped, tag = 'output window, operand 0, single buffered']
    #allocation3 [shape = 's32[1]{0}', space=sflag, size = 0x4, scoped, tag = 'scoped memory for tpu_custom_call.1']
    %9 = vsyncpa [#allocation3], 0
    // Predicated region
    $region2: #{tpu_custom_call.1} parent=1 // pred_check
      _
    $region3: #{tpu_custom_call.1} parent=1 // pred_check_branch
      %11 = sbr.rel (0) target = $region5
    $region4: #{tpu_custom_call.1} parent=1 // pred_region
      _
    $region5: #{tpu_custom_call.1} parent=1 // pred_fallthru
      _
    // Predicated region
    $region6: #{tpu_custom_call.1} parent=1 // pred_check
      _
    $region7: #{tpu_custom_call.1} parent=1 // pred_check_branch
      %13 = sbr.rel (0) target = $region9
    $region8: #{tpu_custom_call.1} parent=1 // pred_region
      _
    $region9: #{tpu_custom_call.1} parent=1 // pred_fallthru
      _
    // Predicated region
    $region10: #{tpu_custom_call.1} parent=1 // pred_check
      _
    $region11: #{tpu_custom_call.1} parent=1 // pred_check_branch
      %15 = sbr.rel (0) target = $region13
    $region12: #{tpu_custom_call.1} parent=1 // pred_region
      _
    $region13: #{tpu_custom_call.1} parent=1 // pred_fallthru
      _
    // Predicated region
    $region14: #{tpu_custom_call.1} parent=1 // pred_check
      _
    $region15: #{tpu_custom_call.1} parent=1 // pred_check_branch
      %17 = sbr.rel (0) target = $region17
    $region16: #{tpu_custom_call.1} parent=1 // pred_region
      _
    $region17: #{tpu_custom_call.1} parent=1 // pred_fallthru
      _
    %v19 = vld [vmem:[%s0] sm:$0xff]
    %v20 = vld [vmem:[%s0 + $0x8] sm:$0xff]
    %v21 = vld [vmem:[%s0 + $0x10] sm:$0xff]
    %v22 = vld [vmem:[%s0 + $0x18] sm:$0xff]
    %v23 = vld [vmem:[%s0 + $0x20] sm:$0xff]
    %v24 = vld [vmem:[%s0 + $0x28] sm:$0xff]
    %v25 = vld [vmem:[%s0 + $0x30] sm:$0xff]
    %v26 = vld [vmem:[%s0 + $0x38] sm:$0xff]
    %v27 = vld [vmem:[%s0 + $0x40] sm:$0xff]
    %v28 = vld [vmem:[%s0 + $0x48] sm:$0xff]
    %v29 = vld [vmem:[%s0 + $0x50] sm:$0xff]
    %v30 = vld [vmem:[%s0 + $0x58] sm:$0xff]
    %v31 = vld [vmem:[%s0 + $0x60] sm:$0xff]
    %v32 = vld [vmem:[%s0 + $0x68] sm:$0xff]
    %v33 = vld [vmem:[%s0 + $0x70] sm:$0xff]
    %v34 = vld [vmem:[%s0 + $0x78] sm:$0xff]
    %v35 = vld [vmem:[%s1] sm:$0xf]
    %v36 = vld [vmem:[%s1 + $0x4] sm:$0xf]
    %v37 = vld [vmem:[%s1 + $0x8] sm:$0x3]
    %v38 = vld [vmem:[%s2] sm:$0x1]
    %v40 = vrot.slane %v19, 2
    %vm49 = vcmask 1041408
    %v50 = vrot.slane %v19, 6
    %v51 = vrot.slane %v20, 6
    %v52 = vsel %vm49, %v50, %v51
    %v53 = vrot.slane %v21, 6
    %v54 = vsel %vm49, %v51, %v53
    %v55 = vrot.slane %v22, 6
    %v56 = vsel %vm49, %v53, %v55
    %v57 = vrot.slane %v23, 6
    %v58 = vsel %vm49, %v55, %v57
    %v59 = vrot.slane %v24, 6
    %v60 = vsel %vm49, %v57, %v59
    %v61 = vrot.slane %v25, 6
    %v62 = vsel %vm49, %v59, %v61
    %v63 = vrot.slane %v26, 6
    %v64 = vsel %vm49, %v61, %v63
    %v74 = vrot.slane %v26, 4
    %v76 = vrot.slane %v26, 2
    %vm78 = vcmask 1040384
    %v79 = vsel %vm78, %v40, %v19
    %v80 = vsel %vm49, %v79, %v50
    %v81 = vsel %vm49, %v63, %v74
    %vm82 = vcmask 1042432
    %v83 = vsel %vm82, %v81, %v76
    %vm86 = vcmask 1046528
    %v87 = vrot.slane %v80, 1
    %v88 = vrot.slane %v52, 1
    %v89 = vsel %vm86, %v87, %v88
    %v90 = vrot.slane %v54, 1
    %v91 = vsel %vm86, %v88, %v90
    %v92 = vrot.slane %v56, 1
    %v93 = vsel %vm86, %v90, %v92
    %v94 = vrot.slane %v58, 1
    %v95 = vsel %vm86, %v92, %v94
    %v96 = vrot.slane %v60, 1
    %v97 = vsel %vm86, %v94, %v96
    %v98 = vrot.slane %v62, 1
    %v99 = vsel %vm86, %v96, %v98
    %v100 = vrot.slane %v64, 1
    %v101 = vsel %vm86, %v98, %v100
    %v102 = vrot.slane %v83, 1
    %v103 = vsel %vm86, %v100, %v102
    %104 = vrot.lane.b32.xlu0 %v89, 4
    %v105 = vpop.permute.xlu0 %104
    %106 = vrot.lane.b32.xlu0 %v91, 4
    %v107 = vpop.permute.xlu0 %106
    %108 = vrot.lane.b32.xlu0 %v93, 4
    %v109 = vpop.permute.xlu0 %108
    %110 = vrot.lane.b32.xlu0 %v95, 4
    %v111 = vpop.permute.xlu0 %110
    %112 = vrot.lane.b32.xlu0 %v97, 4
    %v113 = vpop.permute.xlu0 %112
    %114 = vrot.lane.b32.xlu0 %v99, 4
    %v115 = vpop.permute.xlu0 %114
    %116 = vrot.lane.b32.xlu0 %v101, 4
    %v117 = vpop.permute.xlu0 %116
    %118 = vrot.lane.b32.xlu0 %v103, 4
    %v119 = vpop.permute.xlu0 %118
    %vm128 = vcmask 1045504
    %v129 = vrot.slane %v80, 2
    %v130 = vrot.slane %v52, 2
    %v131 = vsel %vm128, %v129, %v130
    %v132 = vrot.slane %v54, 2
    %v133 = vsel %vm128, %v130, %v132
    %v134 = vrot.slane %v56, 2
    %v135 = vsel %vm128, %v132, %v134
    %v136 = vrot.slane %v58, 2
    %v137 = vsel %vm128, %v134, %v136
    %v138 = vrot.slane %v60, 2
    %v139 = vsel %vm128, %v136, %v138
    %v140 = vrot.slane %v62, 2
    %v141 = vsel %vm128, %v138, %v140
    %v142 = vrot.slane %v64, 2
    %v143 = vsel %vm128, %v140, %v142
    %v144 = vrot.slane %v83, 2
    %v145 = vsel %vm128, %v142, %v144
    %146 = vrot.lane.b32.xlu0 %v131, 8
    %v147 = vpop.permute.xlu0 %146
    %148 = vrot.lane.b32.xlu0 %v133, 8
    %v149 = vpop.permute.xlu0 %148
    %150 = vrot.lane.b32.xlu0 %v135, 8
    %v151 = vpop.permute.xlu0 %150
    %152 = vrot.lane.b32.xlu0 %v137, 8
    %v153 = vpop.permute.xlu0 %152
    %154 = vrot.lane.b32.xlu0 %v139, 8
    %v155 = vpop.permute.xlu0 %154
    %156 = vrot.lane.b32.xlu0 %v141, 8
    %v157 = vpop.permute.xlu0 %156
    %158 = vrot.lane.b32.xlu0 %v143, 8
    %v159 = vpop.permute.xlu0 %158
    %160 = vrot.lane.b32.xlu0 %v145, 8
    %v161 = vpop.permute.xlu0 %160
    %vm170 = vcmask 1044480
    %v171 = vrot.slane %v80, 3
    %v172 = vrot.slane %v52, 3
    %v173 = vsel %vm170, %v171, %v172
    %v174 = vrot.slane %v54, 3
    %v175 = vsel %vm170, %v172, %v174
    %v176 = vrot.slane %v56, 3
    %v177 = vsel %vm170, %v174, %v176
    %v178 = vrot.slane %v58, 3
    %v179 = vsel %vm170, %v176, %v178
    %v180 = vrot.slane %v60, 3
    %v181 = vsel %vm170, %v178, %v180
    %v182 = vrot.slane %v62, 3
    %v183 = vsel %vm170, %v180, %v182
    %v184 = vrot.slane %v64, 3
    %v185 = vsel %vm170, %v182, %v184
    %v186 = vrot.slane %v83, 3
    %v187 = vsel %vm170, %v184, %v186
    %188 = vrot.lane.b32.xlu0 %v173, 12
    %v189 = vpop.permute.xlu0 %188
    %190 = vrot.lane.b32.xlu0 %v175, 12
    %v191 = vpop.permute.xlu0 %190
    %192 = vrot.lane.b32.xlu0 %v177, 12
    %v193 = vpop.permute.xlu0 %192
    %194 = vrot.lane.b32.xlu0 %v179, 12
    %v195 = vpop.permute.xlu0 %194
    %196 = vrot.lane.b32.xlu0 %v181, 12
    %v197 = vpop.permute.xlu0 %196
    %198 = vrot.lane.b32.xlu0 %v183, 12
    %v199 = vpop.permute.xlu0 %198
    %200 = vrot.lane.b32.xlu0 %v185, 12
    %v201 = vpop.permute.xlu0 %200
    %202 = vrot.lane.b32.xlu0 %v187, 12
    %v203 = vpop.permute.xlu0 %202
    %vm212 = vcmask 1043456
    %v213 = vrot.slane %v80, 4
    %v214 = vrot.slane %v52, 4
    %v215 = vsel %vm212, %v213, %v214
    %v216 = vrot.slane %v54, 4
    %v217 = vsel %vm212, %v214, %v216
    %v218 = vrot.slane %v56, 4
    %v219 = vsel %vm212, %v216, %v218
    %v220 = vrot.slane %v58, 4
    %v221 = vsel %vm212, %v218, %v220
    %v222 = vrot.slane %v60, 4
    %v223 = vsel %vm212, %v220, %v222
    %v224 = vrot.slane %v62, 4
    %v225 = vsel %vm212, %v222, %v224
    %v226 = vrot.slane %v64, 4
    %v227 = vsel %vm212, %v224, %v226
    %v228 = vrot.slane %v83, 4
    %v229 = vsel %vm212, %v226, %v228
    %230 = vrot.lane.b32.xlu0 %v215, 16
    %v231 = vpop.permute.xlu0 %230
    %232 = vrot.lane.b32.xlu0 %v217, 16
    %v233 = vpop.permute.xlu0 %232
    %234 = vrot.lane.b32.xlu0 %v219, 16
    %v235 = vpop.permute.xlu0 %234
    %236 = vrot.lane.b32.xlu0 %v221, 16
    %v237 = vpop.permute.xlu0 %236
    %238 = vrot.lane.b32.xlu0 %v223, 16
    %v239 = vpop.permute.xlu0 %238
    %240 = vrot.lane.b32.xlu0 %v225, 16
    %v241 = vpop.permute.xlu0 %240
    %242 = vrot.lane.b32.xlu0 %v227, 16
    %v243 = vpop.permute.xlu0 %242
    %244 = vrot.lane.b32.xlu0 %v229, 16
    %v245 = vpop.permute.xlu0 %244
    %vm254 = vcmask 31744
    %v255 = vsel %vm254, %v80, %v105
    %v256 = vsel %vm254, %v52, %v107
    %v257 = vsel %vm254, %v54, %v109
    %v258 = vsel %vm254, %v56, %v111
    %v259 = vsel %vm254, %v58, %v113
    %v260 = vsel %vm254, %v60, %v115
    %v261 = vsel %vm254, %v62, %v117
    %v262 = vsel %vm254, %v64, %v119
    %vm263 = vcmask 64512
    %v264 = vsel %vm263, %v255, %v147
    %v265 = vsel %vm263, %v256, %v149
    %v266 = vsel %vm263, %v257, %v151
    %v267 = vsel %vm263, %v258, %v153
    %v268 = vsel %vm263, %v259, %v155
    %v269 = vsel %vm263, %v260, %v157
    %v270 = vsel %vm263, %v261, %v159
    %v271 = vsel %vm263, %v262, %v161
    %vm272 = vcmask 97280
    %v273 = vsel %vm272, %v264, %v189
    %v274 = vsel %vm272, %v265, %v191
    %v275 = vsel %vm272, %v266, %v193
    %v276 = vsel %vm272, %v267, %v195
    %v277 = vsel %vm272, %v268, %v197
    %v278 = vsel %vm272, %v269, %v199
    %v279 = vsel %vm272, %v270, %v201
    %v280 = vsel %vm272, %v271, %v203
    %vm281 = vcmask 130048
    %v282 = vsel %vm281, %v273, %v231
    %v283 = vsel %vm281, %v274, %v233
    %v284 = vsel %vm281, %v275, %v235
    %v285 = vsel %vm281, %v276, %v237
    %v286 = vsel %vm281, %v277, %v239
    %v287 = vsel %vm281, %v278, %v241
    %v288 = vsel %vm281, %v279, %v243
    %v289 = vsel %vm281, %v280, %v245
    %v291 = vrot.slane %v27, 2
    %v300 = vrot.slane %v27, 6
    %v301 = vrot.slane %v28, 6
    %v302 = vsel %vm49, %v300, %v301
    %v303 = vrot.slane %v29, 6
    %v304 = vsel %vm49, %v301, %v303
    %v305 = vrot.slane %v30, 6
    %v306 = vsel %vm49, %v303, %v305
    %v307 = vrot.slane %v31, 6
    %v308 = vsel %vm49, %v305, %v307
    %v309 = vrot.slane %v32, 6
    %v310 = vsel %vm49, %v307, %v309
    %v311 = vrot.slane %v33, 6
    %v312 = vsel %vm49, %v309, %v311
    %v313 = vrot.slane %v34, 6
    %v314 = vsel %vm49, %v311, %v313
    %v324 = vrot.slane %v34, 4
    %v326 = vrot.slane %v34, 2
    %v328 = vsel %vm78, %v291, %v27
    %v329 = vsel %vm49, %v328, %v300
    %v330 = vsel %vm49, %v313, %v324
    %v331 = vsel %vm82, %v330, %v326
    %v334 = vrot.slane %v329, 1
    %v335 = vrot.slane %v302, 1
    %v336 = vsel %vm86, %v334, %v335
    %v337 = vrot.slane %v304, 1
    %v338 = vsel %vm86, %v335, %v337
    %v339 = vrot.slane %v306, 1
    %v340 = vsel %vm86, %v337, %v339
    %v341 = vrot.slane %v308, 1
    %v342 = vsel %vm86, %v339, %v341
    %v343 = vrot.slane %v310, 1
    %v344 = vsel %vm86, %v341, %v343
    %v345 = vrot.slane %v312, 1
    %v346 = vsel %vm86, %v343, %v345
    %v347 = vrot.slane %v314, 1
    %v348 = vsel %vm86, %v345, %v347
    %v349 = vrot.slane %v331, 1
    %v350 = vsel %vm86, %v347, %v349
    %351 = vrot.lane.b32.xlu0 %v336, 4
    %v352 = vpop.permute.xlu0 %351
    %353 = vrot.lane.b32.xlu0 %v338, 4
    %v354 = vpop.permute.xlu0 %353
    %355 = vrot.lane.b32.xlu0 %v340, 4
    %v356 = vpop.permute.xlu0 %355
    %357 = vrot.lane.b32.xlu0 %v342, 4
    %v358 = vpop.permute.xlu0 %357
    %359 = vrot.lane.b32.xlu0 %v344, 4
    %v360 = vpop.permute.xlu0 %359
    %361 = vrot.lane.b32.xlu0 %v346, 4
    %v362 = vpop.permute.xlu0 %361
    %363 = vrot.lane.b32.xlu0 %v348, 4
    %v364 = vpop.permute.xlu0 %363
    %365 = vrot.lane.b32.xlu0 %v350, 4
    %v366 = vpop.permute.xlu0 %365
    %v375 = vrot.slane %v329, 2
    %v376 = vrot.slane %v302, 2
    %v377 = vsel %vm128, %v375, %v376
    %v378 = vrot.slane %v304, 2
    %v379 = vsel %vm128, %v376, %v378
    %v380 = vrot.slane %v306, 2
    %v381 = vsel %vm128, %v378, %v380
    %v382 = vrot.slane %v308, 2
    %v383 = vsel %vm128, %v380, %v382
    %v384 = vrot.slane %v310, 2
    %v385 = vsel %vm128, %v382, %v384
    %v386 = vrot.slane %v312, 2
    %v387 = vsel %vm128, %v384, %v386
    %v388 = vrot.slane %v314, 2
    %v389 = vsel %vm128, %v386, %v388
    %v390 = vrot.slane %v331, 2
    %v391 = vsel %vm128, %v388, %v390
    %392 = vrot.lane.b32.xlu0 %v377, 8
    %v393 = vpop.permute.xlu0 %392
    %394 = vrot.lane.b32.xlu0 %v379, 8
    %v395 = vpop.permute.xlu0 %394
    %396 = vrot.lane.b32.xlu0 %v381, 8
    %v397 = vpop.permute.xlu0 %396
    %398 = vrot.lane.b32.xlu0 %v383, 8
    %v399 = vpop.permute.xlu0 %398
    %400 = vrot.lane.b32.xlu0 %v385, 8
    %v401 = vpop.permute.xlu0 %400
    %402 = vrot.lane.b32.xlu0 %v387, 8
    %v403 = vpop.permute.xlu0 %402
    %404 = vrot.lane.b32.xlu0 %v389, 8
    %v405 = vpop.permute.xlu0 %404
    %406 = vrot.lane.b32.xlu0 %v391, 8
    %v407 = vpop.permute.xlu0 %406
    %v416 = vrot.slane %v329, 3
    %v417 = vrot.slane %v302, 3
    %v418 = vsel %vm170, %v416, %v417
    %v419 = vrot.slane %v304, 3
    %v420 = vsel %vm170, %v417, %v419
    %v421 = vrot.slane %v306, 3
    %v422 = vsel %vm170, %v419, %v421
    %v423 = vrot.slane %v308, 3
    %v424 = vsel %vm170, %v421, %v423
    %v425 = vrot.slane %v310, 3
    %v426 = vsel %vm170, %v423, %v425
    %v427 = vrot.slane %v312, 3
    %v428 = vsel %vm170, %v425, %v427
    %v429 = vrot.slane %v314, 3
    %v430 = vsel %vm170, %v427, %v429
    %v431 = vrot.slane %v331, 3
    %v432 = vsel %vm170, %v429, %v431
    %433 = vrot.lane.b32.xlu0 %v418, 12
    %v434 = vpop.permute.xlu0 %433
    %435 = vrot.lane.b32.xlu0 %v420, 12
    %v436 = vpop.permute.xlu0 %435
    %437 = vrot.lane.b32.xlu0 %v422, 12
    %v438 = vpop.permute.xlu0 %437
    %439 = vrot.lane.b32.xlu0 %v424, 12
    %v440 = vpop.permute.xlu0 %439
    %441 = vrot.lane.b32.xlu0 %v426, 12
    %v442 = vpop.permute.xlu0 %441
    %443 = vrot.lane.b32.xlu0 %v428, 12
    %v444 = vpop.permute.xlu0 %443
    %445 = vrot.lane.b32.xlu0 %v430, 12
    %v446 = vpop.permute.xlu0 %445
    %447 = vrot.lane.b32.xlu0 %v432, 12
    %v448 = vpop.permute.xlu0 %447
    %v457 = vrot.slane %v329, 4
    %v458 = vrot.slane %v302, 4
    %v459 = vsel %vm212, %v457, %v458
    %v460 = vrot.slane %v304, 4
    %v461 = vsel %vm212, %v458, %v460
    %v462 = vrot.slane %v306, 4
    %v463 = vsel %vm212, %v460, %v462
    %v464 = vrot.slane %v308, 4
    %v465 = vsel %vm212, %v462, %v464
    %v466 = vrot.slane %v310, 4
    %v467 = vsel %vm212, %v464, %v466
    %v468 = vrot.slane %v312, 4
    %v469 = vsel %vm212, %v466, %v468
    %v470 = vrot.slane %v314, 4
    %v471 = vsel %vm212, %v468, %v470
    %v472 = vrot.slane %v331, 4
    %v473 = vsel %vm212, %v470, %v472
    %474 = vrot.lane.b32.xlu0 %v459, 16
    %v475 = vpop.permute.xlu0 %474
    %476 = vrot.lane.b32.xlu0 %v461, 16
    %v477 = vpop.permute.xlu0 %476
    %478 = vrot.lane.b32.xlu0 %v463, 16
    %v479 = vpop.permute.xlu0 %478
    %480 = vrot.lane.b32.xlu0 %v465, 16
    %v481 = vpop.permute.xlu0 %480
    %482 = vrot.lane.b32.xlu0 %v467, 16
    %v483 = vpop.permute.xlu0 %482
    %484 = vrot.lane.b32.xlu0 %v469, 16
    %v485 = vpop.permute.xlu0 %484
    %486 = vrot.lane.b32.xlu0 %v471, 16
    %v487 = vpop.permute.xlu0 %486
    %488 = vrot.lane.b32.xlu0 %v473, 16
    %v489 = vpop.permute.xlu0 %488
    %v498 = vsel %vm254, %v329, %v352
    %v499 = vsel %vm254, %v302, %v354
    %v500 = vsel %vm254, %v304, %v356
    %v501 = vsel %vm254, %v306, %v358
    %v502 = vsel %vm254, %v308, %v360
    %v503 = vsel %vm254, %v310, %v362
    %v504 = vsel %vm254, %v312, %v364
    %v505 = vsel %vm254, %v314, %v366
    %v506 = vsel %vm263, %v498, %v393
    %v507 = vsel %vm263, %v499, %v395
    %v508 = vsel %vm263, %v500, %v397
    %v509 = vsel %vm263, %v501, %v399
    %v510 = vsel %vm263, %v502, %v401
    %v511 = vsel %vm263, %v503, %v403
    %v512 = vsel %vm263, %v504, %v405
    %v513 = vsel %vm263, %v505, %v407
    %v514 = vsel %vm272, %v506, %v434
    %v515 = vsel %vm272, %v507, %v436
    %v516 = vsel %vm272, %v508, %v438
    %v517 = vsel %vm272, %v509, %v440
    %v518 = vsel %vm272, %v510, %v442
    %v519 = vsel %vm272, %v511, %v444
    %v520 = vsel %vm272, %v512, %v446
    %v521 = vsel %vm272, %v513, %v448
    %v522 = vsel %vm281, %v514, %v475
    %v523 = vsel %vm281, %v515, %v477
    %v524 = vsel %vm281, %v516, %v479
    %v525 = vsel %vm281, %v517, %v481
    %v526 = vsel %vm281, %v518, %v483
    %v527 = vsel %vm281, %v519, %v485
    %v528 = vsel %vm281, %v520, %v487
    %v529 = vsel %vm281, %v521, %v489
    %v530 = vpack.c.bf16 %v283, %v282
    %v531 = vpack.c.bf16 %v285, %v284
    %v532 = vpack.c.bf16 %v287, %v286
    %v533 = vpack.c.bf16 %v289, %v288
    %v534 = vpack.c.bf16 %v523, %v522
    %v535 = vpack.c.bf16 %v525, %v524
    %v536 = vpack.c.bf16 %v527, %v526
    %v537 = vpack.c.bf16 %v529, %v528
    %v538 = vlaneseq
    %v539 = vshrl.u32 %v538, 7
    %v540 = vsub.s32 0, %v539
    %v541 = vrot.slane %v38, %v540
    %v545 = vunpack.c.l.b16 %v35
    %v546 = vunpack.c.l.b16 %v36
    %v547 = vunpack.c.l.b16 %v37
    %v548 = vpack.c.b16 %v546, %v545
    %v549 = vpack.c.b16 %v547, %v547
    %vm551 = vcmask 162816
    %v553 = vsel %vm551, %v530, 0
    %v556 = vsel %vm551, %v531, 0
    %v559 = vsel %vm551, %v532, 0
    %v562 = vsel %vm551, %v533, 0
    %v565 = vsel %vm551, %v534, 0
    %v568 = vsel %vm551, %v535, 0
    %v571 = vsel %vm551, %v536, 0
    %v574 = vsel %vm551, %v537, 0
    %v577 = vsel %vm49, %v549, 0
    %579 = vmatprep.subr.bf16.mxu0 0
    %580 = vmatpush1.bf16.msra.mxu0 %v548
    %581 = vmatprep.subr.bf16.mxu0 0
    %582 = vmatpush1.bf16.msra.mxu0 %v577
    %583 = vmatprep.subr.bf16.mxu0 0
    %584 = vmatpush1.bf16.msra.mxu0 0
    %585 = vmatprep.subr.bf16.mxu0 0
    %586 = vmatpush1.bf16.msra.mxu0 0
    %587 = vmatprep.subr.bf16.mxu0 0
    %588 = vmatpush1.bf16.msra.mxu0 0
    %589 = vmatprep.subr.bf16.mxu0 0
    %590 = vmatpush1.bf16.msra.mxu0 0
    %591 = vmatprep.subr.bf16.mxu0 0
    %592 = vmatpush1.bf16.msra.mxu0 0
    %593 = vmatprep.subr.bf16.mxu0 0
    %594 = vmatpush1.bf16.msra.mxu0 0
    %595 = vmatprep.subr.bf16.mxu0 0
    %596 = vmatpush1.bf16.msra.mxu0 0
    %597 = vmatprep.subr.bf16.mxu0 0
    %598 = vmatpush1.bf16.msra.mxu0 0
    %599 = vmatprep.subr.bf16.mxu0 0
    %600 = vmatpush1.bf16.msra.mxu0 0
    %601 = vmatprep.subr.bf16.mxu0 0
    %602 = vmatpush1.bf16.msra.mxu0 0
    %603 = vmatprep.subr.bf16.mxu0 0
    %604 = vmatpush1.bf16.msra.mxu0 0
    %605 = vmatprep.subr.bf16.mxu0 0
    %606 = vmatpush1.bf16.msra.mxu0 0
    %607 = vmatprep.subr.bf16.mxu0 0
    %608 = vmatpush1.bf16.msra.mxu0 0
    %609 = vmatprep.subr.bf16.mxu0 0
    %610 = vmatpush1.bf16.msra.mxu0 0
    %611 = vmatprep.mubr.bf16.mxu0 0
    %612 = vmatmul.mubr.bf16.gmra.mrb[0].mxu0 %v553
    %v613 = vpop.f32.mrb[0].mxu0
    %v614 = vadd.f32 %v541, %v613
    %v615 = vpop.f32.mrb[0].mxu0
    %v616 = vpop.f32.mrb[0].mxu0
    %v617 = vadd.f32 %v541, %v616
    %v618 = vpop.f32.mrb[0].mxu0
    %619 = vmatprep.mubr.bf16.mxu0 0
    %620 = vmatmul.mubr.bf16.gmra.mrb[0].mxu0 %v556
    %v621 = vpop.f32.mrb[0].mxu0
    %v622 = vadd.f32 %v541, %v621
    %v623 = vpop.f32.mrb[0].mxu0
    %v624 = vpop.f32.mrb[0].mxu0
    %v625 = vadd.f32 %v541, %v624
    %v626 = vpop.f32.mrb[0].mxu0
    %627 = vmatprep.mubr.bf16.mxu0 0
    %628 = vmatmul.mubr.bf16.gmra.mrb[0].mxu0 %v559
    %v629 = vpop.f32.mrb[0].mxu0
    %v630 = vadd.f32 %v541, %v629
    %v631 = vpop.f32.mrb[0].mxu0
    %v632 = vpop.f32.mrb[0].mxu0
    %v633 = vadd.f32 %v541, %v632
    %v634 = vpop.f32.mrb[0].mxu0
    %635 = vmatprep.mubr.bf16.mxu0 0
    %636 = vmatmul.mubr.bf16.gmra.mrb[0].mxu0 %v562
    %v637 = vpop.f32.mrb[0].mxu0
    %v638 = vadd.f32 %v541, %v637
    %v639 = vpop.f32.mrb[0].mxu0
    %v640 = vpop.f32.mrb[0].mxu0
    %v641 = vadd.f32 %v541, %v640
    %v642 = vpop.f32.mrb[0].mxu0
    %643 = vmatprep.mubr.bf16.mxu0 0
    %644 = vmatmul.mubr.bf16.gmra.mrb[0].mxu0 %v565
    %v645 = vpop.f32.mrb[0].mxu0
    %v646 = vadd.f32 %v541, %v645
    %v647 = vpop.f32.mrb[0].mxu0
    %v648 = vpop.f32.mrb[0].mxu0
    %v649 = vadd.f32 %v541, %v648
    %v650 = vpop.f32.mrb[0].mxu0
    %651 = vmatprep.mubr.bf16.mxu0 0
    %652 = vmatmul.mubr.bf16.gmra.mrb[0].mxu0 %v568
    %v653 = vpop.f32.mrb[0].mxu0
    %v654 = vadd.f32 %v541, %v653
    %v655 = vpop.f32.mrb[0].mxu0
    %v656 = vpop.f32.mrb[0].mxu0
    %v657 = vadd.f32 %v541, %v656
    %v658 = vpop.f32.mrb[0].mxu0
    %659 = vmatprep.mubr.bf16.mxu0 0
    %660 = vmatmul.mubr.bf16.gmra.mrb[0].mxu0 %v571
    %v661 = vpop.f32.mrb[0].mxu0
    %v662 = vadd.f32 %v541, %v661
    %v663 = vpop.f32.mrb[0].mxu0
    %v664 = vpop.f32.mrb[0].mxu0
    %v665 = vadd.f32 %v541, %v664
    %v666 = vpop.f32.mrb[0].mxu0
    %667 = vmatprep.mubr.bf16.mxu0 0
    %668 = vmatmul.mubr.bf16.gmra.mrb[0].mxu0 %v574
    %v669 = vpop.f32.mrb[0].mxu0
    %v670 = vadd.f32 %v541, %v669
    %v671 = vpop.f32.mrb[0].mxu0
    %v672 = vpop.f32.mrb[0].mxu0
    %v673 = vadd.f32 %v541, %v672
    %v674 = vpop.f32.mrb[0].mxu0
    %675 = vdwg.mxu0
    %vm676 = vcmp.ge.f32.partialorder %v614, 0.0
    %vm677 = vcmp.ge.f32.partialorder %v617, 0.0
    %vm678 = vcmp.ge.f32.partialorder %v622, 0.0
    %vm679 = vcmp.ge.f32.partialorder %v625, 0.0
    %vm680 = vcmp.ge.f32.partialorder %v630, 0.0
    %vm681 = vcmp.ge.f32.partialorder %v633, 0.0
    %vm682 = vcmp.ge.f32.partialorder %v638, 0.0
    %vm683 = vcmp.ge.f32.partialorder %v641, 0.0
    %vm684 = vcmp.ge.f32.partialorder %v646, 0.0
    %vm685 = vcmp.ge.f32.partialorder %v649, 0.0
    %vm686 = vcmp.ge.f32.partialorder %v654, 0.0
    %vm687 = vcmp.ge.f32.partialorder %v657, 0.0
    %vm688 = vcmp.ge.f32.partialorder %v662, 0.0
    %vm689 = vcmp.ge.f32.partialorder %v665, 0.0
    %vm690 = vcmp.ge.f32.partialorder %v670, 0.0
    %vm691 = vcmp.ge.f32.partialorder %v673, 0.0
    %v692 = vmul.f32 %v614, 0.2
    %v693 = vmul.f32 %v617, 0.2
    %v694 = vmul.f32 %v622, 0.2
    %v695 = vmul.f32 %v625, 0.2
    %v696 = vmul.f32 %v630, 0.2
    %v697 = vmul.f32 %v633, 0.2
    %v698 = vmul.f32 %v638, 0.2
    %v699 = vmul.f32 %v641, 0.2
    %v700 = vmul.f32 %v646, 0.2
    %v701 = vmul.f32 %v649, 0.2
    %v702 = vmul.f32 %v654, 0.2
    %v703 = vmul.f32 %v657, 0.2
    %v704 = vmul.f32 %v662, 0.2
    %v705 = vmul.f32 %v665, 0.2
    %v706 = vmul.f32 %v670, 0.2
    %v707 = vmul.f32 %v673, 0.2
    %v708 = vsel %vm676, %v614, %v692
    %v709 = vsel %vm677, %v617, %v693
    %v710 = vsel %vm678, %v622, %v694
    %v711 = vsel %vm679, %v625, %v695
    %v712 = vsel %vm680, %v630, %v696
    %v713 = vsel %vm681, %v633, %v697
    %v714 = vsel %vm682, %v638, %v698
    %v715 = vsel %vm683, %v641, %v699
    %v716 = vsel %vm684, %v646, %v700
    %v717 = vsel %vm685, %v649, %v701
    %v718 = vsel %vm686, %v654, %v702
    %v719 = vsel %vm687, %v657, %v703
    %v720 = vsel %vm688, %v662, %v704
    %v721 = vsel %vm689, %v665, %v705
    %v722 = vsel %vm690, %v670, %v706
    %v723 = vsel %vm691, %v673, %v707
    %s724 = scalar_lea.vmem %s1, 96
    %v725 = vld [vmem:[%s724] sm:$0xf]
    %v726 = vld [vmem:[%s724 + $0x4] sm:$0xf]
    %v727 = vld [vmem:[%s724 + $0x8] sm:$0xf]
    %v728 = vld [vmem:[%s2 + $0x1] sm:$0x1]
    %v729 = vld [vmem:[%s3] sm:$0xf]
    %v730 = vld [vmem:[%s3 + $0x4] sm:$0xf]
    %v731 = vld [vmem:[%s3 + $0x8] sm:$0xf]
    %v732 = vld [vmem:[%s3 + $0xc] sm:$0xf]
    %v733 = vld [vmem:[%s3 + $0x10] sm:$0xf]
    %v734 = vld [vmem:[%s3 + $0x14] sm:$0xf]
    %v735 = vld [vmem:[%s3 + $0x18] sm:$0xf]
    %v736 = vld [vmem:[%s3 + $0x1c] sm:$0xf]
    %v737 = vld [vmem:[%s3 + $0x20] sm:$0xf]
    %v738 = vld [vmem:[%s3 + $0x24] sm:$0xf]
    %v739 = vld [vmem:[%s3 + $0x28] sm:$0xf]
    %v740 = vld [vmem:[%s3 + $0x2c] sm:$0xf]
    %v741 = vpack.c.bf16 %v709, %v708
    %v742 = vpack.c.bf16 %v711, %v710
    %v743 = vpack.c.bf16 %v713, %v712
    %v744 = vpack.c.bf16 %v715, %v714
    %v757 = vunpack.c.l.b16 %v729
    %v758 = vunpack.c.l.b16 %v730
    %v759 = vunpack.c.l.b16 %v731
    %v760 = vunpack.c.l.b16 %v732
    %v761 = vunpack.c.l.b16 %v733
    %v762 = vunpack.c.l.b16 %v734
    %v763 = vunpack.c.l.b16 %v735
    %v764 = vunpack.c.l.b16 %v736
    %v765 = vunpack.c.l.b16 %v737
    %v766 = vunpack.c.l.b16 %v738
    %v767 = vunpack.c.l.b16 %v739
    %v768 = vunpack.c.l.b16 %v740
    %v769 = vpack.c.b16 %v758, %v757
    %v770 = vpack.c.b16 %v760, %v759
    %v771 = vpack.c.b16 %v762, %v761
    %v772 = vpack.c.b16 %v764, %v763
    %v773 = vpack.c.b16 %v766, %v765
    %v774 = vpack.c.b16 %v768, %v767
    %vm775 = vcmask 523264
    %v777 = vsel %vm775, %v769, 0
    %v780 = vsel %vm775, %v770, 0
    %v783 = vsel %vm775, %v771, 0
    %v786 = vsel %vm775, %v772, 0
    %v789 = vsel %vm775, %v773, 0
    %v792 = vsel %vm775, %v774, 0
    %794 = vmatprep.subr.bf16.mxu0 0
    %795 = vmatpush1.bf16.msra.mxu0 %v741
    %796 = vmatprep.subr.bf16.mxu0 0
    %797 = vmatpush1.bf16.msra.mxu0 %v742
    %798 = vmatprep.subr.bf16.mxu0 0
    %799 = vmatpush1.bf16.msra.mxu0 %v743
    %800 = vmatprep.subr.bf16.mxu0 0
    %801 = vmatpush1.bf16.msra.mxu0 %v744
    %802 = vmatprep.subr.bf16.mxu0 0
    %803 = vmatpush1.bf16.msra.mxu0 0
    %804 = vmatprep.subr.bf16.mxu0 0
    %805 = vmatpush1.bf16.msra.mxu0 0
    %806 = vmatprep.subr.bf16.mxu0 0
    %807 = vmatpush1.bf16.msra.mxu0 0
    %808 = vmatprep.subr.bf16.mxu0 0
    %809 = vmatpush1.bf16.msra.mxu0 0
    %810 = vmatprep.subr.bf16.mxu0 0
    %811 = vmatpush1.bf16.msra.mxu0 0
    %812 = vmatprep.subr.bf16.mxu0 0
    %813 = vmatpush1.bf16.msra.mxu0 0
    %814 = vmatprep.subr.bf16.mxu0 0
    %815 = vmatpush1.bf16.msra.mxu0 0
    %816 = vmatprep.subr.bf16.mxu0 0
    %817 = vmatpush1.bf16.msra.mxu0 0
    %818 = vmatprep.subr.bf16.mxu0 0
    %819 = vmatpush1.bf16.msra.mxu0 0
    %820 = vmatprep.subr.bf16.mxu0 0
    %821 = vmatpush1.bf16.msra.mxu0 0
    %822 = vmatprep.subr.bf16.mxu0 0
    %823 = vmatpush1.bf16.msra.mxu0 0
    %824 = vmatprep.subr.bf16.mxu0 0
    %825 = vmatpush1.bf16.msra.mxu0 0
    %826 = vmatprep.mubr.bf16.mxu0 0
    %827 = vmatmul.mubr.bf16.gmra.mrb[0].mxu0 %v777
    %v828 = vpop.f32.mrb[0].mxu0
    %v829 = vadd.f32 0.0, %v828
    %v830 = vpop.f32.mrb[0].mxu0
    %v831 = vpop.f32.mrb[0].mxu0
    %v832 = vadd.f32 0.0, %v831
    %v833 = vpop.f32.mrb[0].mxu0
    %834 = vmatprep.mubr.bf16.mxu0 0
    %835 = vmatmul.mubr.bf16.gmra.mrb[0].mxu0 %v780
    %v836 = vpop.f32.mrb[0].mxu0
    %v837 = vadd.f32 0.0, %v836
    %v838 = vpop.f32.mrb[0].mxu0
    %v839 = vpop.f32.mrb[0].mxu0
    %v840 = vadd.f32 0.0, %v839
    %v841 = vpop.f32.mrb[0].mxu0
    %842 = vmatprep.mubr.bf16.mxu0 0
    %843 = vmatmul.mubr.bf16.gmra.mrb[0].mxu0 %v783
    %v844 = vpop.f32.mrb[0].mxu0
    %v845 = vadd.f32 0.0, %v844
    %v846 = vpop.f32.mrb[0].mxu0
    %v847 = vpop.f32.mrb[0].mxu0
    %v848 = vadd.f32 0.0, %v847
    %v849 = vpop.f32.mrb[0].mxu0
    %850 = vmatprep.mubr.bf16.mxu0 0
    %851 = vmatmul.mubr.bf16.gmra.mrb[0].mxu0 %v786
    %v852 = vpop.f32.mrb[0].mxu0
    %v853 = vadd.f32 0.0, %v852
    %v854 = vpop.f32.mrb[0].mxu0
    %v855 = vpop.f32.mrb[0].mxu0
    %v856 = vadd.f32 0.0, %v855
    %v857 = vpop.f32.mrb[0].mxu0
    %858 = vmatprep.mubr.bf16.mxu0 0
    %859 = vmatmul.mubr.bf16.gmra.mrb[0].mxu0 %v789
    %v860 = vpop.f32.mrb[0].mxu0
    %v861 = vadd.f32 0.0, %v860
    %v862 = vpop.f32.mrb[0].mxu0
    %v863 = vpop.f32.mrb[0].mxu0
    %v864 = vadd.f32 0.0, %v863
    %v865 = vpop.f32.mrb[0].mxu0
    %866 = vmatprep.mubr.bf16.mxu0 0
    %867 = vmatmul.mubr.bf16.gmra.mrb[0].mxu0 %v792
    %v868 = vpop.f32.mrb[0].mxu0
    %v869 = vadd.f32 0.0, %v868
    %v870 = vpop.f32.mrb[0].mxu0
    %v871 = vpop.f32.mrb[0].mxu0
    %v872 = vadd.f32 0.0, %v871
    %v873 = vpop.f32.mrb[0].mxu0
    %874 = vdwg.mxu0
    %879 = vrot.lane.b32.xlu0 %v845, 8
    %v880 = vpop.permute.xlu0 %879
    %881 = vrot.lane.b32.xlu0 %v848, 8
    %v882 = vpop.permute.xlu0 %881
    %883 = vrot.lane.b32.xlu0 %v853, 8
    %v884 = vpop.permute.xlu0 %883
    %885 = vrot.lane.b32.xlu0 %v856, 8
    %v886 = vpop.permute.xlu0 %885
    %895 = vrot.lane.b32.xlu0 %v861, 16
    %v896 = vpop.permute.xlu0 %895
    %897 = vrot.lane.b32.xlu0 %v864, 16
    %v898 = vpop.permute.xlu0 %897
    %899 = vrot.lane.b32.xlu0 %v869, 16
    %v900 = vpop.permute.xlu0 %899
    %901 = vrot.lane.b32.xlu0 %v872, 16
    %v902 = vpop.permute.xlu0 %901
    %v907 = vsel %vm263, %v829, %v880
    %v908 = vsel %vm263, %v832, %v882
    %v909 = vsel %vm263, %v837, %v884
    %v910 = vsel %vm263, %v840, %v886
    %v911 = vsel %vm281, %v907, %v896
    %v912 = vsel %vm281, %v908, %v898
    %v913 = vsel %vm281, %v909, %v900
    %v914 = vsel %vm281, %v910, %v902
    %v915 = vpack.c.bf16 %v717, %v716
    %v916 = vpack.c.bf16 %v719, %v718
    %v917 = vpack.c.bf16 %v721, %v720
    %v918 = vpack.c.bf16 %v723, %v722
    %919 = vmatprep.subr.bf16.mxu0 0
    %920 = vmatpush1.bf16.msra.mxu0 %v915
    %921 = vmatprep.subr.bf16.mxu0 0
    %922 = vmatpush1.bf16.msra.mxu0 %v916
    %923 = vmatprep.subr.bf16.mxu0 0
    %924 = vmatpush1.bf16.msra.mxu0 %v917
    %925 = vmatprep.subr.bf16.mxu0 0
    %926 = vmatpush1.bf16.msra.mxu0 %v918
    %927 = vmatprep.subr.bf16.mxu0 0
    %928 = vmatpush1.bf16.msra.mxu0 0
    %929 = vmatprep.subr.bf16.mxu0 0
    %930 = vmatpush1.bf16.msra.mxu0 0
    %931 = vmatprep.subr.bf16.mxu0 0
    %932 = vmatpush1.bf16.msra.mxu0 0
    %933 = vmatprep.subr.bf16.mxu0 0
    %934 = vmatpush1.bf16.msra.mxu0 0
    %935 = vmatprep.subr.bf16.mxu0 0
    %936 = vmatpush1.bf16.msra.mxu0 0
    %937 = vmatprep.subr.bf16.mxu0 0
    %938 = vmatpush1.bf16.msra.mxu0 0
    %939 = vmatprep.subr.bf16.mxu0 0
    %940 = vmatpush1.bf16.msra.mxu0 0
    %941 = vmatprep.subr.bf16.mxu0 0
    %942 = vmatpush1.bf16.msra.mxu0 0
    %943 = vmatprep.subr.bf16.mxu0 0
    %944 = vmatpush1.bf16.msra.mxu0 0
    %945 = vmatprep.subr.bf16.mxu0 0
    %946 = vmatpush1.bf16.msra.mxu0 0
    %947 = vmatprep.subr.bf16.mxu0 0
    %948 = vmatpush1.bf16.msra.mxu0 0
    %949 = vmatprep.subr.bf16.mxu0 0
    %950 = vmatpush1.bf16.msra.mxu0 0
    %951 = vmatprep.mubr.bf16.mxu0 0
    %952 = vmatmul.mubr.bf16.gmra.mrb[0].mxu0 %v777
    %v953 = vpop.f32.mrb[0].mxu0
    %v954 = vadd.f32 0.0, %v953
    %v955 = vpop.f32.mrb[0].mxu0
    %v956 = vpop.f32.mrb[0].mxu0
    %v957 = vadd.f32 0.0, %v956
    %v958 = vpop.f32.mrb[0].mxu0
    %959 = vmatprep.mubr.bf16.mxu0 0
    %960 = vmatmul.mubr.bf16.gmra.mrb[0].mxu0 %v780
    %v961 = vpop.f32.mrb[0].mxu0
    %v962 = vadd.f32 0.0, %v961
    %v963 = vpop.f32.mrb[0].mxu0
    %v964 = vpop.f32.mrb[0].mxu0
    %v965 = vadd.f32 0.0, %v964
    %v966 = vpop.f32.mrb[0].mxu0
    %967 = vmatprep.mubr.bf16.mxu0 0
    %968 = vmatmul.mubr.bf16.gmra.mrb[0].mxu0 %v783
    %v969 = vpop.f32.mrb[0].mxu0
    %v970 = vadd.f32 0.0, %v969
    %v971 = vpop.f32.mrb[0].mxu0
    %v972 = vpop.f32.mrb[0].mxu0
    %v973 = vadd.f32 0.0, %v972
    %v974 = vpop.f32.mrb[0].mxu0
    %975 = vmatprep.mubr.bf16.mxu0 0
    %976 = vmatmul.mubr.bf16.gmra.mrb[0].mxu0 %v786
    %v977 = vpop.f32.mrb[0].mxu0
    %v978 = vadd.f32 0.0, %v977
    %v979 = vpop.f32.mrb[0].mxu0
    %v980 = vpop.f32.mrb[0].mxu0
    %v981 = vadd.f32 0.0, %v980
    %v982 = vpop.f32.mrb[0].mxu0
    %983 = vmatprep.mubr.bf16.mxu0 0
    %984 = vmatmul.mubr.bf16.gmra.mrb[0].mxu0 %v789
    %v985 = vpop.f32.mrb[0].mxu0
    %v986 = vadd.f32 0.0, %v985
    %v987 = vpop.f32.mrb[0].mxu0
    %v988 = vpop.f32.mrb[0].mxu0
    %v989 = vadd.f32 0.0, %v988
    %v990 = vpop.f32.mrb[0].mxu0
    %991 = vmatprep.mubr.bf16.mxu0 0
    %992 = vmatmul.mubr.bf16.gmra.mrb[0].mxu0 %v792
    %v993 = vpop.f32.mrb[0].mxu0
    %v994 = vadd.f32 0.0, %v993
    %v995 = vpop.f32.mrb[0].mxu0
    %v996 = vpop.f32.mrb[0].mxu0
    %v997 = vadd.f32 0.0, %v996
    %v998 = vpop.f32.mrb[0].mxu0
    %999 = vdwg.mxu0
    %1004 = vrot.lane.b32.xlu0 %v970, 8
    %v1005 = vpop.permute.xlu0 %1004
    %1006 = vrot.lane.b32.xlu0 %v973, 8
    %v1007 = vpop.permute.xlu0 %1006
    %1008 = vrot.lane.b32.xlu0 %v978, 8
    %v1009 = vpop.permute.xlu0 %1008
    %1010 = vrot.lane.b32.xlu0 %v981, 8
    %v1011 = vpop.permute.xlu0 %1010
    %1020 = vrot.lane.b32.xlu0 %v986, 16
    %v1021 = vpop.permute.xlu0 %1020
    %1022 = vrot.lane.b32.xlu0 %v989, 16
    %v1023 = vpop.permute.xlu0 %1022
    %1024 = vrot.lane.b32.xlu0 %v994, 16
    %v1025 = vpop.permute.xlu0 %1024
    %1026 = vrot.lane.b32.xlu0 %v997, 16
    %v1027 = vpop.permute.xlu0 %1026
    %v1032 = vsel %vm263, %v954, %v1005
    %v1033 = vsel %vm263, %v957, %v1007
    %v1034 = vsel %vm263, %v962, %v1009
    %v1035 = vsel %vm263, %v965, %v1011
    %v1036 = vsel %vm281, %v1032, %v1021
    %v1037 = vsel %vm281, %v1033, %v1023
    %v1038 = vsel %vm281, %v1034, %v1025
    %v1039 = vsel %vm281, %v1035, %v1027
    %v1040 = vpack.c.bf16 %v912, %v911
    %v1041 = vpack.c.bf16 %v914, %v913
    %v1042 = vpack.c.bf16 %v1037, %v1036
    %v1043 = vpack.c.bf16 %v1039, %v1038
    %v1044 = vlaneseq
    %v1045 = vshrl.u32 %v1044, 7
    %v1046 = vsub.s32 0, %v1045
    %v1047 = vrot.slane %v728, %v1046
    %v1051 = vunpack.c.l.b16 %v725
    %v1052 = vunpack.c.l.b16 %v726
    %v1053 = vunpack.c.l.b16 %v727
    %v1054 = vpack.c.b16 %v1052, %v1051
    %v1055 = vpack.c.b16 %v1053, %v1053
    %vm1057 = vcmask 195584
    %v1059 = vsel %vm1057, %v1040, 0
    %v1062 = vsel %vm1057, %v1041, 0
    %v1065 = vsel %vm1057, %v1042, 0
    %v1068 = vsel %vm1057, %v1043, 0
    %v1071 = vsel %vm212, %v1055, 0
    %1073 = vmatprep.subr.bf16.mxu0 0
    %1074 = vmatpush1.bf16.msra.mxu0 %v1054
    %1075 = vmatprep.subr.bf16.mxu0 0
    %1076 = vmatpush1.bf16.msra.mxu0 %v1071
    %1077 = vmatprep.subr.bf16.mxu0 0
    %1078 = vmatpush1.bf16.msra.mxu0 0
    %1079 = vmatprep.subr.bf16.mxu0 0
    %1080 = vmatpush1.bf16.msra.mxu0 0
    %1081 = vmatprep.subr.bf16.mxu0 0
    %1082 = vmatpush1.bf16.msra.mxu0 0
    %1083 = vmatprep.subr.bf16.mxu0 0
    %1084 = vmatpush1.bf16.msra.mxu0 0
    %1085 = vmatprep.subr.bf16.mxu0 0
    %1086 = vmatpush1.bf16.msra.mxu0 0
    %1087 = vmatprep.subr.bf16.mxu0 0
    %1088 = vmatpush1.bf16.msra.mxu0 0
    %1089 = vmatprep.subr.bf16.mxu0 0
    %1090 = vmatpush1.bf16.msra.mxu0 0
    %1091 = vmatprep.subr.bf16.mxu0 0
    %1092 = vmatpush1.bf16.msra.mxu0 0
    %1093 = vmatprep.subr.bf16.mxu0 0
    %1094 = vmatpush1.bf16.msra.mxu0 0
    %1095 = vmatprep.subr.bf16.mxu0 0
    %1096 = vmatpush1.bf16.msra.mxu0 0
    %1097 = vmatprep.subr.bf16.mxu0 0
    %1098 = vmatpush1.bf16.msra.mxu0 0
    %1099 = vmatprep.subr.bf16.mxu0 0
    %1100 = vmatpush1.bf16.msra.mxu0 0
    %1101 = vmatprep.subr.bf16.mxu0 0
    %1102 = vmatpush1.bf16.msra.mxu0 0
    %1103 = vmatprep.subr.bf16.mxu0 0
    %1104 = vmatpush1.bf16.msra.mxu0 0
    %1105 = vmatprep.mubr.bf16.mxu0 0
    %1106 = vmatmul.mubr.bf16.gmra.mrb[0].mxu0 %v1059
    %v1107 = vpop.f32.mrb[0].mxu0
    %v1108 = vadd.f32 %v1047, %v1107
    %v1109 = vpop.f32.mrb[0].mxu0
    %v1110 = vpop.f32.mrb[0].mxu0
    %v1111 = vadd.f32 %v1047, %v1110
    %v1112 = vpop.f32.mrb[0].mxu0
    %1113 = vmatprep.mubr.bf16.mxu0 0
    %1114 = vmatmul.mubr.bf16.gmra.mrb[0].mxu0 %v1062
    %v1115 = vpop.f32.mrb[0].mxu0
    %v1116 = vadd.f32 %v1047, %v1115
    %v1117 = vpop.f32.mrb[0].mxu0
    %v1118 = vpop.f32.mrb[0].mxu0
    %v1119 = vadd.f32 %v1047, %v1118
    %v1120 = vpop.f32.mrb[0].mxu0
    %1121 = vmatprep.mubr.bf16.mxu0 0
    %1122 = vmatmul.mubr.bf16.gmra.mrb[0].mxu0 %v1065
    %v1123 = vpop.f32.mrb[0].mxu0
    %v1124 = vadd.f32 %v1047, %v1123
    %v1125 = vpop.f32.mrb[0].mxu0
    %v1126 = vpop.f32.mrb[0].mxu0
    %v1127 = vadd.f32 %v1047, %v1126
    %v1128 = vpop.f32.mrb[0].mxu0
    %1129 = vmatprep.mubr.bf16.mxu0 0
    %1130 = vmatmul.mubr.bf16.gmra.mrb[0].mxu0 %v1068
    %v1131 = vpop.f32.mrb[0].mxu0
    %v1132 = vadd.f32 %v1047, %v1131
    %v1133 = vpop.f32.mrb[0].mxu0
    %v1134 = vpop.f32.mrb[0].mxu0
    %v1135 = vadd.f32 %v1047, %v1134
    %v1136 = vpop.f32.mrb[0].mxu0
    %1137 = vdwg.mxu0
    %vm1138 = vcmp.ge.f32.partialorder %v1108, 0.0
    %vm1139 = vcmp.ge.f32.partialorder %v1111, 0.0
    %vm1140 = vcmp.ge.f32.partialorder %v1116, 0.0
    %vm1141 = vcmp.ge.f32.partialorder %v1119, 0.0
    %vm1142 = vcmp.ge.f32.partialorder %v1124, 0.0
    %vm1143 = vcmp.ge.f32.partialorder %v1127, 0.0
    %vm1144 = vcmp.ge.f32.partialorder %v1132, 0.0
    %vm1145 = vcmp.ge.f32.partialorder %v1135, 0.0
    %v1146 = vmul.f32 %v1108, 0.2
    %v1147 = vmul.f32 %v1111, 0.2
    %v1148 = vmul.f32 %v1116, 0.2
    %v1149 = vmul.f32 %v1119, 0.2
    %v1150 = vmul.f32 %v1124, 0.2
    %v1151 = vmul.f32 %v1127, 0.2
    %v1152 = vmul.f32 %v1132, 0.2
    %v1153 = vmul.f32 %v1135, 0.2
    %v1154 = vsel %vm1138, %v1108, %v1146
    %v1155 = vsel %vm1139, %v1111, %v1147
    %v1156 = vsel %vm1140, %v1116, %v1148
    %v1157 = vsel %vm1141, %v1119, %v1149
    %v1158 = vsel %vm1142, %v1124, %v1150
    %v1159 = vsel %vm1143, %v1127, %v1151
    %v1160 = vsel %vm1144, %v1132, %v1152
    %v1161 = vsel %vm1145, %v1135, %v1153
    %s1162 = scalar_lea.vmem %s1, 192
    %v1163 = vld [vmem:[%s1162] sm:$0xf]
    %v1164 = vld [vmem:[%s1162 + $0x4] sm:$0xf]
    %v1165 = vld [vmem:[%s1162 + $0x8] sm:$0xf]
    %v1166 = vld [vmem:[%s1162 + $0xc] sm:$0xf]
    %v1167 = vld [vmem:[%s1162 + $0x10] sm:$0xf]
    %v1168 = vld [vmem:[%s1162 + $0x14] sm:$0xf]
    %v1169 = vld [vmem:[%s2 + $0x2] sm:$0x1]
    %v1171 = vrot.slane %v1154, 1
    %v1176 = vrot.slane %v1154, 7
    %v1177 = vrot.slane %v1155, 7
    %v1178 = vsel %vm78, %v1176, %v1177
    %v1179 = vrot.slane %v1156, 7
    %v1180 = vsel %vm78, %v1177, %v1179
    %v1181 = vrot.slane %v1157, 7
    %v1182 = vsel %vm78, %v1179, %v1181
    %v1188 = vrot.slane %v1157, 5
    %v1190 = vsel %vm78, %v1171, %v1176
    %v1191 = vsel %vm78, %v1181, %v1188
    %v1194 = vrot.slane %v1190, 1
    %v1195 = vrot.slane %v1178, 1
    %v1196 = vsel %vm86, %v1194, %v1195
    %v1197 = vrot.slane %v1180, 1
    %v1198 = vsel %vm86, %v1195, %v1197
    %v1199 = vrot.slane %v1182, 1
    %v1200 = vsel %vm86, %v1197, %v1199
    %v1201 = vrot.slane %v1191, 1
    %v1202 = vsel %vm86, %v1199, %v1201
    %1203 = vrot.lane.b32.xlu0 %v1196, 16
    %v1204 = vpop.permute.xlu0 %1203
    %1205 = vrot.lane.b32.xlu0 %v1198, 16
    %v1206 = vpop.permute.xlu0 %1205
    %1207 = vrot.lane.b32.xlu0 %v1200, 16
    %v1208 = vpop.permute.xlu0 %1207
    %1209 = vrot.lane.b32.xlu0 %v1202, 16
    %v1210 = vpop.permute.xlu0 %1209
    %v1215 = vrot.slane %v1190, 2
    %v1216 = vrot.slane %v1178, 2
    %v1217 = vsel %vm128, %v1215, %v1216
    %v1218 = vrot.slane %v1180, 2
    %v1219 = vsel %vm128, %v1216, %v1218
    %v1220 = vrot.slane %v1182, 2
    %v1221 = vsel %vm128, %v1218, %v1220
    %v1222 = vrot.slane %v1191, 2
    %v1223 = vsel %vm128, %v1220, %v1222
    %1224 = vrot.lane.b32.xlu0 %v1217, 32
    %v1225 = vpop.permute.xlu0 %1224
    %1226 = vrot.lane.b32.xlu0 %v1219, 32
    %v1227 = vpop.permute.xlu0 %1226
    %1228 = vrot.lane.b32.xlu0 %v1221, 32
    %v1229 = vpop.permute.xlu0 %1228
    %1230 = vrot.lane.b32.xlu0 %v1223, 32
    %v1231 = vpop.permute.xlu0 %1230
    %v1236 = vsel %vm281, %v1190, %v1204
    %v1237 = vsel %vm281, %v1178, %v1206
    %v1238 = vsel %vm281, %v1180, %v1208
    %v1239 = vsel %vm281, %v1182, %v1210
    %vm1240 = vcmask 261120
    %v1241 = vsel %vm1240, %v1236, %v1225
    %v1242 = vsel %vm1240, %v1237, %v1227
    %v1243 = vsel %vm1240, %v1238, %v1229
    %v1244 = vsel %vm1240, %v1239, %v1231
    %v1246 = vrot.slane %v1158, 1
    %v1251 = vrot.slane %v1158, 7
    %v1252 = vrot.slane %v1159, 7
    %v1253 = vsel %vm78, %v1251, %v1252
    %v1254 = vrot.slane %v1160, 7
    %v1255 = vsel %vm78, %v1252, %v1254
    %v1256 = vrot.slane %v1161, 7
    %v1257 = vsel %vm78, %v1254, %v1256
    %v1263 = vrot.slane %v1161, 5
    %v1265 = vsel %vm78, %v1246, %v1251
    %v1266 = vsel %vm78, %v1256, %v1263
    %v1269 = vrot.slane %v1265, 1
    %v1270 = vrot.slane %v1253, 1
    %v1271 = vsel %vm86, %v1269, %v1270
    %v1272 = vrot.slane %v1255, 1
    %v1273 = vsel %vm86, %v1270, %v1272
    %v1274 = vrot.slane %v1257, 1
    %v1275 = vsel %vm86, %v1272, %v1274
    %v1276 = vrot.slane %v1266, 1
    %v1277 = vsel %vm86, %v1274, %v1276
    %1278 = vrot.lane.b32.xlu0 %v1271, 16
    %v1279 = vpop.permute.xlu0 %1278
    %1280 = vrot.lane.b32.xlu0 %v1273, 16
    %v1281 = vpop.permute.xlu0 %1280
    %1282 = vrot.lane.b32.xlu0 %v1275, 16
    %v1283 = vpop.permute.xlu0 %1282
    %1284 = vrot.lane.b32.xlu0 %v1277, 16
    %v1285 = vpop.permute.xlu0 %1284
    %v1290 = vrot.slane %v1265, 2
    %v1291 = vrot.slane %v1253, 2
    %v1292 = vsel %vm128, %v1290, %v1291
    %v1293 = vrot.slane %v1255, 2
    %v1294 = vsel %vm128, %v1291, %v1293
    %v1295 = vrot.slane %v1257, 2
    %v1296 = vsel %vm128, %v1293, %v1295
    %v1297 = vrot.slane %v1266, 2
    %v1298 = vsel %vm128, %v1295, %v1297
    %1299 = vrot.lane.b32.xlu0 %v1292, 32
    %v1300 = vpop.permute.xlu0 %1299
    %1301 = vrot.lane.b32.xlu0 %v1294, 32
    %v1302 = vpop.permute.xlu0 %1301
    %1303 = vrot.lane.b32.xlu0 %v1296, 32
    %v1304 = vpop.permute.xlu0 %1303
    %1305 = vrot.lane.b32.xlu0 %v1298, 32
    %v1306 = vpop.permute.xlu0 %1305
    %v1311 = vsel %vm281, %v1265, %v1279
    %v1312 = vsel %vm281, %v1253, %v1281
    %v1313 = vsel %vm281, %v1255, %v1283
    %v1314 = vsel %vm281, %v1257, %v1285
    %v1315 = vsel %vm1240, %v1311, %v1300
    %v1316 = vsel %vm1240, %v1312, %v1302
    %v1317 = vsel %vm1240, %v1313, %v1304
    %v1318 = vsel %vm1240, %v1314, %v1306
    %v1319 = vpack.c.bf16 %v1242, %v1241
    %v1320 = vpack.c.bf16 %v1244, %v1243
    %v1321 = vpack.c.bf16 %v1316, %v1315
    %v1322 = vpack.c.bf16 %v1318, %v1317
    %v1323 = vlaneseq
    %v1324 = vshrl.u32 %v1323, 7
    %v1325 = vsub.s32 0, %v1324
    %v1326 = vrot.slane %v1169, %v1325
    %v1333 = vunpack.c.l.b16 %v1163
    %v1334 = vunpack.c.l.b16 %v1164
    %v1335 = vunpack.c.l.b16 %v1165
    %v1336 = vunpack.c.l.b16 %v1166
    %v1337 = vunpack.c.l.b16 %v1167
    %v1338 = vunpack.c.l.b16 %v1168
    %v1339 = vpack.c.b16 %v1334, %v1333
    %v1340 = vpack.c.b16 %v1336, %v1335
    %v1341 = vpack.c.b16 %v1338, %v1337
    %vm1345 = vcmask 392192
    %v1347 = vsel %vm1345, %v1319, 0
    %v1350 = vsel %vm1345, %v1320, 0
    %v1353 = vsel %vm1345, %v1321, 0
    %v1356 = vsel %vm1345, %v1322, 0
    %1358 = vmatprep.subr.bf16.mxu0 0
    %1359 = vmatpush1.bf16.msra.mxu0 %v1339
    %1360 = vmatprep.subr.bf16.mxu0 0
    %1361 = vmatpush1.bf16.msra.mxu0 %v1340
    %1362 = vmatprep.subr.bf16.mxu0 0
    %1363 = vmatpush1.bf16.msra.mxu0 %v1341
    %1364 = vmatprep.subr.bf16.mxu0 0
    %1365 = vmatpush1.bf16.msra.mxu0 0
    %1366 = vmatprep.subr.bf16.mxu0 0
    %1367 = vmatpush1.bf16.msra.mxu0 0
    %1368 = vmatprep.subr.bf16.mxu0 0
    %1369 = vmatpush1.bf16.msra.mxu0 0
    %1370 = vmatprep.subr.bf16.mxu0 0
    %1371 = vmatpush1.bf16.msra.mxu0 0
    %1372 = vmatprep.subr.bf16.mxu0 0
    %1373 = vmatpush1.bf16.msra.mxu0 0
    %1374 = vmatprep.subr.bf16.mxu0 0
    %1375 = vmatpush1.bf16.msra.mxu0 0
    %1376 = vmatprep.subr.bf16.mxu0 0
    %1377 = vmatpush1.bf16.msra.mxu0 0
    %1378 = vmatprep.subr.bf16.mxu0 0
    %1379 = vmatpush1.bf16.msra.mxu0 0
    %1380 = vmatprep.subr.bf16.mxu0 0
    %1381 = vmatpush1.bf16.msra.mxu0 0
    %1382 = vmatprep.subr.bf16.mxu0 0
    %1383 = vmatpush1.bf16.msra.mxu0 0
    %1384 = vmatprep.subr.bf16.mxu0 0
    %1385 = vmatpush1.bf16.msra.mxu0 0
    %1386 = vmatprep.subr.bf16.mxu0 0
    %1387 = vmatpush1.bf16.msra.mxu0 0
    %1388 = vmatprep.subr.bf16.mxu0 0
    %1389 = vmatpush1.bf16.msra.mxu0 0
    %1390 = vmatprep.mubr.bf16.mxu0 0
    %1391 = vmatmul.mubr.bf16.gmra.mrb[0].mxu0 %v1347
    %v1392 = vpop.f32.mrb[0].mxu0
    %v1393 = vadd.f32 %v1326, %v1392
    %v1394 = vpop.f32.mrb[0].mxu0
    %v1395 = vpop.f32.mrb[0].mxu0
    %v1396 = vadd.f32 %v1326, %v1395
    %v1397 = vpop.f32.mrb[0].mxu0
    %1398 = vmatprep.mubr.bf16.mxu0 0
    %1399 = vmatmul.mubr.bf16.gmra.mrb[0].mxu0 %v1350
    %v1400 = vpop.f32.mrb[0].mxu0
    %v1401 = vadd.f32 %v1326, %v1400
    %v1402 = vpop.f32.mrb[0].mxu0
    %v1403 = vpop.f32.mrb[0].mxu0
    %v1404 = vadd.f32 %v1326, %v1403
    %v1405 = vpop.f32.mrb[0].mxu0
    %1406 = vmatprep.mubr.bf16.mxu0 0
    %1407 = vmatmul.mubr.bf16.gmra.mrb[0].mxu0 %v1353
    %v1408 = vpop.f32.mrb[0].mxu0
    %v1409 = vadd.f32 %v1326, %v1408
    %v1410 = vpop.f32.mrb[0].mxu0
    %v1411 = vpop.f32.mrb[0].mxu0
    %v1412 = vadd.f32 %v1326, %v1411
    %v1413 = vpop.f32.mrb[0].mxu0
    %1414 = vmatprep.mubr.bf16.mxu0 0
    %1415 = vmatmul.mubr.bf16.gmra.mrb[0].mxu0 %v1356
    %v1416 = vpop.f32.mrb[0].mxu0
    %v1417 = vadd.f32 %v1326, %v1416
    %v1418 = vpop.f32.mrb[0].mxu0
    %v1419 = vpop.f32.mrb[0].mxu0
    %v1420 = vadd.f32 %v1326, %v1419
    %v1421 = vpop.f32.mrb[0].mxu0
    %1422 = vdwg.mxu0
    %vm1423 = vcmp.ge.f32.partialorder %v1393, 0.0
    %vm1424 = vcmp.ge.f32.partialorder %v1396, 0.0
    %vm1425 = vcmp.ge.f32.partialorder %v1401, 0.0
    %vm1426 = vcmp.ge.f32.partialorder %v1404, 0.0
    %vm1427 = vcmp.ge.f32.partialorder %v1409, 0.0
    %vm1428 = vcmp.ge.f32.partialorder %v1412, 0.0
    %vm1429 = vcmp.ge.f32.partialorder %v1417, 0.0
    %vm1430 = vcmp.ge.f32.partialorder %v1420, 0.0
    %v1431 = vmul.f32 %v1393, 0.2
    %v1432 = vmul.f32 %v1396, 0.2
    %v1433 = vmul.f32 %v1401, 0.2
    %v1434 = vmul.f32 %v1404, 0.2
    %v1435 = vmul.f32 %v1409, 0.2
    %v1436 = vmul.f32 %v1412, 0.2
    %v1437 = vmul.f32 %v1417, 0.2
    %v1438 = vmul.f32 %v1420, 0.2
    %v1439 = vsel %vm1423, %v1393, %v1431
    %v1440 = vsel %vm1424, %v1396, %v1432
    %v1441 = vsel %vm1425, %v1401, %v1433
    %v1442 = vsel %vm1426, %v1404, %v1434
    %v1443 = vsel %vm1427, %v1409, %v1435
    %v1444 = vsel %vm1428, %v1412, %v1436
    %v1445 = vsel %vm1429, %v1417, %v1437
    %v1446 = vsel %vm1430, %v1420, %v1438
    %s1447 = scalar_lea.vmem %s1, 288
    %v1448 = vld [vmem:[%s1447] sm:$0xf]
    %v1449 = vld [vmem:[%s1447 + $0x4] sm:$0xf]
    %v1450 = vld [vmem:[%s2 + $0x3] sm:$0x1]
    %v1451 = vpack.c.bf16 %v1440, %v1439
    %v1452 = vpack.c.bf16 %v1442, %v1441
    %v1453 = vpack.c.bf16 %v1444, %v1443
    %v1454 = vpack.c.bf16 %v1446, %v1445
    %v1455 = vlaneseq
    %v1456 = vshrl.u32 %v1455, 7
    %v1457 = vsub.s32 0, %v1456
    %v1458 = vrot.slane %v1450, %v1457
    %v1461 = vunpack.c.l.b16 %v1448
    %v1462 = vunpack.c.l.b16 %v1449
    %v1463 = vpack.c.b16 %v1462, %v1461
    %v1466 = vsel %vm281, %v1451, 0
    %v1469 = vsel %vm281, %v1452, 0
    %v1472 = vsel %vm281, %v1453, 0
    %v1475 = vsel %vm281, %v1454, 0
    %1477 = vmatprep.subr.bf16.mxu0 0
    %1478 = vmatpush1.bf16.msra.mxu0 %v1463
    %1479 = vmatprep.subr.bf16.mxu0 0
    %1480 = vmatpush1.bf16.msra.mxu0 0
    %1481 = vmatprep.subr.bf16.mxu0 0
    %1482 = vmatpush1.bf16.msra.mxu0 0
    %1483 = vmatprep.subr.bf16.mxu0 0
    %1484 = vmatpush1.bf16.msra.mxu0 0
    %1485 = vmatprep.subr.bf16.mxu0 0
    %1486 = vmatpush1.bf16.msra.mxu0 0
    %1487 = vmatprep.subr.bf16.mxu0 0
    %1488 = vmatpush1.bf16.msra.mxu0 0
    %1489 = vmatprep.subr.bf16.mxu0 0
    %1490 = vmatpush1.bf16.msra.mxu0 0
    %1491 = vmatprep.subr.bf16.mxu0 0
    %1492 = vmatpush1.bf16.msra.mxu0 0
    %1493 = vmatprep.subr.bf16.mxu0 0
    %1494 = vmatpush1.bf16.msra.mxu0 0
    %1495 = vmatprep.subr.bf16.mxu0 0
    %1496 = vmatpush1.bf16.msra.mxu0 0
    %1497 = vmatprep.subr.bf16.mxu0 0
    %1498 = vmatpush1.bf16.msra.mxu0 0
    %1499 = vmatprep.subr.bf16.mxu0 0
    %1500 = vmatpush1.bf16.msra.mxu0 0
    %1501 = vmatprep.subr.bf16.mxu0 0
    %1502 = vmatpush1.bf16.msra.mxu0 0
    %1503 = vmatprep.subr.bf16.mxu0 0
    %1504 = vmatpush1.bf16.msra.mxu0 0
    %1505 = vmatprep.subr.bf16.mxu0 0
    %1506 = vmatpush1.bf16.msra.mxu0 0
    %1507 = vmatprep.subr.bf16.mxu0 0
    %1508 = vmatpush1.bf16.msra.mxu0 0
    %1509 = vmatprep.mubr.bf16.mxu0 0
    %1510 = vmatmul.mubr.bf16.gmra.mrb[0].mxu0 %v1466
    %v1511 = vpop.f32.mrb[0].mxu0
    %v1512 = vadd.f32 %v1458, %v1511
    %v1513 = vpop.f32.mrb[0].mxu0
    %v1514 = vpop.f32.mrb[0].mxu0
    %v1515 = vadd.f32 %v1458, %v1514
    %v1516 = vpop.f32.mrb[0].mxu0
    %1517 = vmatprep.mubr.bf16.mxu0 0
    %1518 = vmatmul.mubr.bf16.gmra.mrb[0].mxu0 %v1469
    %v1519 = vpop.f32.mrb[0].mxu0
    %v1520 = vadd.f32 %v1458, %v1519
    %v1521 = vpop.f32.mrb[0].mxu0
    %v1522 = vpop.f32.mrb[0].mxu0
    %v1523 = vadd.f32 %v1458, %v1522
    %v1524 = vpop.f32.mrb[0].mxu0
    %1525 = vmatprep.mubr.bf16.mxu0 0
    %1526 = vmatmul.mubr.bf16.gmra.mrb[0].mxu0 %v1472
    %v1527 = vpop.f32.mrb[0].mxu0
    %v1528 = vadd.f32 %v1458, %v1527
    %v1529 = vpop.f32.mrb[0].mxu0
    %v1530 = vpop.f32.mrb[0].mxu0
    %v1531 = vadd.f32 %v1458, %v1530
    %v1532 = vpop.f32.mrb[0].mxu0
    %1533 = vmatprep.mubr.bf16.mxu0 0
    %1534 = vmatmul.mubr.bf16.gmra.mrb[0].mxu0 %v1475
    %v1535 = vpop.f32.mrb[0].mxu0
    %v1536 = vadd.f32 %v1458, %v1535
    %v1537 = vpop.f32.mrb[0].mxu0
    %v1538 = vpop.f32.mrb[0].mxu0
    %v1539 = vadd.f32 %v1458, %v1538
    %v1540 = vpop.f32.mrb[0].mxu0
    %1541 = vdwg.mxu0
    %v1542 = vadd.f32 %v1512, %v1154
    %v1543 = vadd.f32 %v1515, %v1155
    %v1544 = vadd.f32 %v1520, %v1156
    %v1545 = vadd.f32 %v1523, %v1157
    %v1546 = vadd.f32 %v1528, %v1158
    %v1547 = vadd.f32 %v1531, %v1159
    %v1548 = vadd.f32 %v1536, %v1160
    %v1549 = vadd.f32 %v1539, %v1161
    %s1550 = scalar_lea.vmem %s1, 384
    %v1551 = vld [vmem:[%s1550] sm:$0xf]
    %v1552 = vld [vmem:[%s1550 + $0x4] sm:$0xf]
    %v1553 = vld [vmem:[%s1550 + $0x8] sm:$0xf]
    %v1554 = vld [vmem:[%s1550 + $0xc] sm:$0xf]
    %v1555 = vld [vmem:[%s1550 + $0x10] sm:$0xf]
    %v1556 = vld [vmem:[%s1550 + $0x14] sm:$0xf]
    %v1557 = vld [vmem:[%s2 + $0x4] sm:$0x1]
    %v1559 = vrot.slane %v1542, 3
    %v1561 = vrot.slane %v1542, 1
    %v1563 = vrot.slane %v1542, 7
    %v1568 = vrot.slane %v1542, 5
    %v1569 = vrot.slane %v1543, 5
    %v1570 = vsel %vm82, %v1568, %v1569
    %v1571 = vrot.slane %v1544, 5
    %v1572 = vsel %vm82, %v1569, %v1571
    %v1573 = vrot.slane %v1545, 5
    %v1574 = vsel %vm82, %v1571, %v1573
    %v1580 = vrot.slane %v1545, 3
    %v1582 = vrot.slane %v1545, 1
    %v1584 = vrot.slane %v1545, 7
    %v1586 = vsel %vm78, %v1559, %v1561
    %v1587 = vsel %vm49, %v1586, %v1563
    %v1588 = vsel %vm82, %v1587, %v1568
    %v1589 = vsel %vm82, %v1573, %v1580
    %v1590 = vsel %vm212, %v1589, %v1582
    %v1591 = vsel %vm170, %v1590, %v1584
    %v1594 = vrot.slane %v1588, 3
    %v1595 = vrot.slane %v1570, 3
    %v1596 = vsel %vm170, %v1594, %v1595
    %v1597 = vrot.slane %v1572, 3
    %v1598 = vsel %vm170, %v1595, %v1597
    %v1599 = vrot.slane %v1574, 3
    %v1600 = vsel %vm170, %v1597, %v1599
    %v1601 = vrot.slane %v1591, 3
    %v1602 = vsel %vm170, %v1599, %v1601
    %1603 = vrot.lane.b32.xlu0 %v1596, 16
    %v1604 = vpop.permute.xlu0 %1603
    %1605 = vrot.lane.b32.xlu0 %v1598, 16
    %v1606 = vpop.permute.xlu0 %1605
    %1607 = vrot.lane.b32.xlu0 %v1600, 16
    %v1608 = vpop.permute.xlu0 %1607
    %1609 = vrot.lane.b32.xlu0 %v1602, 16
    %v1610 = vpop.permute.xlu0 %1609
    %v1615 = vrot.slane %v1588, 6
    %v1616 = vrot.slane %v1570, 6
    %v1617 = vsel %vm49, %v1615, %v1616
    %v1618 = vrot.slane %v1572, 6
    %v1619 = vsel %vm49, %v1616, %v1618
    %v1620 = vrot.slane %v1574, 6
    %v1621 = vsel %vm49, %v1618, %v1620
    %v1622 = vrot.slane %v1591, 6
    %v1623 = vsel %vm49, %v1620, %v1622
    %1624 = vrot.lane.b32.xlu0 %v1617, 32
    %v1625 = vpop.permute.xlu0 %1624
    %1626 = vrot.lane.b32.xlu0 %v1619, 32
    %v1627 = vpop.permute.xlu0 %1626
    %1628 = vrot.lane.b32.xlu0 %v1621, 32
    %v1629 = vpop.permute.xlu0 %1628
    %1630 = vrot.lane.b32.xlu0 %v1623, 32
    %v1631 = vpop.permute.xlu0 %1630
    %v1636 = vsel %vm281, %v1588, %v1604
    %v1637 = vsel %vm281, %v1570, %v1606
    %v1638 = vsel %vm281, %v1572, %v1608
    %v1639 = vsel %vm281, %v1574, %v1610
    %v1640 = vsel %vm1240, %v1636, %v1625
    %v1641 = vsel %vm1240, %v1637, %v1627
    %v1642 = vsel %vm1240, %v1638, %v1629
    %v1643 = vsel %vm1240, %v1639, %v1631
    %v1645 = vrot.slane %v1546, 3
    %v1647 = vrot.slane %v1546, 1
    %v1649 = vrot.slane %v1546, 7
    %v1654 = vrot.slane %v1546, 5
    %v1655 = vrot.slane %v1547, 5
    %v1656 = vsel %vm82, %v1654, %v1655
    %v1657 = vrot.slane %v1548, 5
    %v1658 = vsel %vm82, %v1655, %v1657
    %v1659 = vrot.slane %v1549, 5
    %v1660 = vsel %vm82, %v1657, %v1659
    %v1666 = vrot.slane %v1549, 3
    %v1668 = vrot.slane %v1549, 1
    %v1670 = vrot.slane %v1549, 7
    %v1672 = vsel %vm78, %v1645, %v1647
    %v1673 = vsel %vm49, %v1672, %v1649
    %v1674 = vsel %vm82, %v1673, %v1654
    %v1675 = vsel %vm82, %v1659, %v1666
    %v1676 = vsel %vm212, %v1675, %v1668
    %v1677 = vsel %vm170, %v1676, %v1670
    %v1680 = vrot.slane %v1674, 3
    %v1681 = vrot.slane %v1656, 3
    %v1682 = vsel %vm170, %v1680, %v1681
    %v1683 = vrot.slane %v1658, 3
    %v1684 = vsel %vm170, %v1681, %v1683
    %v1685 = vrot.slane %v1660, 3
    %v1686 = vsel %vm170, %v1683, %v1685
    %v1687 = vrot.slane %v1677, 3
    %v1688 = vsel %vm170, %v1685, %v1687
    %1689 = vrot.lane.b32.xlu0 %v1682, 16
    %v1690 = vpop.permute.xlu0 %1689
    %1691 = vrot.lane.b32.xlu0 %v1684, 16
    %v1692 = vpop.permute.xlu0 %1691
    %1693 = vrot.lane.b32.xlu0 %v1686, 16
    %v1694 = vpop.permute.xlu0 %1693
    %1695 = vrot.lane.b32.xlu0 %v1688, 16
    %v1696 = vpop.permute.xlu0 %1695
    %v1701 = vrot.slane %v1674, 6
    %v1702 = vrot.slane %v1656, 6
    %v1703 = vsel %vm49, %v1701, %v1702
    %v1704 = vrot.slane %v1658, 6
    %v1705 = vsel %vm49, %v1702, %v1704
    %v1706 = vrot.slane %v1660, 6
    %v1707 = vsel %vm49, %v1704, %v1706
    %v1708 = vrot.slane %v1677, 6
    %v1709 = vsel %vm49, %v1706, %v1708
    %1710 = vrot.lane.b32.xlu0 %v1703, 32
    %v1711 = vpop.permute.xlu0 %1710
    %1712 = vrot.lane.b32.xlu0 %v1705, 32
    %v1713 = vpop.permute.xlu0 %1712
    %1714 = vrot.lane.b32.xlu0 %v1707, 32
    %v1715 = vpop.permute.xlu0 %1714
    %1716 = vrot.lane.b32.xlu0 %v1709, 32
    %v1717 = vpop.permute.xlu0 %1716
    %v1722 = vsel %vm281, %v1674, %v1690
    %v1723 = vsel %vm281, %v1656, %v1692
    %v1724 = vsel %vm281, %v1658, %v1694
    %v1725 = vsel %vm281, %v1660, %v1696
    %v1726 = vsel %vm1240, %v1722, %v1711
    %v1727 = vsel %vm1240, %v1723, %v1713
    %v1728 = vsel %vm1240, %v1724, %v1715
    %v1729 = vsel %vm1240, %v1725, %v1717
    %v1730 = vpack.c.bf16 %v1641, %v1640
    %v1731 = vpack.c.bf16 %v1643, %v1642
    %v1732 = vpack.c.bf16 %v1727, %v1726
    %v1733 = vpack.c.bf16 %v1729, %v1728
    %v1734 = vlaneseq
    %v1735 = vshrl.u32 %v1734, 7
    %v1736 = vsub.s32 0, %v1735
    %v1737 = vrot.slane %v1557, %v1736
    %v1744 = vunpack.c.l.b16 %v1551
    %v1745 = vunpack.c.l.b16 %v1552
    %v1746 = vunpack.c.l.b16 %v1553
    %v1747 = vunpack.c.l.b16 %v1554
    %v1748 = vunpack.c.l.b16 %v1555
    %v1749 = vunpack.c.l.b16 %v1556
    %v1750 = vpack.c.b16 %v1745, %v1744
    %v1751 = vpack.c.b16 %v1747, %v1746
    %v1752 = vpack.c.b16 %v1749, %v1748
    %v1757 = vsel %vm1345, %v1730, 0
    %v1760 = vsel %vm1345, %v1731, 0
    %v1763 = vsel %vm1345, %v1732, 0
    %v1766 = vsel %vm1345, %v1733, 0
    %1768 = vmatprep.subr.bf16.mxu0 0
    %1769 = vmatpush1.bf16.msra.mxu0 %v1750
    %1770 = vmatprep.subr.bf16.mxu0 0
    %1771 = vmatpush1.bf16.msra.mxu0 %v1751
    %1772 = vmatprep.subr.bf16.mxu0 0
    %1773 = vmatpush1.bf16.msra.mxu0 %v1752
    %1774 = vmatprep.subr.bf16.mxu0 0
    %1775 = vmatpush1.bf16.msra.mxu0 0
    %1776 = vmatprep.subr.bf16.mxu0 0
    %1777 = vmatpush1.bf16.msra.mxu0 0
    %1778 = vmatprep.subr.bf16.mxu0 0
    %1779 = vmatpush1.bf16.msra.mxu0 0
    %1780 = vmatprep.subr.bf16.mxu0 0
    %1781 = vmatpush1.bf16.msra.mxu0 0
    %1782 = vmatprep.subr.bf16.mxu0 0
    %1783 = vmatpush1.bf16.msra.mxu0 0
    %1784 = vmatprep.subr.bf16.mxu0 0
    %1785 = vmatpush1.bf16.msra.mxu0 0
    %1786 = vmatprep.subr.bf16.mxu0 0
    %1787 = vmatpush1.bf16.msra.mxu0 0
    %1788 = vmatprep.subr.bf16.mxu0 0
    %1789 = vmatpush1.bf16.msra.mxu0 0
    %1790 = vmatprep.subr.bf16.mxu0 0
    %1791 = vmatpush1.bf16.msra.mxu0 0
    %1792 = vmatprep.subr.bf16.mxu0 0
    %1793 = vmatpush1.bf16.msra.mxu0 0
    %1794 = vmatprep.subr.bf16.mxu0 0
    %1795 = vmatpush1.bf16.msra.mxu0 0
    %1796 = vmatprep.subr.bf16.mxu0 0
    %1797 = vmatpush1.bf16.msra.mxu0 0
    %1798 = vmatprep.subr.bf16.mxu0 0
    %1799 = vmatpush1.bf16.msra.mxu0 0
    %1800 = vmatprep.mubr.bf16.mxu0 0
    %1801 = vmatmul.mubr.bf16.gmra.mrb[0].mxu0 %v1757
    %v1802 = vpop.f32.mrb[0].mxu0
    %v1803 = vadd.f32 %v1737, %v1802
    %v1804 = vpop.f32.mrb[0].mxu0
    %v1805 = vpop.f32.mrb[0].mxu0
    %v1806 = vadd.f32 %v1737, %v1805
    %v1807 = vpop.f32.mrb[0].mxu0
    %1808 = vmatprep.mubr.bf16.mxu0 0
    %1809 = vmatmul.mubr.bf16.gmra.mrb[0].mxu0 %v1760
    %v1810 = vpop.f32.mrb[0].mxu0
    %v1811 = vadd.f32 %v1737, %v1810
    %v1812 = vpop.f32.mrb[0].mxu0
    %v1813 = vpop.f32.mrb[0].mxu0
    %v1814 = vadd.f32 %v1737, %v1813
    %v1815 = vpop.f32.mrb[0].mxu0
    %1816 = vmatprep.mubr.bf16.mxu0 0
    %1817 = vmatmul.mubr.bf16.gmra.mrb[0].mxu0 %v1763
    %v1818 = vpop.f32.mrb[0].mxu0
    %v1819 = vadd.f32 %v1737, %v1818
    %v1820 = vpop.f32.mrb[0].mxu0
    %v1821 = vpop.f32.mrb[0].mxu0
    %v1822 = vadd.f32 %v1737, %v1821
    %v1823 = vpop.f32.mrb[0].mxu0
    %1824 = vmatprep.mubr.bf16.mxu0 0
    %1825 = vmatmul.mubr.bf16.gmra.mrb[0].mxu0 %v1766
    %v1826 = vpop.f32.mrb[0].mxu0
    %v1827 = vadd.f32 %v1737, %v1826
    %v1828 = vpop.f32.mrb[0].mxu0
    %v1829 = vpop.f32.mrb[0].mxu0
    %v1830 = vadd.f32 %v1737, %v1829
    %v1831 = vpop.f32.mrb[0].mxu0
    %1832 = vdwg.mxu0
    %vm1833 = vcmp.ge.f32.partialorder %v1803, 0.0
    %vm1834 = vcmp.ge.f32.partialorder %v1806, 0.0
    %vm1835 = vcmp.ge.f32.partialorder %v1811, 0.0
    %vm1836 = vcmp.ge.f32.partialorder %v1814, 0.0
    %vm1837 = vcmp.ge.f32.partialorder %v1819, 0.0
    %vm1838 = vcmp.ge.f32.partialorder %v1822, 0.0
    %vm1839 = vcmp.ge.f32.partialorder %v1827, 0.0
    %vm1840 = vcmp.ge.f32.partialorder %v1830, 0.0
    %v1841 = vmul.f32 %v1803, 0.2
    %v1842 = vmul.f32 %v1806, 0.2
    %v1843 = vmul.f32 %v1811, 0.2
    %v1844 = vmul.f32 %v1814, 0.2
    %v1845 = vmul.f32 %v1819, 0.2
    %v1846 = vmul.f32 %v1822, 0.2
    %v1847 = vmul.f32 %v1827, 0.2
    %v1848 = vmul.f32 %v1830, 0.2
    %v1849 = vsel %vm1833, %v1803, %v1841
    %v1850 = vsel %vm1834, %v1806, %v1842
    %v1851 = vsel %vm1835, %v1811, %v1843
    %v1852 = vsel %vm1836, %v1814, %v1844
    %v1853 = vsel %vm1837, %v1819, %v1845
    %v1854 = vsel %vm1838, %v1822, %v1846
    %v1855 = vsel %vm1839, %v1827, %v1847
    %v1856 = vsel %vm1840, %v1830, %v1848
    %s1857 = scalar_lea.vmem %s1, 480
    %v1858 = vld [vmem:[%s1857] sm:$0xf]
    %v1859 = vld [vmem:[%s1857 + $0x4] sm:$0xf]
    %v1860 = vld [vmem:[%s2 + $0x5] sm:$0x1]
    %v1861 = vpack.c.bf16 %v1850, %v1849
    %v1862 = vpack.c.bf16 %v1852, %v1851
    %v1863 = vpack.c.bf16 %v1854, %v1853
    %v1864 = vpack.c.bf16 %v1856, %v1855
    %v1865 = vlaneseq
    %v1866 = vshrl.u32 %v1865, 7
    %v1867 = vsub.s32 0, %v1866
    %v1868 = vrot.slane %v1860, %v1867
    %v1871 = vunpack.c.l.b16 %v1858
    %v1872 = vunpack.c.l.b16 %v1859
    %v1873 = vpack.c.b16 %v1872, %v1871
    %v1876 = vsel %vm281, %v1861, 0
    %v1879 = vsel %vm281, %v1862, 0
    %v1882 = vsel %vm281, %v1863, 0
    %v1885 = vsel %vm281, %v1864, 0
    %1887 = vmatprep.subr.bf16.mxu0 0
    %1888 = vmatpush1.bf16.msra.mxu0 %v1873
    %1889 = vmatprep.subr.bf16.mxu0 0
    %1890 = vmatpush1.bf16.msra.mxu0 0
    %1891 = vmatprep.subr.bf16.mxu0 0
    %1892 = vmatpush1.bf16.msra.mxu0 0
    %1893 = vmatprep.subr.bf16.mxu0 0
    %1894 = vmatpush1.bf16.msra.mxu0 0
    %1895 = vmatprep.subr.bf16.mxu0 0
    %1896 = vmatpush1.bf16.msra.mxu0 0
    %1897 = vmatprep.subr.bf16.mxu0 0
    %1898 = vmatpush1.bf16.msra.mxu0 0
    %1899 = vmatprep.subr.bf16.mxu0 0
    %1900 = vmatpush1.bf16.msra.mxu0 0
    %1901 = vmatprep.subr.bf16.mxu0 0
    %1902 = vmatpush1.bf16.msra.mxu0 0
    %1903 = vmatprep.subr.bf16.mxu0 0
    %1904 = vmatpush1.bf16.msra.mxu0 0
    %1905 = vmatprep.subr.bf16.mxu0 0
    %1906 = vmatpush1.bf16.msra.mxu0 0
    %1907 = vmatprep.subr.bf16.mxu0 0
    %1908 = vmatpush1.bf16.msra.mxu0 0
    %1909 = vmatprep.subr.bf16.mxu0 0
    %1910 = vmatpush1.bf16.msra.mxu0 0
    %1911 = vmatprep.subr.bf16.mxu0 0
    %1912 = vmatpush1.bf16.msra.mxu0 0
    %1913 = vmatprep.subr.bf16.mxu0 0
    %1914 = vmatpush1.bf16.msra.mxu0 0
    %1915 = vmatprep.subr.bf16.mxu0 0
    %1916 = vmatpush1.bf16.msra.mxu0 0
    %1917 = vmatprep.subr.bf16.mxu0 0
    %1918 = vmatpush1.bf16.msra.mxu0 0
    %1919 = vmatprep.mubr.bf16.mxu0 0
    %1920 = vmatmul.mubr.bf16.gmra.mrb[0].mxu0 %v1876
    %v1921 = vpop.f32.mrb[0].mxu0
    %v1922 = vadd.f32 %v1868, %v1921
    %v1923 = vpop.f32.mrb[0].mxu0
    %v1924 = vpop.f32.mrb[0].mxu0
    %v1925 = vadd.f32 %v1868, %v1924
    %v1926 = vpop.f32.mrb[0].mxu0
    %1927 = vmatprep.mubr.bf16.mxu0 0
    %1928 = vmatmul.mubr.bf16.gmra.mrb[0].mxu0 %v1879
    %v1929 = vpop.f32.mrb[0].mxu0
    %v1930 = vadd.f32 %v1868, %v1929
    %v1931 = vpop.f32.mrb[0].mxu0
    %v1932 = vpop.f32.mrb[0].mxu0
    %v1933 = vadd.f32 %v1868, %v1932
    %v1934 = vpop.f32.mrb[0].mxu0
    %1935 = vmatprep.mubr.bf16.mxu0 0
    %1936 = vmatmul.mubr.bf16.gmra.mrb[0].mxu0 %v1882
    %v1937 = vpop.f32.mrb[0].mxu0
    %v1938 = vadd.f32 %v1868, %v1937
    %v1939 = vpop.f32.mrb[0].mxu0
    %v1940 = vpop.f32.mrb[0].mxu0
    %v1941 = vadd.f32 %v1868, %v1940
    %v1942 = vpop.f32.mrb[0].mxu0
    %1943 = vmatprep.mubr.bf16.mxu0 0
    %1944 = vmatmul.mubr.bf16.gmra.mrb[0].mxu0 %v1885
    %v1945 = vpop.f32.mrb[0].mxu0
    %v1946 = vadd.f32 %v1868, %v1945
    %v1947 = vpop.f32.mrb[0].mxu0
    %v1948 = vpop.f32.mrb[0].mxu0
    %v1949 = vadd.f32 %v1868, %v1948
    %v1950 = vpop.f32.mrb[0].mxu0
    %1951 = vdwg.mxu0
    %v1952 = vadd.f32 %v1922, %v1542
    %v1953 = vadd.f32 %v1925, %v1543
    %v1954 = vadd.f32 %v1930, %v1544
    %v1955 = vadd.f32 %v1933, %v1545
    %v1956 = vadd.f32 %v1938, %v1546
    %v1957 = vadd.f32 %v1941, %v1547
    %v1958 = vadd.f32 %v1946, %v1548
    %v1959 = vadd.f32 %v1949, %v1549
    %s1960 = scalar_lea.vmem %s1, 576
    %v1961 = vld [vmem:[%s1960] sm:$0xf]
    %v1962 = vld [vmem:[%s1960 + $0x4] sm:$0xf]
    %v1963 = vld [vmem:[%s1960 + $0x8] sm:$0xf]
    %v1964 = vld [vmem:[%s1960 + $0xc] sm:$0xf]
    %v1965 = vld [vmem:[%s1960 + $0x10] sm:$0xf]
    %v1966 = vld [vmem:[%s1960 + $0x14] sm:$0xf]
    %v1967 = vld [vmem:[%s2 + $0x6] sm:$0x1]
    %s1968 = scalar_lea.vmem %s3, 48
    %v1969 = vld [vmem:[%s1968] sm:$0xf]
    %v1970 = vld [vmem:[%s1968 + $0x4] sm:$0xf]
    %v1971 = vld [vmem:[%s1968 + $0x8] sm:$0xf]
    %v1972 = vld [vmem:[%s1968 + $0xc] sm:$0xf]
    %v1973 = vld [vmem:[%s1968 + $0x10] sm:$0xf]
    %v1974 = vld [vmem:[%s1968 + $0x14] sm:$0xf]
    %v1975 = vpack.c.bf16 %v1953, %v1952
    %v1976 = vpack.c.bf16 %v1955, %v1954
    %v1983 = vunpack.c.l.b16 %v1969
    %v1984 = vunpack.c.l.b16 %v1970
    %v1985 = vunpack.c.l.b16 %v1971
    %v1986 = vunpack.c.l.b16 %v1972
    %v1987 = vunpack.c.l.b16 %v1973
    %v1988 = vunpack.c.l.b16 %v1974
    %v1989 = vpack.c.b16 %v1984, %v1983
    %v1990 = vpack.c.b16 %v1986, %v1985
    %v1991 = vpack.c.b16 %v1988, %v1987
    %v1993 = vsel %vm1240, %v1989, 0
    %v1996 = vsel %vm1240, %v1990, 0
    %v1999 = vsel %vm1240, %v1991, 0
    %2001 = vmatprep.subr.bf16.mxu0 0
    %2002 = vmatpush1.bf16.msra.mxu0 %v1975
    %2003 = vmatprep.subr.bf16.mxu0 0
    %2004 = vmatpush1.bf16.msra.mxu0 %v1976
    %2005 = vmatprep.subr.bf16.mxu0 0
    %2006 = vmatpush1.bf16.msra.mxu0 0
    %2007 = vmatprep.subr.bf16.mxu0 0
    %2008 = vmatpush1.bf16.msra.mxu0 0
    %2009 = vmatprep.subr.bf16.mxu0 0
    %2010 = vmatpush1.bf16.msra.mxu0 0
    %2011 = vmatprep.subr.bf16.mxu0 0
    %2012 = vmatpush1.bf16.msra.mxu0 0
    %2013 = vmatprep.subr.bf16.mxu0 0
    %2014 = vmatpush1.bf16.msra.mxu0 0
    %2015 = vmatprep.subr.bf16.mxu0 0
    %2016 = vmatpush1.bf16.msra.mxu0 0
    %2017 = vmatprep.subr.bf16.mxu0 0
    %2018 = vmatpush1.bf16.msra.mxu0 0
    %2019 = vmatprep.subr.bf16.mxu0 0
    %2020 = vmatpush1.bf16.msra.mxu0 0
    %2021 = vmatprep.subr.bf16.mxu0 0
    %2022 = vmatpush1.bf16.msra.mxu0 0
    %2023 = vmatprep.subr.bf16.mxu0 0
    %2024 = vmatpush1.bf16.msra.mxu0 0
    %2025 = vmatprep.subr.bf16.mxu0 0
    %2026 = vmatpush1.bf16.msra.mxu0 0
    %2027 = vmatprep.subr.bf16.mxu0 0
    %2028 = vmatpush1.bf16.msra.mxu0 0
    %2029 = vmatprep.subr.bf16.mxu0 0
    %2030 = vmatpush1.bf16.msra.mxu0 0
    %2031 = vmatprep.subr.bf16.mxu0 0
    %2032 = vmatpush1.bf16.msra.mxu0 0
    %2033 = vmatprep.mubr.bf16.mxu0 0
    %2034 = vmatmul.mubr.bf16.gmra.mrb[0].mxu0 %v1993
    %v2035 = vpop.f32.mrb[0].mxu0
    %v2036 = vadd.f32 0.0, %v2035
    %v2037 = vpop.f32.mrb[0].mxu0
    %v2038 = vpop.f32.mrb[0].mxu0
    %v2039 = vadd.f32 0.0, %v2038
    %v2040 = vpop.f32.mrb[0].mxu0
    %2041 = vmatprep.mubr.bf16.mxu0 0
    %2042 = vmatmul.mubr.bf16.gmra.mrb[0].mxu0 %v1996
    %v2043 = vpop.f32.mrb[0].mxu0
    %v2044 = vadd.f32 0.0, %v2043
    %v2045 = vpop.f32.mrb[0].mxu0
    %v2046 = vpop.f32.mrb[0].mxu0
    %v2047 = vadd.f32 0.0, %v2046
    %v2048 = vpop.f32.mrb[0].mxu0
    %2049 = vmatprep.mubr.bf16.mxu0 0
    %2050 = vmatmul.mubr.bf16.gmra.mrb[0].mxu0 %v1999
    %v2051 = vpop.f32.mrb[0].mxu0
    %v2052 = vadd.f32 0.0, %v2051
    %v2053 = vpop.f32.mrb[0].mxu0
    %v2054 = vpop.f32.mrb[0].mxu0
    %v2055 = vadd.f32 0.0, %v2054
    %v2056 = vpop.f32.mrb[0].mxu0
    %2057 = vdwg.mxu0
    %2060 = vrot.lane.b32.xlu0 %v2044, 16
    %v2061 = vpop.permute.xlu0 %2060
    %2062 = vrot.lane.b32.xlu0 %v2047, 16
    %v2063 = vpop.permute.xlu0 %2062
    %2068 = vrot.lane.b32.xlu0 %v2052, 32
    %v2069 = vpop.permute.xlu0 %2068
    %2070 = vrot.lane.b32.xlu0 %v2055, 32
    %v2071 = vpop.permute.xlu0 %2070
    %v2074 = vsel %vm281, %v2036, %v2061
    %v2075 = vsel %vm281, %v2039, %v2063
    %v2076 = vsel %vm1240, %v2074, %v2069
    %v2077 = vsel %vm1240, %v2075, %v2071
    %v2078 = vpack.c.bf16 %v1957, %v1956
    %v2079 = vpack.c.bf16 %v1959, %v1958
    %2080 = vmatprep.subr.bf16.mxu0 0
    %2081 = vmatpush1.bf16.msra.mxu0 %v2078
    %2082 = vmatprep.subr.bf16.mxu0 0
    %2083 = vmatpush1.bf16.msra.mxu0 %v2079
    %2084 = vmatprep.subr.bf16.mxu0 0
    %2085 = vmatpush1.bf16.msra.mxu0 0
    %2086 = vmatprep.subr.bf16.mxu0 0
    %2087 = vmatpush1.bf16.msra.mxu0 0
    %2088 = vmatprep.subr.bf16.mxu0 0
    %2089 = vmatpush1.bf16.msra.mxu0 0
    %2090 = vmatprep.subr.bf16.mxu0 0
    %2091 = vmatpush1.bf16.msra.mxu0 0
    %2092 = vmatprep.subr.bf16.mxu0 0
    %2093 = vmatpush1.bf16.msra.mxu0 0
    %2094 = vmatprep.subr.bf16.mxu0 0
    %2095 = vmatpush1.bf16.msra.mxu0 0
    %2096 = vmatprep.subr.bf16.mxu0 0
    %2097 = vmatpush1.bf16.msra.mxu0 0
    %2098 = vmatprep.subr.bf16.mxu0 0
    %2099 = vmatpush1.bf16.msra.mxu0 0
    %2100 = vmatprep.subr.bf16.mxu0 0
    %2101 = vmatpush1.bf16.msra.mxu0 0
    %2102 = vmatprep.subr.bf16.mxu0 0
    %2103 = vmatpush1.bf16.msra.mxu0 0
    %2104 = vmatprep.subr.bf16.mxu0 0
    %2105 = vmatpush1.bf16.msra.mxu0 0
    %2106 = vmatprep.subr.bf16.mxu0 0
    %2107 = vmatpush1.bf16.msra.mxu0 0
    %2108 = vmatprep.subr.bf16.mxu0 0
    %2109 = vmatpush1.bf16.msra.mxu0 0
    %2110 = vmatprep.subr.bf16.mxu0 0
    %2111 = vmatpush1.bf16.msra.mxu0 0
    %2112 = vmatprep.mubr.bf16.mxu0 0
    %2113 = vmatmul.mubr.bf16.gmra.mrb[0].mxu0 %v1993
    %v2114 = vpop.f32.mrb[0].mxu0
    %v2115 = vadd.f32 0.0, %v2114
    %v2116 = vpop.f32.mrb[0].mxu0
    %v2117 = vpop.f32.mrb[0].mxu0
    %v2118 = vadd.f32 0.0, %v2117
    %v2119 = vpop.f32.mrb[0].mxu0
    %2120 = vmatprep.mubr.bf16.mxu0 0
    %2121 = vmatmul.mubr.bf16.gmra.mrb[0].mxu0 %v1996
    %v2122 = vpop.f32.mrb[0].mxu0
    %v2123 = vadd.f32 0.0, %v2122
    %v2124 = vpop.f32.mrb[0].mxu0
    %v2125 = vpop.f32.mrb[0].mxu0
    %v2126 = vadd.f32 0.0, %v2125
    %v2127 = vpop.f32.mrb[0].mxu0
    %2128 = vmatprep.mubr.bf16.mxu0 0
    %2129 = vmatmul.mubr.bf16.gmra.mrb[0].mxu0 %v1999
    %v2130 = vpop.f32.mrb[0].mxu0
    %v2131 = vadd.f32 0.0, %v2130
    %v2132 = vpop.f32.mrb[0].mxu0
    %v2133 = vpop.f32.mrb[0].mxu0
    %v2134 = vadd.f32 0.0, %v2133
    %v2135 = vpop.f32.mrb[0].mxu0
    %2136 = vdwg.mxu0
    %2139 = vrot.lane.b32.xlu0 %v2123, 16
    %v2140 = vpop.permute.xlu0 %2139
    %2141 = vrot.lane.b32.xlu0 %v2126, 16
    %v2142 = vpop.permute.xlu0 %2141
    %2147 = vrot.lane.b32.xlu0 %v2131, 32
    %v2148 = vpop.permute.xlu0 %2147
    %2149 = vrot.lane.b32.xlu0 %v2134, 32
    %v2150 = vpop.permute.xlu0 %2149
    %v2153 = vsel %vm281, %v2115, %v2140
    %v2154 = vsel %vm281, %v2118, %v2142
    %v2155 = vsel %vm1240, %v2153, %v2148
    %v2156 = vsel %vm1240, %v2154, %v2150
    %v2157 = vpack.c.bf16 %v2077, %v2076
    %v2158 = vpack.c.bf16 %v2156, %v2155
    %v2159 = vlaneseq
    %v2160 = vshrl.u32 %v2159, 7
    %v2161 = vsub.s32 0, %v2160
    %v2162 = vrot.slane %v1967, %v2161
    %v2169 = vunpack.c.l.b16 %v1961
    %v2170 = vunpack.c.l.b16 %v1962
    %v2171 = vunpack.c.l.b16 %v1963
    %v2172 = vunpack.c.l.b16 %v1964
    %v2173 = vunpack.c.l.b16 %v1965
    %v2174 = vunpack.c.l.b16 %v1966
    %v2175 = vpack.c.b16 %v2170, %v2169
    %v2176 = vpack.c.b16 %v2172, %v2171
    %v2177 = vpack.c.b16 %v2174, %v2173
    %v2182 = vsel %vm1345, %v2157, 0
    %v2185 = vsel %vm1345, %v2158, 0
    %2187 = vmatprep.subr.bf16.mxu0 0
    %2188 = vmatpush1.bf16.msra.mxu0 %v2175
    %2189 = vmatprep.subr.bf16.mxu0 0
    %2190 = vmatpush1.bf16.msra.mxu0 %v2176
    %2191 = vmatprep.subr.bf16.mxu0 0
    %2192 = vmatpush1.bf16.msra.mxu0 %v2177
    %2193 = vmatprep.subr.bf16.mxu0 0
    %2194 = vmatpush1.bf16.msra.mxu0 0
    %2195 = vmatprep.subr.bf16.mxu0 0
    %2196 = vmatpush1.bf16.msra.mxu0 0
    %2197 = vmatprep.subr.bf16.mxu0 0
    %2198 = vmatpush1.bf16.msra.mxu0 0
    %2199 = vmatprep.subr.bf16.mxu0 0
    %2200 = vmatpush1.bf16.msra.mxu0 0
    %2201 = vmatprep.subr.bf16.mxu0 0
    %2202 = vmatpush1.bf16.msra.mxu0 0
    %2203 = vmatprep.subr.bf16.mxu0 0
    %2204 = vmatpush1.bf16.msra.mxu0 0
    %2205 = vmatprep.subr.bf16.mxu0 0
    %2206 = vmatpush1.bf16.msra.mxu0 0
    %2207 = vmatprep.subr.bf16.mxu0 0
    %2208 = vmatpush1.bf16.msra.mxu0 0
    %2209 = vmatprep.subr.bf16.mxu0 0
    %2210 = vmatpush1.bf16.msra.mxu0 0
    %2211 = vmatprep.subr.bf16.mxu0 0
    %2212 = vmatpush1.bf16.msra.mxu0 0
    %2213 = vmatprep.subr.bf16.mxu0 0
    %2214 = vmatpush1.bf16.msra.mxu0 0
    %2215 = vmatprep.subr.bf16.mxu0 0
    %2216 = vmatpush1.bf16.msra.mxu0 0
    %2217 = vmatprep.subr.bf16.mxu0 0
    %2218 = vmatpush1.bf16.msra.mxu0 0
    %2219 = vmatprep.mubr.bf16.mxu0 0
    %2220 = vmatmul.mubr.bf16.gmra.mrb[0].mxu0 %v2182
    %v2221 = vpop.f32.mrb[0].mxu0
    %v2222 = vadd.f32 %v2162, %v2221
    %v2223 = vpop.f32.mrb[0].mxu0
    %v2224 = vpop.f32.mrb[0].mxu0
    %v2225 = vadd.f32 %v2162, %v2224
    %v2226 = vpop.f32.mrb[0].mxu0
    %2227 = vmatprep.mubr.bf16.mxu0 0
    %2228 = vmatmul.mubr.bf16.gmra.mrb[0].mxu0 %v2185
    %v2229 = vpop.f32.mrb[0].mxu0
    %v2230 = vadd.f32 %v2162, %v2229
    %v2231 = vpop.f32.mrb[0].mxu0
    %v2232 = vpop.f32.mrb[0].mxu0
    %v2233 = vadd.f32 %v2162, %v2232
    %v2234 = vpop.f32.mrb[0].mxu0
    %2235 = vdwg.mxu0
    %vm2236 = vcmp.ge.f32.partialorder %v2222, 0.0
    %vm2237 = vcmp.ge.f32.partialorder %v2225, 0.0
    %vm2238 = vcmp.ge.f32.partialorder %v2230, 0.0
    %vm2239 = vcmp.ge.f32.partialorder %v2233, 0.0
    %v2240 = vmul.f32 %v2222, 0.2
    %v2241 = vmul.f32 %v2225, 0.2
    %v2242 = vmul.f32 %v2230, 0.2
    %v2243 = vmul.f32 %v2233, 0.2
    %v2244 = vsel %vm2236, %v2222, %v2240
    %v2245 = vsel %vm2237, %v2225, %v2241
    %v2246 = vsel %vm2238, %v2230, %v2242
    %v2247 = vsel %vm2239, %v2233, %v2243
    %s2248 = scalar_lea.vmem %s1, 672
    %v2249 = vld [vmem:[%s2248] sm:$0xf]
    %v2250 = vld [vmem:[%s2248 + $0x4] sm:$0xf]
    %v2251 = vld [vmem:[%s2248 + $0x8] sm:$0xf]
    %v2252 = vld [vmem:[%s2248 + $0xc] sm:$0xf]
    %v2253 = vld [vmem:[%s2248 + $0x10] sm:$0xf]
    %v2254 = vld [vmem:[%s2248 + $0x14] sm:$0xf]
    %v2255 = vld [vmem:[%s2248 + $0x18] sm:$0xf]
    %v2256 = vld [vmem:[%s2248 + $0x1c] sm:$0xf]
    %v2257 = vld [vmem:[%s2248 + $0x20] sm:$0xf]
    %v2258 = vld [vmem:[%s2248 + $0x24] sm:$0xf]
    %v2259 = vld [vmem:[%s2248 + $0x28] sm:$0xf]
    %v2260 = vld [vmem:[%s2248 + $0x2c] sm:$0xf]
    %v2261 = vld [vmem:[%s2 + $0x7] sm:$0x1]
    %v2263 = vrot.slane %v2244, 1
    %v2266 = vrot.slane %v2244, 7
    %v2267 = vrot.slane %v2245, 7
    %v2268 = vsel %vm78, %v2266, %v2267
    %v2272 = vrot.slane %v2245, 5
    %v2274 = vsel %vm78, %v2263, %v2266
    %v2275 = vsel %vm78, %v2267, %v2272
    %v2278 = vrot.slane %v2274, 1
    %v2279 = vrot.slane %v2268, 1
    %v2280 = vsel %vm86, %v2278, %v2279
    %v2281 = vrot.slane %v2275, 1
    %v2282 = vsel %vm86, %v2279, %v2281
    %2283 = vrot.lane.b32.xlu0 %v2280, 32
    %v2284 = vpop.permute.xlu0 %2283
    %2285 = vrot.lane.b32.xlu0 %v2282, 32
    %v2286 = vpop.permute.xlu0 %2285
    %v2289 = vrot.slane %v2274, 2
    %v2290 = vrot.slane %v2268, 2
    %v2291 = vsel %vm128, %v2289, %v2290
    %v2292 = vrot.slane %v2275, 2
    %v2293 = vsel %vm128, %v2290, %v2292
    %2294 = vrot.lane.b32.xlu0 %v2291, 64
    %v2295 = vpop.permute.xlu0 %2294
    %2296 = vrot.lane.b32.xlu0 %v2293, 64
    %v2297 = vpop.permute.xlu0 %2296
    %v2300 = vsel %vm1240, %v2274, %v2284
    %v2301 = vsel %vm1240, %v2268, %v2286
    %v2302 = vsel %vm775, %v2300, %v2295
    %v2303 = vsel %vm775, %v2301, %v2297
    %v2305 = vrot.slane %v2246, 1
    %v2308 = vrot.slane %v2246, 7
    %v2309 = vrot.slane %v2247, 7
    %v2310 = vsel %vm78, %v2308, %v2309
    %v2314 = vrot.slane %v2247, 5
    %v2316 = vsel %vm78, %v2305, %v2308
    %v2317 = vsel %vm78, %v2309, %v2314
    %v2320 = vrot.slane %v2316, 1
    %v2321 = vrot.slane %v2310, 1
    %v2322 = vsel %vm86, %v2320, %v2321
    %v2323 = vrot.slane %v2317, 1
    %v2324 = vsel %vm86, %v2321, %v2323
    %2325 = vrot.lane.b32.xlu0 %v2322, 32
    %v2326 = vpop.permute.xlu0 %2325
    %2327 = vrot.lane.b32.xlu0 %v2324, 32
    %v2328 = vpop.permute.xlu0 %2327
    %v2331 = vrot.slane %v2316, 2
    %v2332 = vrot.slane %v2310, 2
    %v2333 = vsel %vm128, %v2331, %v2332
    %v2334 = vrot.slane %v2317, 2
    %v2335 = vsel %vm128, %v2332, %v2334
    %2336 = vrot.lane.b32.xlu0 %v2333, 64
    %v2337 = vpop.permute.xlu0 %2336
    %2338 = vrot.lane.b32.xlu0 %v2335, 64
    %v2339 = vpop.permute.xlu0 %2338
    %v2342 = vsel %vm1240, %v2316, %v2326
    %v2343 = vsel %vm1240, %v2310, %v2328
    %v2344 = vsel %vm775, %v2342, %v2337
    %v2345 = vsel %vm775, %v2343, %v2339
    %v2346 = vpack.c.bf16 %v2303, %v2302
    %v2347 = vpack.c.bf16 %v2345, %v2344
    %v2348 = vlaneseq
    %v2349 = vshrl.u32 %v2348, 7
    %v2350 = vsub.s32 0, %v2349
    %v2351 = vrot.slane %v2261, %v2350
    %v2364 = vunpack.c.l.b16 %v2249
    %v2365 = vunpack.c.l.b16 %v2250
    %v2366 = vunpack.c.l.b16 %v2251
    %v2367 = vunpack.c.l.b16 %v2252
    %v2368 = vunpack.c.l.b16 %v2253
    %v2369 = vunpack.c.l.b16 %v2254
    %v2370 = vunpack.c.l.b16 %v2255
    %v2371 = vunpack.c.l.b16 %v2256
    %v2372 = vunpack.c.l.b16 %v2257
    %v2373 = vunpack.c.l.b16 %v2258
    %v2374 = vunpack.c.l.b16 %v2259
    %v2375 = vunpack.c.l.b16 %v2260
    %v2376 = vpack.c.b16 %v2365, %v2364
    %v2377 = vpack.c.b16 %v2367, %v2366
    %v2378 = vpack.c.b16 %v2369, %v2368
    %v2379 = vpack.c.b16 %v2371, %v2370
    %v2380 = vpack.c.b16 %v2373, %v2372
    %v2381 = vpack.c.b16 %v2375, %v2374
    %vm2388 = vcmask 785408
    %v2390 = vsel %vm2388, %v2346, 0
    %v2393 = vsel %vm2388, %v2347, 0
    %2395 = vmatprep.subr.bf16.mxu0 0
    %2396 = vmatpush1.bf16.msra.mxu0 %v2376
    %2397 = vmatprep.subr.bf16.mxu0 0
    %2398 = vmatpush1.bf16.msra.mxu0 %v2377
    %2399 = vmatprep.subr.bf16.mxu0 0
    %2400 = vmatpush1.bf16.msra.mxu0 %v2378
    %2401 = vmatprep.subr.bf16.mxu0 0
    %2402 = vmatpush1.bf16.msra.mxu0 %v2379
    %2403 = vmatprep.subr.bf16.mxu0 0
    %2404 = vmatpush1.bf16.msra.mxu0 %v2380
    %2405 = vmatprep.subr.bf16.mxu0 0
    %2406 = vmatpush1.bf16.msra.mxu0 %v2381
    %2407 = vmatprep.subr.bf16.mxu0 0
    %2408 = vmatpush1.bf16.msra.mxu0 0
    %2409 = vmatprep.subr.bf16.mxu0 0
    %2410 = vmatpush1.bf16.msra.mxu0 0
    %2411 = vmatprep.subr.bf16.mxu0 0
    %2412 = vmatpush1.bf16.msra.mxu0 0
    %2413 = vmatprep.subr.bf16.mxu0 0
    %2414 = vmatpush1.bf16.msra.mxu0 0
    %2415 = vmatprep.subr.bf16.mxu0 0
    %2416 = vmatpush1.bf16.msra.mxu0 0
    %2417 = vmatprep.subr.bf16.mxu0 0
    %2418 = vmatpush1.bf16.msra.mxu0 0
    %2419 = vmatprep.subr.bf16.mxu0 0
    %2420 = vmatpush1.bf16.msra.mxu0 0
    %2421 = vmatprep.subr.bf16.mxu0 0
    %2422 = vmatpush1.bf16.msra.mxu0 0
    %2423 = vmatprep.subr.bf16.mxu0 0
    %2424 = vmatpush1.bf16.msra.mxu0 0
    %2425 = vmatprep.subr.bf16.mxu0 0
    %2426 = vmatpush1.bf16.msra.mxu0 0
    %2427 = vmatprep.mubr.bf16.mxu0 0
    %2428 = vmatmul.mubr.bf16.gmra.mrb[0].mxu0 %v2390
    %v2429 = vpop.f32.mrb[0].mxu0
    %v2430 = vadd.f32 %v2351, %v2429
    %v2431 = vpop.f32.mrb[0].mxu0
    %v2432 = vpop.f32.mrb[0].mxu0
    %v2433 = vadd.f32 %v2351, %v2432
    %v2434 = vpop.f32.mrb[0].mxu0
    %2435 = vmatprep.mubr.bf16.mxu0 0
    %2436 = vmatmul.mubr.bf16.gmra.mrb[0].mxu0 %v2393
    %v2437 = vpop.f32.mrb[0].mxu0
    %v2438 = vadd.f32 %v2351, %v2437
    %v2439 = vpop.f32.mrb[0].mxu0
    %v2440 = vpop.f32.mrb[0].mxu0
    %v2441 = vadd.f32 %v2351, %v2440
    %v2442 = vpop.f32.mrb[0].mxu0
    %2443 = vdwg.mxu0
    %vm2444 = vcmp.ge.f32.partialorder %v2430, 0.0
    %vm2445 = vcmp.ge.f32.partialorder %v2433, 0.0
    %vm2446 = vcmp.ge.f32.partialorder %v2438, 0.0
    %vm2447 = vcmp.ge.f32.partialorder %v2441, 0.0
    %v2448 = vmul.f32 %v2430, 0.2
    %v2449 = vmul.f32 %v2433, 0.2
    %v2450 = vmul.f32 %v2438, 0.2
    %v2451 = vmul.f32 %v2441, 0.2
    %v2452 = vsel %vm2444, %v2430, %v2448
    %v2453 = vsel %vm2445, %v2433, %v2449
    %v2454 = vsel %vm2446, %v2438, %v2450
    %v2455 = vsel %vm2447, %v2441, %v2451
    %s2456 = scalar_lea.vmem %s1, 768
    %v2457 = vld [vmem:[%s2456] sm:$0xf]
    %v2458 = vld [vmem:[%s2456 + $0x4] sm:$0xf]
    %v2459 = vld [vmem:[%s2456 + $0x8] sm:$0xf]
    %v2460 = vld [vmem:[%s2456 + $0xc] sm:$0xf]
    %v2461 = vld [vmem:[%s2 + $0x8] sm:$0x1]
    %v2462 = vpack.c.bf16 %v2453, %v2452
    %v2463 = vpack.c.bf16 %v2455, %v2454
    %v2464 = vlaneseq
    %v2465 = vshrl.u32 %v2464, 7
    %v2466 = vsub.s32 0, %v2465
    %v2467 = vrot.slane %v2461, %v2466
    %v2472 = vunpack.c.l.b16 %v2457
    %v2473 = vunpack.c.l.b16 %v2458
    %v2474 = vunpack.c.l.b16 %v2459
    %v2475 = vunpack.c.l.b16 %v2460
    %v2476 = vpack.c.b16 %v2473, %v2472
    %v2477 = vpack.c.b16 %v2475, %v2474
    %v2481 = vsel %vm1240, %v2462, 0
    %v2484 = vsel %vm1240, %v2463, 0
    %2486 = vmatprep.subr.bf16.mxu0 0
    %2487 = vmatpush1.bf16.msra.mxu0 %v2476
    %2488 = vmatprep.subr.bf16.mxu0 0
    %2489 = vmatpush1.bf16.msra.mxu0 %v2477
    %2490 = vmatprep.subr.bf16.mxu0 0
    %2491 = vmatpush1.bf16.msra.mxu0 0
    %2492 = vmatprep.subr.bf16.mxu0 0
    %2493 = vmatpush1.bf16.msra.mxu0 0
    %2494 = vmatprep.subr.bf16.mxu0 0
    %2495 = vmatpush1.bf16.msra.mxu0 0
    %2496 = vmatprep.subr.bf16.mxu0 0
    %2497 = vmatpush1.bf16.msra.mxu0 0
    %2498 = vmatprep.subr.bf16.mxu0 0
    %2499 = vmatpush1.bf16.msra.mxu0 0
    %2500 = vmatprep.subr.bf16.mxu0 0
    %2501 = vmatpush1.bf16.msra.mxu0 0
    %2502 = vmatprep.subr.bf16.mxu0 0
    %2503 = vmatpush1.bf16.msra.mxu0 0
    %2504 = vmatprep.subr.bf16.mxu0 0
    %2505 = vmatpush1.bf16.msra.mxu0 0
    %2506 = vmatprep.subr.bf16.mxu0 0
    %2507 = vmatpush1.bf16.msra.mxu0 0
    %2508 = vmatprep.subr.bf16.mxu0 0
    %2509 = vmatpush1.bf16.msra.mxu0 0
    %2510 = vmatprep.subr.bf16.mxu0 0
    %2511 = vmatpush1.bf16.msra.mxu0 0
    %2512 = vmatprep.subr.bf16.mxu0 0
    %2513 = vmatpush1.bf16.msra.mxu0 0
    %2514 = vmatprep.subr.bf16.mxu0 0
    %2515 = vmatpush1.bf16.msra.mxu0 0
    %2516 = vmatprep.subr.bf16.mxu0 0
    %2517 = vmatpush1.bf16.msra.mxu0 0
    %2518 = vmatprep.mubr.bf16.mxu0 0
    %2519 = vmatmul.mubr.bf16.gmra.mrb[0].mxu0 %v2481
    %v2520 = vpop.f32.mrb[0].mxu0
    %v2521 = vadd.f32 %v2467, %v2520
    %v2522 = vpop.f32.mrb[0].mxu0
    %v2523 = vpop.f32.mrb[0].mxu0
    %v2524 = vadd.f32 %v2467, %v2523
    %v2525 = vpop.f32.mrb[0].mxu0
    %2526 = vmatprep.mubr.bf16.mxu0 0
    %2527 = vmatmul.mubr.bf16.gmra.mrb[0].mxu0 %v2484
    %v2528 = vpop.f32.mrb[0].mxu0
    %v2529 = vadd.f32 %v2467, %v2528
    %v2530 = vpop.f32.mrb[0].mxu0
    %v2531 = vpop.f32.mrb[0].mxu0
    %v2532 = vadd.f32 %v2467, %v2531
    %v2533 = vpop.f32.mrb[0].mxu0
    %2534 = vdwg.mxu0
    %v2535 = vadd.f32 %v2521, %v2244
    %v2536 = vadd.f32 %v2524, %v2245
    %v2537 = vadd.f32 %v2529, %v2246
    %v2538 = vadd.f32 %v2532, %v2247
    %s2539 = scalar_lea.vmem %s1, 864
    %v2540 = vld [vmem:[%s2539] sm:$0xf]
    %v2541 = vld [vmem:[%s2539 + $0x4] sm:$0xf]
    %v2542 = vld [vmem:[%s2539 + $0x8] sm:$0xf]
    %v2543 = vld [vmem:[%s2539 + $0xc] sm:$0xf]
    %v2544 = vld [vmem:[%s2539 + $0x10] sm:$0xf]
    %v2545 = vld [vmem:[%s2539 + $0x14] sm:$0xf]
    %v2546 = vld [vmem:[%s2539 + $0x18] sm:$0xf]
    %v2547 = vld [vmem:[%s2539 + $0x1c] sm:$0xf]
    %v2548 = vld [vmem:[%s2539 + $0x20] sm:$0xf]
    %v2549 = vld [vmem:[%s2539 + $0x24] sm:$0xf]
    %v2550 = vld [vmem:[%s2539 + $0x28] sm:$0xf]
    %v2551 = vld [vmem:[%s2539 + $0x2c] sm:$0xf]
    %v2552 = vld [vmem:[%s2 + $0x9] sm:$0x1]
    %v2554 = vrot.slane %v2535, 3
    %v2556 = vrot.slane %v2535, 1
    %v2558 = vrot.slane %v2535, 7
    %v2561 = vrot.slane %v2535, 5
    %v2562 = vrot.slane %v2536, 5
    %v2563 = vsel %vm82, %v2561, %v2562
    %v2567 = vrot.slane %v2536, 3
    %v2569 = vrot.slane %v2536, 1
    %v2571 = vrot.slane %v2536, 7
    %v2573 = vsel %vm78, %v2554, %v2556
    %v2574 = vsel %vm49, %v2573, %v2558
    %v2575 = vsel %vm82, %v2574, %v2561
    %v2576 = vsel %vm82, %v2562, %v2567
    %v2577 = vsel %vm212, %v2576, %v2569
    %v2578 = vsel %vm170, %v2577, %v2571
    %v2581 = vrot.slane %v2575, 3
    %v2582 = vrot.slane %v2563, 3
    %v2583 = vsel %vm170, %v2581, %v2582
    %v2584 = vrot.slane %v2578, 3
    %v2585 = vsel %vm170, %v2582, %v2584
    %2586 = vrot.lane.b32.xlu0 %v2583, 32
    %v2587 = vpop.permute.xlu0 %2586
    %2588 = vrot.lane.b32.xlu0 %v2585, 32
    %v2589 = vpop.permute.xlu0 %2588
    %v2592 = vrot.slane %v2575, 6
    %v2593 = vrot.slane %v2563, 6
    %v2594 = vsel %vm49, %v2592, %v2593
    %v2595 = vrot.slane %v2578, 6
    %v2596 = vsel %vm49, %v2593, %v2595
    %2597 = vrot.lane.b32.xlu0 %v2594, 64
    %v2598 = vpop.permute.xlu0 %2597
    %2599 = vrot.lane.b32.xlu0 %v2596, 64
    %v2600 = vpop.permute.xlu0 %2599
    %v2603 = vsel %vm1240, %v2575, %v2587
    %v2604 = vsel %vm1240, %v2563, %v2589
    %v2605 = vsel %vm775, %v2603, %v2598
    %v2606 = vsel %vm775, %v2604, %v2600
    %v2608 = vrot.slane %v2537, 3
    %v2610 = vrot.slane %v2537, 1
    %v2612 = vrot.slane %v2537, 7
    %v2615 = vrot.slane %v2537, 5
    %v2616 = vrot.slane %v2538, 5
    %v2617 = vsel %vm82, %v2615, %v2616
    %v2621 = vrot.slane %v2538, 3
    %v2623 = vrot.slane %v2538, 1
    %v2625 = vrot.slane %v2538, 7
    %v2627 = vsel %vm78, %v2608, %v2610
    %v2628 = vsel %vm49, %v2627, %v2612
    %v2629 = vsel %vm82, %v2628, %v2615
    %v2630 = vsel %vm82, %v2616, %v2621
    %v2631 = vsel %vm212, %v2630, %v2623
    %v2632 = vsel %vm170, %v2631, %v2625
    %v2635 = vrot.slane %v2629, 3
    %v2636 = vrot.slane %v2617, 3
    %v2637 = vsel %vm170, %v2635, %v2636
    %v2638 = vrot.slane %v2632, 3
    %v2639 = vsel %vm170, %v2636, %v2638
    %2640 = vrot.lane.b32.xlu0 %v2637, 32
    %v2641 = vpop.permute.xlu0 %2640
    %2642 = vrot.lane.b32.xlu0 %v2639, 32
    %v2643 = vpop.permute.xlu0 %2642
    %v2646 = vrot.slane %v2629, 6
    %v2647 = vrot.slane %v2617, 6
    %v2648 = vsel %vm49, %v2646, %v2647
    %v2649 = vrot.slane %v2632, 6
    %v2650 = vsel %vm49, %v2647, %v2649
    %2651 = vrot.lane.b32.xlu0 %v2648, 64
    %v2652 = vpop.permute.xlu0 %2651
    %2653 = vrot.lane.b32.xlu0 %v2650, 64
    %v2654 = vpop.permute.xlu0 %2653
    %v2657 = vsel %vm1240, %v2629, %v2641
    %v2658 = vsel %vm1240, %v2617, %v2643
    %v2659 = vsel %vm775, %v2657, %v2652
    %v2660 = vsel %vm775, %v2658, %v2654
    %v2661 = vpack.c.bf16 %v2606, %v2605
    %v2662 = vpack.c.bf16 %v2660, %v2659
    %v2663 = vlaneseq
    %v2664 = vshrl.u32 %v2663, 7
    %v2665 = vsub.s32 0, %v2664
    %v2666 = vrot.slane %v2552, %v2665
    %v2679 = vunpack.c.l.b16 %v2540
    %v2680 = vunpack.c.l.b16 %v2541
    %v2681 = vunpack.c.l.b16 %v2542
    %v2682 = vunpack.c.l.b16 %v2543
    %v2683 = vunpack.c.l.b16 %v2544
    %v2684 = vunpack.c.l.b16 %v2545
    %v2685 = vunpack.c.l.b16 %v2546
    %v2686 = vunpack.c.l.b16 %v2547
    %v2687 = vunpack.c.l.b16 %v2548
    %v2688 = vunpack.c.l.b16 %v2549
    %v2689 = vunpack.c.l.b16 %v2550
    %v2690 = vunpack.c.l.b16 %v2551
    %v2691 = vpack.c.b16 %v2680, %v2679
    %v2692 = vpack.c.b16 %v2682, %v2681
    %v2693 = vpack.c.b16 %v2684, %v2683
    %v2694 = vpack.c.b16 %v2686, %v2685
    %v2695 = vpack.c.b16 %v2688, %v2687
    %v2696 = vpack.c.b16 %v2690, %v2689
    %v2704 = vsel %vm2388, %v2661, 0
    %v2707 = vsel %vm2388, %v2662, 0
    %2709 = vmatprep.subr.bf16.mxu0 0
    %2710 = vmatpush1.bf16.msra.mxu0 %v2691
    %2711 = vmatprep.subr.bf16.mxu0 0
    %2712 = vmatpush1.bf16.msra.mxu0 %v2692
    %2713 = vmatprep.subr.bf16.mxu0 0
    %2714 = vmatpush1.bf16.msra.mxu0 %v2693
    %2715 = vmatprep.subr.bf16.mxu0 0
    %2716 = vmatpush1.bf16.msra.mxu0 %v2694
    %2717 = vmatprep.subr.bf16.mxu0 0
    %2718 = vmatpush1.bf16.msra.mxu0 %v2695
    %2719 = vmatprep.subr.bf16.mxu0 0
    %2720 = vmatpush1.bf16.msra.mxu0 %v2696
    %2721 = vmatprep.subr.bf16.mxu0 0
    %2722 = vmatpush1.bf16.msra.mxu0 0
    %2723 = vmatprep.subr.bf16.mxu0 0
    %2724 = vmatpush1.bf16.msra.mxu0 0
    %2725 = vmatprep.subr.bf16.mxu0 0
    %2726 = vmatpush1.bf16.msra.mxu0 0
    %2727 = vmatprep.subr.bf16.mxu0 0
    %2728 = vmatpush1.bf16.msra.mxu0 0
    %2729 = vmatprep.subr.bf16.mxu0 0
    %2730 = vmatpush1.bf16.msra.mxu0 0
    %2731 = vmatprep.subr.bf16.mxu0 0
    %2732 = vmatpush1.bf16.msra.mxu0 0
    %2733 = vmatprep.subr.bf16.mxu0 0
    %2734 = vmatpush1.bf16.msra.mxu0 0
    %2735 = vmatprep.subr.bf16.mxu0 0
    %2736 = vmatpush1.bf16.msra.mxu0 0
    %2737 = vmatprep.subr.bf16.mxu0 0
    %2738 = vmatpush1.bf16.msra.mxu0 0
    %2739 = vmatprep.subr.bf16.mxu0 0
    %2740 = vmatpush1.bf16.msra.mxu0 0
    %2741 = vmatprep.mubr.bf16.mxu0 0
    %2742 = vmatmul.mubr.bf16.gmra.mrb[0].mxu0 %v2704
    %v2743 = vpop.f32.mrb[0].mxu0
    %v2744 = vadd.f32 %v2666, %v2743
    %v2745 = vpop.f32.mrb[0].mxu0
    %v2746 = vpop.f32.mrb[0].mxu0
    %v2747 = vadd.f32 %v2666, %v2746
    %v2748 = vpop.f32.mrb[0].mxu0
    %2749 = vmatprep.mubr.bf16.mxu0 0
    %2750 = vmatmul.mubr.bf16.gmra.mrb[0].mxu0 %v2707
    %v2751 = vpop.f32.mrb[0].mxu0
    %v2752 = vadd.f32 %v2666, %v2751
    %v2753 = vpop.f32.mrb[0].mxu0
    %v2754 = vpop.f32.mrb[0].mxu0
    %v2755 = vadd.f32 %v2666, %v2754
    %v2756 = vpop.f32.mrb[0].mxu0
    %2757 = vdwg.mxu0
    %vm2758 = vcmp.ge.f32.partialorder %v2744, 0.0
    %vm2759 = vcmp.ge.f32.partialorder %v2747, 0.0
    %vm2760 = vcmp.ge.f32.partialorder %v2752, 0.0
    %vm2761 = vcmp.ge.f32.partialorder %v2755, 0.0
    %v2762 = vmul.f32 %v2744, 0.2
    %v2763 = vmul.f32 %v2747, 0.2
    %v2764 = vmul.f32 %v2752, 0.2
    %v2765 = vmul.f32 %v2755, 0.2
    %v2766 = vsel %vm2758, %v2744, %v2762
    %v2767 = vsel %vm2759, %v2747, %v2763
    %v2768 = vsel %vm2760, %v2752, %v2764
    %v2769 = vsel %vm2761, %v2755, %v2765
    %s2770 = scalar_lea.vmem %s1, 960
    %v2771 = vld [vmem:[%s2770] sm:$0xf]
    %v2772 = vld [vmem:[%s2770 + $0x4] sm:$0xf]
    %v2773 = vld [vmem:[%s2770 + $0x8] sm:$0xf]
    %v2774 = vld [vmem:[%s2770 + $0xc] sm:$0xf]
    %v2775 = vld [vmem:[%s2 + $0xa] sm:$0x1]
    %v2776 = vpack.c.bf16 %v2767, %v2766
    %v2777 = vpack.c.bf16 %v2769, %v2768
    %v2778 = vlaneseq
    %v2779 = vshrl.u32 %v2778, 7
    %v2780 = vsub.s32 0, %v2779
    %v2781 = vrot.slane %v2775, %v2780
    %v2786 = vunpack.c.l.b16 %v2771
    %v2787 = vunpack.c.l.b16 %v2772
    %v2788 = vunpack.c.l.b16 %v2773
    %v2789 = vunpack.c.l.b16 %v2774
    %v2790 = vpack.c.b16 %v2787, %v2786
    %v2791 = vpack.c.b16 %v2789, %v2788
    %v2795 = vsel %vm1240, %v2776, 0
    %v2798 = vsel %vm1240, %v2777, 0
    %2800 = vmatprep.subr.bf16.mxu0 0
    %2801 = vmatpush1.bf16.msra.mxu0 %v2790
    %2802 = vmatprep.subr.bf16.mxu0 0
    %2803 = vmatpush1.bf16.msra.mxu0 %v2791
    %2804 = vmatprep.subr.bf16.mxu0 0
    %2805 = vmatpush1.bf16.msra.mxu0 0
    %2806 = vmatprep.subr.bf16.mxu0 0
    %2807 = vmatpush1.bf16.msra.mxu0 0
    %2808 = vmatprep.subr.bf16.mxu0 0
    %2809 = vmatpush1.bf16.msra.mxu0 0
    %2810 = vmatprep.subr.bf16.mxu0 0
    %2811 = vmatpush1.bf16.msra.mxu0 0
    %2812 = vmatprep.subr.bf16.mxu0 0
    %2813 = vmatpush1.bf16.msra.mxu0 0
    %2814 = vmatprep.subr.bf16.mxu0 0
    %2815 = vmatpush1.bf16.msra.mxu0 0
    %2816 = vmatprep.subr.bf16.mxu0 0
    %2817 = vmatpush1.bf16.msra.mxu0 0
    %2818 = vmatprep.subr.bf16.mxu0 0
    %2819 = vmatpush1.bf16.msra.mxu0 0
    %2820 = vmatprep.subr.bf16.mxu0 0
    %2821 = vmatpush1.bf16.msra.mxu0 0
    %2822 = vmatprep.subr.bf16.mxu0 0
    %2823 = vmatpush1.bf16.msra.mxu0 0
    %2824 = vmatprep.subr.bf16.mxu0 0
    %2825 = vmatpush1.bf16.msra.mxu0 0
    %2826 = vmatprep.subr.bf16.mxu0 0
    %2827 = vmatpush1.bf16.msra.mxu0 0
    %2828 = vmatprep.subr.bf16.mxu0 0
    %2829 = vmatpush1.bf16.msra.mxu0 0
    %2830 = vmatprep.subr.bf16.mxu0 0
    %2831 = vmatpush1.bf16.msra.mxu0 0
    %2832 = vmatprep.mubr.bf16.mxu0 0
    %2833 = vmatmul.mubr.bf16.gmra.mrb[0].mxu0 %v2795
    %v2834 = vpop.f32.mrb[0].mxu0
    %v2835 = vadd.f32 %v2781, %v2834
    %v2836 = vpop.f32.mrb[0].mxu0
    %v2837 = vpop.f32.mrb[0].mxu0
    %v2838 = vadd.f32 %v2781, %v2837
    %v2839 = vpop.f32.mrb[0].mxu0
    %2840 = vmatprep.mubr.bf16.mxu0 0
    %2841 = vmatmul.mubr.bf16.gmra.mrb[0].mxu0 %v2798
    %v2842 = vpop.f32.mrb[0].mxu0
    %v2843 = vadd.f32 %v2781, %v2842
    %v2844 = vpop.f32.mrb[0].mxu0
    %v2845 = vpop.f32.mrb[0].mxu0
    %v2846 = vadd.f32 %v2781, %v2845
    %v2847 = vpop.f32.mrb[0].mxu0
    %2848 = vdwg.mxu0
    %v2849 = vadd.f32 %v2835, %v2535
    %v2850 = vadd.f32 %v2838, %v2536
    %v2851 = vadd.f32 %v2843, %v2537
    %v2852 = vadd.f32 %v2846, %v2538
    %s2853 = scalar_lea.vmem %s1, 1056
    %v2854 = vld [vmem:[%s2853] sm:$0xf]
    %v2855 = vld [vmem:[%s2853 + $0x4] sm:$0xf]
    %v2856 = vld [vmem:[%s2853 + $0x8] sm:$0xf]
    %v2857 = vld [vmem:[%s2853 + $0xc] sm:$0xf]
    %v2858 = vld [vmem:[%s2853 + $0x10] sm:$0xf]
    %v2859 = vld [vmem:[%s2853 + $0x14] sm:$0xf]
    %v2860 = vld [vmem:[%s2853 + $0x18] sm:$0xf]
    %v2861 = vld [vmem:[%s2853 + $0x1c] sm:$0xf]
    %v2862 = vld [vmem:[%s2853 + $0x20] sm:$0xf]
    %v2863 = vld [vmem:[%s2853 + $0x24] sm:$0xf]
    %v2864 = vld [vmem:[%s2853 + $0x28] sm:$0xf]
    %v2865 = vld [vmem:[%s2853 + $0x2c] sm:$0xf]
    %v2866 = vld [vmem:[%s2 + $0xb] sm:$0x1]
    %s2867 = scalar_lea.vmem %s3, 96
    %v2868 = vld [vmem:[%s2867] sm:$0xf]
    %v2869 = vld [vmem:[%s2867 + $0x4] sm:$0xf]
    %v2870 = vld [vmem:[%s2867 + $0x8] sm:$0xf]
    %v2871 = vpack.c.bf16 %v2850, %v2849
    %v2875 = vunpack.c.l.b16 %v2868
    %v2876 = vunpack.c.l.b16 %v2869
    %v2877 = vunpack.c.l.b16 %v2870
    %v2878 = vpack.c.b16 %v2876, %v2875
    %v2879 = vpack.c.b16 %v2877, %v2877
    %v2881 = vsel %vm281, %v2878, 0
    %v2884 = vsel %vm281, %v2879, 0
    %2886 = vmatprep.subr.bf16.mxu0 0
    %2887 = vmatpush1.bf16.msra.mxu0 %v2871
    %2888 = vmatprep.subr.bf16.mxu0 0
    %2889 = vmatpush1.bf16.msra.mxu0 0
    %2890 = vmatprep.subr.bf16.mxu0 0
    %2891 = vmatpush1.bf16.msra.mxu0 0
    %2892 = vmatprep.subr.bf16.mxu0 0
    %2893 = vmatpush1.bf16.msra.mxu0 0
    %2894 = vmatprep.subr.bf16.mxu0 0
    %2895 = vmatpush1.bf16.msra.mxu0 0
    %2896 = vmatprep.subr.bf16.mxu0 0
    %2897 = vmatpush1.bf16.msra.mxu0 0
    %2898 = vmatprep.subr.bf16.mxu0 0
    %2899 = vmatpush1.bf16.msra.mxu0 0
    %2900 = vmatprep.subr.bf16.mxu0 0
    %2901 = vmatpush1.bf16.msra.mxu0 0
    %2902 = vmatprep.subr.bf16.mxu0 0
    %2903 = vmatpush1.bf16.msra.mxu0 0
    %2904 = vmatprep.subr.bf16.mxu0 0
    %2905 = vmatpush1.bf16.msra.mxu0 0
    %2906 = vmatprep.subr.bf16.mxu0 0
    %2907 = vmatpush1.bf16.msra.mxu0 0
    %2908 = vmatprep.subr.bf16.mxu0 0
    %2909 = vmatpush1.bf16.msra.mxu0 0
    %2910 = vmatprep.subr.bf16.mxu0 0
    %2911 = vmatpush1.bf16.msra.mxu0 0
    %2912 = vmatprep.subr.bf16.mxu0 0
    %2913 = vmatpush1.bf16.msra.mxu0 0
    %2914 = vmatprep.subr.bf16.mxu0 0
    %2915 = vmatpush1.bf16.msra.mxu0 0
    %2916 = vmatprep.subr.bf16.mxu0 0
    %2917 = vmatpush1.bf16.msra.mxu0 0
    %2918 = vmatprep.mubr.bf16.mxu0 0
    %2919 = vmatmul.mubr.bf16.gmra.mrb[0].mxu0 %v2881
    %v2920 = vpop.f32.mrb[0].mxu0
    %v2921 = vadd.f32 0.0, %v2920
    %v2922 = vpop.f32.mrb[0].mxu0
    %v2923 = vpop.f32.mrb[0].mxu0
    %v2924 = vadd.f32 0.0, %v2923
    %v2925 = vpop.f32.mrb[0].mxu0
    %2926 = vmatprep.mubr.bf16.mxu0 0
    %2927 = vmatmul.mubr.bf16.gmra.mrb[0].mxu0 %v2884
    %v2928 = vpop.f32.mrb[0].mxu0
    %v2929 = vadd.f32 0.0, %v2928
    %v2930 = vpop.f32.mrb[0].mxu0
    %v2931 = vpop.f32.mrb[0].mxu0
    %v2932 = vpop.f32.mrb[0].mxu0
    %2933 = vdwg.mxu0
    %2935 = vrot.lane.b32.xlu0 %v2924, 32
    %v2936 = vpop.permute.xlu0 %2935
    %2939 = vrot.lane.b32.xlu0 %v2929, 64
    %v2940 = vpop.permute.xlu0 %2939
    %v2942 = vsel %vm1240, %v2921, %v2936
    %v2943 = vsel %vm775, %v2942, %v2940
    %v2944 = vpack.c.bf16 %v2852, %v2851
    %2945 = vmatprep.subr.bf16.mxu0 0
    %2946 = vmatpush1.bf16.msra.mxu0 %v2944
    %2947 = vmatprep.subr.bf16.mxu0 0
    %2948 = vmatpush1.bf16.msra.mxu0 0
    %2949 = vmatprep.subr.bf16.mxu0 0
    %2950 = vmatpush1.bf16.msra.mxu0 0
    %2951 = vmatprep.subr.bf16.mxu0 0
    %2952 = vmatpush1.bf16.msra.mxu0 0
    %2953 = vmatprep.subr.bf16.mxu0 0
    %2954 = vmatpush1.bf16.msra.mxu0 0
    %2955 = vmatprep.subr.bf16.mxu0 0
    %2956 = vmatpush1.bf16.msra.mxu0 0
    %2957 = vmatprep.subr.bf16.mxu0 0
    %2958 = vmatpush1.bf16.msra.mxu0 0
    %2959 = vmatprep.subr.bf16.mxu0 0
    %2960 = vmatpush1.bf16.msra.mxu0 0
    %2961 = vmatprep.subr.bf16.mxu0 0
    %2962 = vmatpush1.bf16.msra.mxu0 0
    %2963 = vmatprep.subr.bf16.mxu0 0
    %2964 = vmatpush1.bf16.msra.mxu0 0
    %2965 = vmatprep.subr.bf16.mxu0 0
    %2966 = vmatpush1.bf16.msra.mxu0 0
    %2967 = vmatprep.subr.bf16.mxu0 0
    %2968 = vmatpush1.bf16.msra.mxu0 0
    %2969 = vmatprep.subr.bf16.mxu0 0
    %2970 = vmatpush1.bf16.msra.mxu0 0
    %2971 = vmatprep.subr.bf16.mxu0 0
    %2972 = vmatpush1.bf16.msra.mxu0 0
    %2973 = vmatprep.subr.bf16.mxu0 0
    %2974 = vmatpush1.bf16.msra.mxu0 0
    %2975 = vmatprep.subr.bf16.mxu0 0
    %2976 = vmatpush1.bf16.msra.mxu0 0
    %2977 = vmatprep.mubr.bf16.mxu0 0
    %2978 = vmatmul.mubr.bf16.gmra.mrb[0].mxu0 %v2881
    %v2979 = vpop.f32.mrb[0].mxu0
    %v2980 = vadd.f32 0.0, %v2979
    %v2981 = vpop.f32.mrb[0].mxu0
    %v2982 = vpop.f32.mrb[0].mxu0
    %v2983 = vadd.f32 0.0, %v2982
    %v2984 = vpop.f32.mrb[0].mxu0
    %2985 = vmatprep.mubr.bf16.mxu0 0
    %2986 = vmatmul.mubr.bf16.gmra.mrb[0].mxu0 %v2884
    %v2987 = vpop.f32.mrb[0].mxu0
    %v2988 = vadd.f32 0.0, %v2987
    %v2989 = vpop.f32.mrb[0].mxu0
    %v2990 = vpop.f32.mrb[0].mxu0
    %v2991 = vpop.f32.mrb[0].mxu0
    %2992 = vdwg.mxu0
    %2994 = vrot.lane.b32.xlu0 %v2983, 32
    %v2995 = vpop.permute.xlu0 %2994
    %2998 = vrot.lane.b32.xlu0 %v2988, 64
    %v2999 = vpop.permute.xlu0 %2998
    %v3001 = vsel %vm1240, %v2980, %v2995
    %v3002 = vsel %vm775, %v3001, %v2999
    %v3003 = vpack.c.bf16 %v3002, %v2943
    %v3004 = vlaneseq
    %v3005 = vshrl.u32 %v3004, 7
    %v3006 = vsub.s32 0, %v3005
    %v3007 = vrot.slane %v2866, %v3006
    %v3020 = vunpack.c.l.b16 %v2854
    %v3021 = vunpack.c.l.b16 %v2855
    %v3022 = vunpack.c.l.b16 %v2856
    %v3023 = vunpack.c.l.b16 %v2857
    %v3024 = vunpack.c.l.b16 %v2858
    %v3025 = vunpack.c.l.b16 %v2859
    %v3026 = vunpack.c.l.b16 %v2860
    %v3027 = vunpack.c.l.b16 %v2861
    %v3028 = vunpack.c.l.b16 %v2862
    %v3029 = vunpack.c.l.b16 %v2863
    %v3030 = vunpack.c.l.b16 %v2864
    %v3031 = vunpack.c.l.b16 %v2865
    %v3032 = vpack.c.b16 %v3021, %v3020
    %v3033 = vpack.c.b16 %v3023, %v3022
    %v3034 = vpack.c.b16 %v3025, %v3024
    %v3035 = vpack.c.b16 %v3027, %v3026
    %v3036 = vpack.c.b16 %v3029, %v3028
    %v3037 = vpack.c.b16 %v3031, %v3030
    %v3045 = vsel %vm2388, %v3003, 0
    %3047 = vmatprep.subr.bf16.mxu0 0
    %3048 = vmatpush1.bf16.msra.mxu0 %v3032
    %3049 = vmatprep.subr.bf16.mxu0 0
    %3050 = vmatpush1.bf16.msra.mxu0 %v3033
    %3051 = vmatprep.subr.bf16.mxu0 0
    %3052 = vmatpush1.bf16.msra.mxu0 %v3034
    %3053 = vmatprep.subr.bf16.mxu0 0
    %3054 = vmatpush1.bf16.msra.mxu0 %v3035
    %3055 = vmatprep.subr.bf16.mxu0 0
    %3056 = vmatpush1.bf16.msra.mxu0 %v3036
    %3057 = vmatprep.subr.bf16.mxu0 0
    %3058 = vmatpush1.bf16.msra.mxu0 %v3037
    %3059 = vmatprep.subr.bf16.mxu0 0
    %3060 = vmatpush1.bf16.msra.mxu0 0
    %3061 = vmatprep.subr.bf16.mxu0 0
    %3062 = vmatpush1.bf16.msra.mxu0 0
    %3063 = vmatprep.subr.bf16.mxu0 0
    %3064 = vmatpush1.bf16.msra.mxu0 0
    %3065 = vmatprep.subr.bf16.mxu0 0
    %3066 = vmatpush1.bf16.msra.mxu0 0
    %3067 = vmatprep.subr.bf16.mxu0 0
    %3068 = vmatpush1.bf16.msra.mxu0 0
    %3069 = vmatprep.subr.bf16.mxu0 0
    %3070 = vmatpush1.bf16.msra.mxu0 0
    %3071 = vmatprep.subr.bf16.mxu0 0
    %3072 = vmatpush1.bf16.msra.mxu0 0
    %3073 = vmatprep.subr.bf16.mxu0 0
    %3074 = vmatpush1.bf16.msra.mxu0 0
    %3075 = vmatprep.subr.bf16.mxu0 0
    %3076 = vmatpush1.bf16.msra.mxu0 0
    %3077 = vmatprep.subr.bf16.mxu0 0
    %3078 = vmatpush1.bf16.msra.mxu0 0
    %3079 = vmatprep.mubr.bf16.mxu0 0
    %3080 = vmatmul.mubr.bf16.gmra.mrb[0].mxu0 %v3045
    %v3081 = vpop.f32.mrb[0].mxu0
    %v3082 = vadd.f32 %v3007, %v3081
    %v3083 = vpop.f32.mrb[0].mxu0
    %v3084 = vpop.f32.mrb[0].mxu0
    %v3085 = vadd.f32 %v3007, %v3084
    %v3086 = vpop.f32.mrb[0].mxu0
    %3087 = vdwg.mxu0
    %vm3088 = vcmp.ge.f32.partialorder %v3082, 0.0
    %vm3089 = vcmp.ge.f32.partialorder %v3085, 0.0
    %v3090 = vmul.f32 %v3082, 0.2
    %v3091 = vmul.f32 %v3085, 0.2
    %v3092 = vsel %vm3088, %v3082, %v3090
    %v3093 = vsel %vm3089, %v3085, %v3091
    %s3094 = scalar_lea.vmem %s1, 1152
    %v3095 = vld [vmem:[%s3094] sm:$0xf]
    %v3096 = vld [vmem:[%s3094 + $0x4] sm:$0xf]
    %v3097 = vld [vmem:[%s3094 + $0x8] sm:$0xf]
    %v3098 = vld [vmem:[%s3094 + $0xc] sm:$0xf]
    %v3099 = vld [vmem:[%s3094 + $0x10] sm:$0xf]
    %v3100 = vld [vmem:[%s3094 + $0x14] sm:$0xf]
    %v3101 = vld [vmem:[%s3094 + $0x18] sm:$0xf]
    %v3102 = vld [vmem:[%s3094 + $0x1c] sm:$0xf]
    %v3103 = vld [vmem:[%s3094 + $0x20] sm:$0xf]
    %v3104 = vld [vmem:[%s3094 + $0x24] sm:$0xf]
    %v3105 = vld [vmem:[%s3094 + $0x28] sm:$0xf]
    %v3106 = vld [vmem:[%s3094 + $0x2c] sm:$0xf]
    %v3107 = vld [vmem:[%s3094 + $0x30] sm:$0xf]
    %v3108 = vld [vmem:[%s3094 + $0x34] sm:$0xf]
    %v3109 = vld [vmem:[%s3094 + $0x38] sm:$0xf]
    %v3110 = vld [vmem:[%s3094 + $0x3c] sm:$0xf]
    %v3111 = vld [vmem:[%s3094 + $0x40] sm:$0xf]
    %v3112 = vld [vmem:[%s3094 + $0x44] sm:$0xf]
    %v3113 = vld [vmem:[%s3094 + $0x48] sm:$0xf]
    %v3114 = vld [vmem:[%s3094 + $0x4c] sm:$0xf]
    %v3115 = vld [vmem:[%s3094 + $0x50] sm:$0xf]
    %v3116 = vld [vmem:[%s3094 + $0x54] sm:$0xf]
    %v3117 = vld [vmem:[%s3094 + $0x58] sm:$0xf]
    %v3118 = vld [vmem:[%s3094 + $0x5c] sm:$0xf]
    %v3119 = vld [vmem:[%s2 + $0xc] sm:$0x1]
    %v3121 = vrot.slane %v3092, 1
    %v3123 = vrot.slane %v3092, 7
    %v3125 = vrot.slane %v3092, 5
    %v3127 = vsel %vm78, %v3121, %v3123
    %v3128 = vsel %vm78, %v3123, %v3125
    %v3131 = vrot.slane %v3127, 1
    %v3132 = vrot.slane %v3128, 1
    %v3133 = vsel %vm86, %v3131, %v3132
    %3134 = vrot.lane.b32.xlu0 %v3133, 64
    %v3135 = vpop.permute.xlu0 %3134
    %v3137 = vrot.slane %v3127, 2
    %v3138 = vrot.slane %v3128, 2
    %v3139 = vsel %vm128, %v3137, %v3138
    %v3141 = vsel %vm775, %v3127, %v3135
    %v3143 = vrot.slane %v3093, 1
    %v3145 = vrot.slane %v3093, 7
    %v3147 = vrot.slane %v3093, 5
    %v3149 = vsel %vm78, %v3143, %v3145
    %v3150 = vsel %vm78, %v3145, %v3147
    %v3153 = vrot.slane %v3149, 1
    %v3154 = vrot.slane %v3150, 1
    %v3155 = vsel %vm86, %v3153, %v3154
    %3156 = vrot.lane.b32.xlu0 %v3155, 64
    %v3157 = vpop.permute.xlu0 %3156
    %v3159 = vrot.slane %v3149, 2
    %v3160 = vrot.slane %v3150, 2
    %v3161 = vsel %vm128, %v3159, %v3160
    %v3163 = vsel %vm775, %v3149, %v3157
    %v3164 = vpack.c.bf16 %v3163, %v3141
    %v3165 = vpack.c.bf16 %v3161, %v3139
    %v3166 = vlaneseq
    %v3167 = vshrl.u32 %v3166, 7
    %v3168 = vsub.s32 0, %v3167
    %v3169 = vrot.slane %v3119, %v3168
    %v3194 = vunpack.c.l.b16 %v3095
    %v3195 = vunpack.c.l.b16 %v3096
    %v3196 = vunpack.c.l.b16 %v3097
    %v3197 = vunpack.c.l.b16 %v3098
    %v3198 = vunpack.c.l.b16 %v3099
    %v3199 = vunpack.c.l.b16 %v3100
    %v3200 = vunpack.c.l.b16 %v3101
    %v3201 = vunpack.c.l.b16 %v3102
    %v3202 = vunpack.c.l.b16 %v3103
    %v3203 = vunpack.c.l.b16 %v3104
    %v3204 = vunpack.c.l.b16 %v3105
    %v3205 = vunpack.c.l.b16 %v3106
    %v3206 = vunpack.c.l.b16 %v3107
    %v3207 = vunpack.c.l.b16 %v3108
    %v3208 = vunpack.c.l.b16 %v3109
    %v3209 = vunpack.c.l.b16 %v3110
    %v3210 = vunpack.c.l.b16 %v3111
    %v3211 = vunpack.c.l.b16 %v3112
    %v3212 = vunpack.c.l.b16 %v3113
    %v3213 = vunpack.c.l.b16 %v3114
    %v3214 = vunpack.c.l.b16 %v3115
    %v3215 = vunpack.c.l.b16 %v3116
    %v3216 = vunpack.c.l.b16 %v3117
    %v3217 = vunpack.c.l.b16 %v3118
    %v3218 = vpack.c.b16 %v3195, %v3194
    %v3219 = vpack.c.b16 %v3197, %v3196
    %v3220 = vpack.c.b16 %v3199, %v3198
    %v3221 = vpack.c.b16 %v3201, %v3200
    %v3222 = vpack.c.b16 %v3203, %v3202
    %v3223 = vpack.c.b16 %v3205, %v3204
    %v3224 = vpack.c.b16 %v3207, %v3206
    %v3225 = vpack.c.b16 %v3209, %v3208
    %v3226 = vpack.c.b16 %v3211, %v3210
    %v3227 = vpack.c.b16 %v3213, %v3212
    %v3228 = vpack.c.b16 %v3215, %v3214
    %v3229 = vpack.c.b16 %v3217, %v3216
    %v3243 = vsel %vm775, %v3165, 0
    %3245 = vmatprep.subr.bf16.mxu0 0
    %3246 = vmatpush1.bf16.msra.mxu0 %v3218
    %3247 = vmatprep.subr.bf16.mxu0 0
    %3248 = vmatpush1.bf16.msra.mxu0 %v3219
    %3249 = vmatprep.subr.bf16.mxu0 0
    %3250 = vmatpush1.bf16.msra.mxu0 %v3220
    %3251 = vmatprep.subr.bf16.mxu0 0
    %3252 = vmatpush1.bf16.msra.mxu0 %v3221
    %3253 = vmatprep.subr.bf16.mxu0 0
    %3254 = vmatpush1.bf16.msra.mxu0 %v3222
    %3255 = vmatprep.subr.bf16.mxu0 0
    %3256 = vmatpush1.bf16.msra.mxu0 %v3223
    %3257 = vmatprep.subr.bf16.mxu0 0
    %3258 = vmatpush1.bf16.msra.mxu0 %v3224
    %3259 = vmatprep.subr.bf16.mxu0 0
    %3260 = vmatpush1.bf16.msra.mxu0 %v3225
    %3261 = vmatprep.subr.bf16.mxu0 0
    %3262 = vmatpush1.bf16.msra.mxu0 %v3226
    %3263 = vmatprep.subr.bf16.mxu0 0
    %3264 = vmatpush1.bf16.msra.mxu0 %v3227
    %3265 = vmatprep.subr.bf16.mxu0 0
    %3266 = vmatpush1.bf16.msra.mxu0 %v3228
    %3267 = vmatprep.subr.bf16.mxu0 0
    %3268 = vmatpush1.bf16.msra.mxu0 %v3229
    %3269 = vmatprep.subr.bf16.mxu0 0
    %3270 = vmatpush1.bf16.msra.mxu0 0
    %3271 = vmatprep.subr.bf16.mxu0 0
    %3272 = vmatpush1.bf16.msra.mxu0 0
    %3273 = vmatprep.subr.bf16.mxu0 0
    %3274 = vmatpush1.bf16.msra.mxu0 0
    %3275 = vmatprep.subr.bf16.mxu0 0
    %3276 = vmatpush1.bf16.msra.mxu0 0
    %3277 = vmatprep.mubr.bf16.mxu0 %v3243
    %3278 = vmatmul.mubr.bf16.gmra.mrb[0].mxu0 %v3164
    %v3279 = vpop.f32.mrb[0].mxu0
    %v3280 = vadd.f32 %v3169, %v3279
    %v3281 = vpop.f32.mrb[0].mxu0
    %v3282 = vpop.f32.mrb[0].mxu0
    %v3283 = vadd.f32 %v3169, %v3282
    %v3284 = vpop.f32.mrb[0].mxu0
    %3285 = vdwg.mxu0
    %vm3286 = vcmp.ge.f32.partialorder %v3280, 0.0
    %vm3287 = vcmp.ge.f32.partialorder %v3283, 0.0
    %v3288 = vmul.f32 %v3280, 0.2
    %v3289 = vmul.f32 %v3283, 0.2
    %v3290 = vsel %vm3286, %v3280, %v3288
    %v3291 = vsel %vm3287, %v3283, %v3289
    %s3292 = scalar_lea.vmem %s1, 1248
    %v3293 = vld [vmem:[%s3292] sm:$0xf]
    %v3294 = vld [vmem:[%s3292 + $0x4] sm:$0xf]
    %v3295 = vld [vmem:[%s3292 + $0x8] sm:$0xf]
    %v3296 = vld [vmem:[%s3292 + $0xc] sm:$0xf]
    %v3297 = vld [vmem:[%s3292 + $0x10] sm:$0xf]
    %v3298 = vld [vmem:[%s3292 + $0x14] sm:$0xf]
    %v3299 = vld [vmem:[%s3292 + $0x18] sm:$0xf]
    %v3300 = vld [vmem:[%s3292 + $0x1c] sm:$0xf]
    %v3301 = vld [vmem:[%s2 + $0xd] sm:$0x1]
    %v3302 = vpack.c.bf16 %v3291, %v3290
    %v3303 = vlaneseq
    %v3304 = vshrl.u32 %v3303, 7
    %v3305 = vsub.s32 0, %v3304
    %v3306 = vrot.slane %v3301, %v3305
    %v3315 = vunpack.c.l.b16 %v3293
    %v3316 = vunpack.c.l.b16 %v3294
    %v3317 = vunpack.c.l.b16 %v3295
    %v3318 = vunpack.c.l.b16 %v3296
    %v3319 = vunpack.c.l.b16 %v3297
    %v3320 = vunpack.c.l.b16 %v3298
    %v3321 = vunpack.c.l.b16 %v3299
    %v3322 = vunpack.c.l.b16 %v3300
    %v3323 = vpack.c.b16 %v3316, %v3315
    %v3324 = vpack.c.b16 %v3318, %v3317
    %v3325 = vpack.c.b16 %v3320, %v3319
    %v3326 = vpack.c.b16 %v3322, %v3321
    %v3332 = vsel %vm775, %v3302, 0
    %3334 = vmatprep.subr.bf16.mxu0 0
    %3335 = vmatpush1.bf16.msra.mxu0 %v3323
    %3336 = vmatprep.subr.bf16.mxu0 0
    %3337 = vmatpush1.bf16.msra.mxu0 %v3324
    %3338 = vmatprep.subr.bf16.mxu0 0
    %3339 = vmatpush1.bf16.msra.mxu0 %v3325
    %3340 = vmatprep.subr.bf16.mxu0 0
    %3341 = vmatpush1.bf16.msra.mxu0 %v3326
    %3342 = vmatprep.subr.bf16.mxu0 0
    %3343 = vmatpush1.bf16.msra.mxu0 0
    %3344 = vmatprep.subr.bf16.mxu0 0
    %3345 = vmatpush1.bf16.msra.mxu0 0
    %3346 = vmatprep.subr.bf16.mxu0 0
    %3347 = vmatpush1.bf16.msra.mxu0 0
    %3348 = vmatprep.subr.bf16.mxu0 0
    %3349 = vmatpush1.bf16.msra.mxu0 0
    %3350 = vmatprep.subr.bf16.mxu0 0
    %3351 = vmatpush1.bf16.msra.mxu0 0
    %3352 = vmatprep.subr.bf16.mxu0 0
    %3353 = vmatpush1.bf16.msra.mxu0 0
    %3354 = vmatprep.subr.bf16.mxu0 0
    %3355 = vmatpush1.bf16.msra.mxu0 0
    %3356 = vmatprep.subr.bf16.mxu0 0
    %3357 = vmatpush1.bf16.msra.mxu0 0
    %3358 = vmatprep.subr.bf16.mxu0 0
    %3359 = vmatpush1.bf16.msra.mxu0 0
    %3360 = vmatprep.subr.bf16.mxu0 0
    %3361 = vmatpush1.bf16.msra.mxu0 0
    %3362 = vmatprep.subr.bf16.mxu0 0
    %3363 = vmatpush1.bf16.msra.mxu0 0
    %3364 = vmatprep.subr.bf16.mxu0 0
    %3365 = vmatpush1.bf16.msra.mxu0 0
    %3366 = vmatprep.mubr.bf16.mxu0 0
    %3367 = vmatmul.mubr.bf16.gmra.mrb[0].mxu0 %v3332
    %v3368 = vpop.f32.mrb[0].mxu0
    %v3369 = vadd.f32 %v3306, %v3368
    %v3370 = vpop.f32.mrb[0].mxu0
    %v3371 = vpop.f32.mrb[0].mxu0
    %v3372 = vadd.f32 %v3306, %v3371
    %v3373 = vpop.f32.mrb[0].mxu0
    %3374 = vdwg.mxu0
    %v3375 = vadd.f32 %v3369, %v3092
    %v3376 = vadd.f32 %v3372, %v3093
    %s3377 = scalar_lea.vmem %s1, 1344
    %v3378 = vld [vmem:[%s3377] sm:$0xf]
    %v3379 = vld [vmem:[%s3377 + $0x4] sm:$0xf]
    %v3380 = vld [vmem:[%s3377 + $0x8] sm:$0xf]
    %v3381 = vld [vmem:[%s3377 + $0xc] sm:$0xf]
    %v3382 = vld [vmem:[%s3377 + $0x10] sm:$0xf]
    %v3383 = vld [vmem:[%s3377 + $0x14] sm:$0xf]
    %v3384 = vld [vmem:[%s3377 + $0x18] sm:$0xf]
    %v3385 = vld [vmem:[%s3377 + $0x1c] sm:$0xf]
    %v3386 = vld [vmem:[%s3377 + $0x20] sm:$0xf]
    %v3387 = vld [vmem:[%s3377 + $0x24] sm:$0xf]
    %v3388 = vld [vmem:[%s3377 + $0x28] sm:$0xf]
    %v3389 = vld [vmem:[%s3377 + $0x2c] sm:$0xf]
    %v3390 = vld [vmem:[%s3377 + $0x30] sm:$0xf]
    %v3391 = vld [vmem:[%s3377 + $0x34] sm:$0xf]
    %v3392 = vld [vmem:[%s3377 + $0x38] sm:$0xf]
    %v3393 = vld [vmem:[%s3377 + $0x3c] sm:$0xf]
    %v3394 = vld [vmem:[%s3377 + $0x40] sm:$0xf]
    %v3395 = vld [vmem:[%s3377 + $0x44] sm:$0xf]
    %v3396 = vld [vmem:[%s3377 + $0x48] sm:$0xf]
    %v3397 = vld [vmem:[%s3377 + $0x4c] sm:$0xf]
    %v3398 = vld [vmem:[%s3377 + $0x50] sm:$0xf]
    %v3399 = vld [vmem:[%s3377 + $0x54] sm:$0xf]
    %v3400 = vld [vmem:[%s3377 + $0x58] sm:$0xf]
    %v3401 = vld [vmem:[%s3377 + $0x5c] sm:$0xf]
    %v3402 = vld [vmem:[%s2 + $0xe] sm:$0x1]
    %v3404 = vrot.slane %v3375, 3
    %v3406 = vrot.slane %v3375, 1
    %v3408 = vrot.slane %v3375, 7
    %v3410 = vrot.slane %v3375, 5
    %v3412 = vsel %vm78, %v3404, %v3406
    %v3413 = vsel %vm49, %v3412, %v3408
    %v3414 = vsel %vm82, %v3413, %v3410
    %v3415 = vsel %vm82, %v3410, %v3404
    %v3416 = vsel %vm212, %v3415, %v3406
    %v3417 = vsel %vm170, %v3416, %v3408
    %v3420 = vrot.slane %v3414, 3
    %v3421 = vrot.slane %v3417, 3
    %v3422 = vsel %vm170, %v3420, %v3421
    %3423 = vrot.lane.b32.xlu0 %v3422, 64
    %v3424 = vpop.permute.xlu0 %3423
    %v3426 = vrot.slane %v3414, 6
    %v3427 = vrot.slane %v3417, 6
    %v3428 = vsel %vm49, %v3426, %v3427
    %v3430 = vsel %vm775, %v3414, %v3424
    %v3432 = vrot.slane %v3376, 3
    %v3434 = vrot.slane %v3376, 1
    %v3436 = vrot.slane %v3376, 7
    %v3438 = vrot.slane %v3376, 5
    %v3440 = vsel %vm78, %v3432, %v3434
    %v3441 = vsel %vm49, %v3440, %v3436
    %v3442 = vsel %vm82, %v3441, %v3438
    %v3443 = vsel %vm82, %v3438, %v3432
    %v3444 = vsel %vm212, %v3443, %v3434
    %v3445 = vsel %vm170, %v3444, %v3436
    %v3448 = vrot.slane %v3442, 3
    %v3449 = vrot.slane %v3445, 3
    %v3450 = vsel %vm170, %v3448, %v3449
    %3451 = vrot.lane.b32.xlu0 %v3450, 64
    %v3452 = vpop.permute.xlu0 %3451
    %v3454 = vrot.slane %v3442, 6
    %v3455 = vrot.slane %v3445, 6
    %v3456 = vsel %vm49, %v3454, %v3455
    %v3458 = vsel %vm775, %v3442, %v3452
    %v3459 = vpack.c.bf16 %v3458, %v3430
    %v3460 = vpack.c.bf16 %v3456, %v3428
    %v3461 = vlaneseq
    %v3462 = vshrl.u32 %v3461, 7
    %v3463 = vsub.s32 0, %v3462
    %v3464 = vrot.slane %v3402, %v3463
    %v3489 = vunpack.c.l.b16 %v3378
    %v3490 = vunpack.c.l.b16 %v3379
    %v3491 = vunpack.c.l.b16 %v3380
    %v3492 = vunpack.c.l.b16 %v3381
    %v3493 = vunpack.c.l.b16 %v3382
    %v3494 = vunpack.c.l.b16 %v3383
    %v3495 = vunpack.c.l.b16 %v3384
    %v3496 = vunpack.c.l.b16 %v3385
    %v3497 = vunpack.c.l.b16 %v3386
    %v3498 = vunpack.c.l.b16 %v3387
    %v3499 = vunpack.c.l.b16 %v3388
    %v3500 = vunpack.c.l.b16 %v3389
    %v3501 = vunpack.c.l.b16 %v3390
    %v3502 = vunpack.c.l.b16 %v3391
    %v3503 = vunpack.c.l.b16 %v3392
    %v3504 = vunpack.c.l.b16 %v3393
    %v3505 = vunpack.c.l.b16 %v3394
    %v3506 = vunpack.c.l.b16 %v3395
    %v3507 = vunpack.c.l.b16 %v3396
    %v3508 = vunpack.c.l.b16 %v3397
    %v3509 = vunpack.c.l.b16 %v3398
    %v3510 = vunpack.c.l.b16 %v3399
    %v3511 = vunpack.c.l.b16 %v3400
    %v3512 = vunpack.c.l.b16 %v3401
    %v3513 = vpack.c.b16 %v3490, %v3489
    %v3514 = vpack.c.b16 %v3492, %v3491
    %v3515 = vpack.c.b16 %v3494, %v3493
    %v3516 = vpack.c.b16 %v3496, %v3495
    %v3517 = vpack.c.b16 %v3498, %v3497
    %v3518 = vpack.c.b16 %v3500, %v3499
    %v3519 = vpack.c.b16 %v3502, %v3501
    %v3520 = vpack.c.b16 %v3504, %v3503
    %v3521 = vpack.c.b16 %v3506, %v3505
    %v3522 = vpack.c.b16 %v3508, %v3507
    %v3523 = vpack.c.b16 %v3510, %v3509
    %v3524 = vpack.c.b16 %v3512, %v3511
    %v3538 = vsel %vm775, %v3460, 0
    %3540 = vmatprep.subr.bf16.mxu0 0
    %3541 = vmatpush1.bf16.msra.mxu0 %v3513
    %3542 = vmatprep.subr.bf16.mxu0 0
    %3543 = vmatpush1.bf16.msra.mxu0 %v3514
    %3544 = vmatprep.subr.bf16.mxu0 0
    %3545 = vmatpush1.bf16.msra.mxu0 %v3515
    %3546 = vmatprep.subr.bf16.mxu0 0
    %3547 = vmatpush1.bf16.msra.mxu0 %v3516
    %3548 = vmatprep.subr.bf16.mxu0 0
    %3549 = vmatpush1.bf16.msra.mxu0 %v3517
    %3550 = vmatprep.subr.bf16.mxu0 0
    %3551 = vmatpush1.bf16.msra.mxu0 %v3518
    %3552 = vmatprep.subr.bf16.mxu0 0
    %3553 = vmatpush1.bf16.msra.mxu0 %v3519
    %3554 = vmatprep.subr.bf16.mxu0 0
    %3555 = vmatpush1.bf16.msra.mxu0 %v3520
    %3556 = vmatprep.subr.bf16.mxu0 0
    %3557 = vmatpush1.bf16.msra.mxu0 %v3521
    %3558 = vmatprep.subr.bf16.mxu0 0
    %3559 = vmatpush1.bf16.msra.mxu0 %v3522
    %3560 = vmatprep.subr.bf16.mxu0 0
    %3561 = vmatpush1.bf16.msra.mxu0 %v3523
    %3562 = vmatprep.subr.bf16.mxu0 0
    %3563 = vmatpush1.bf16.msra.mxu0 %v3524
    %3564 = vmatprep.subr.bf16.mxu0 0
    %3565 = vmatpush1.bf16.msra.mxu0 0
    %3566 = vmatprep.subr.bf16.mxu0 0
    %3567 = vmatpush1.bf16.msra.mxu0 0
    %3568 = vmatprep.subr.bf16.mxu0 0
    %3569 = vmatpush1.bf16.msra.mxu0 0
    %3570 = vmatprep.subr.bf16.mxu0 0
    %3571 = vmatpush1.bf16.msra.mxu0 0
    %3572 = vmatprep.mubr.bf16.mxu0 %v3538
    %3573 = vmatmul.mubr.bf16.gmra.mrb[0].mxu0 %v3459
    %v3574 = vpop.f32.mrb[0].mxu0
    %v3575 = vadd.f32 %v3464, %v3574
    %v3576 = vpop.f32.mrb[0].mxu0
    %v3577 = vpop.f32.mrb[0].mxu0
    %v3578 = vadd.f32 %v3464, %v3577
    %v3579 = vpop.f32.mrb[0].mxu0
    %3580 = vdwg.mxu0
    %vm3581 = vcmp.ge.f32.partialorder %v3575, 0.0
    %vm3582 = vcmp.ge.f32.partialorder %v3578, 0.0
    %v3583 = vmul.f32 %v3575, 0.2
    %v3584 = vmul.f32 %v3578, 0.2
    %v3585 = vsel %vm3581, %v3575, %v3583
    %v3586 = vsel %vm3582, %v3578, %v3584
    %s3587 = scalar_lea.vmem %s1, 1440
    %v3588 = vld [vmem:[%s3587] sm:$0xf]
    %v3589 = vld [vmem:[%s3587 + $0x4] sm:$0xf]
    %v3590 = vld [vmem:[%s3587 + $0x8] sm:$0xf]
    %v3591 = vld [vmem:[%s3587 + $0xc] sm:$0xf]
    %v3592 = vld [vmem:[%s3587 + $0x10] sm:$0xf]
    %v3593 = vld [vmem:[%s3587 + $0x14] sm:$0xf]
    %v3594 = vld [vmem:[%s3587 + $0x18] sm:$0xf]
    %v3595 = vld [vmem:[%s3587 + $0x1c] sm:$0xf]
    %v3596 = vld [vmem:[%s2 + $0xf] sm:$0x1]
    %v3597 = vpack.c.bf16 %v3586, %v3585
    %v3598 = vlaneseq
    %v3599 = vshrl.u32 %v3598, 7
    %v3600 = vsub.s32 0, %v3599
    %v3601 = vrot.slane %v3596, %v3600
    %v3610 = vunpack.c.l.b16 %v3588
    %v3611 = vunpack.c.l.b16 %v3589
    %v3612 = vunpack.c.l.b16 %v3590
    %v3613 = vunpack.c.l.b16 %v3591
    %v3614 = vunpack.c.l.b16 %v3592
    %v3615 = vunpack.c.l.b16 %v3593
    %v3616 = vunpack.c.l.b16 %v3594
    %v3617 = vunpack.c.l.b16 %v3595
    %v3618 = vpack.c.b16 %v3611, %v3610
    %v3619 = vpack.c.b16 %v3613, %v3612
    %v3620 = vpack.c.b16 %v3615, %v3614
    %v3621 = vpack.c.b16 %v3617, %v3616
    %v3627 = vsel %vm775, %v3597, 0
    %3629 = vmatprep.subr.bf16.mxu0 0
    %3630 = vmatpush1.bf16.msra.mxu0 %v3618
    %3631 = vmatprep.subr.bf16.mxu0 0
    %3632 = vmatpush1.bf16.msra.mxu0 %v3619
    %3633 = vmatprep.subr.bf16.mxu0 0
    %3634 = vmatpush1.bf16.msra.mxu0 %v3620
    %3635 = vmatprep.subr.bf16.mxu0 0
    %3636 = vmatpush1.bf16.msra.mxu0 %v3621
    %3637 = vmatprep.subr.bf16.mxu0 0
    %3638 = vmatpush1.bf16.msra.mxu0 0
    %3639 = vmatprep.subr.bf16.mxu0 0
    %3640 = vmatpush1.bf16.msra.mxu0 0
    %3641 = vmatprep.subr.bf16.mxu0 0
    %3642 = vmatpush1.bf16.msra.mxu0 0
    %3643 = vmatprep.subr.bf16.mxu0 0
    %3644 = vmatpush1.bf16.msra.mxu0 0
    %3645 = vmatprep.subr.bf16.mxu0 0
    %3646 = vmatpush1.bf16.msra.mxu0 0
    %3647 = vmatprep.subr.bf16.mxu0 0
    %3648 = vmatpush1.bf16.msra.mxu0 0
    %3649 = vmatprep.subr.bf16.mxu0 0
    %3650 = vmatpush1.bf16.msra.mxu0 0
    %3651 = vmatprep.subr.bf16.mxu0 0
    %3652 = vmatpush1.bf16.msra.mxu0 0
    %3653 = vmatprep.subr.bf16.mxu0 0
    %3654 = vmatpush1.bf16.msra.mxu0 0
    %3655 = vmatprep.subr.bf16.mxu0 0
    %3656 = vmatpush1.bf16.msra.mxu0 0
    %3657 = vmatprep.subr.bf16.mxu0 0
    %3658 = vmatpush1.bf16.msra.mxu0 0
    %3659 = vmatprep.subr.bf16.mxu0 0
    %3660 = vmatpush1.bf16.msra.mxu0 0
    %3661 = vmatprep.mubr.bf16.mxu0 0
    %3662 = vmatmul.mubr.bf16.gmra.mrb[0].mxu0 %v3627
    %v3663 = vpop.f32.mrb[0].mxu0
    %v3664 = vadd.f32 %v3601, %v3663
    %v3665 = vpop.f32.mrb[0].mxu0
    %v3666 = vpop.f32.mrb[0].mxu0
    %v3667 = vadd.f32 %v3601, %v3666
    %v3668 = vpop.f32.mrb[0].mxu0
    %3669 = vdwg.mxu0
    %v3670 = vadd.f32 %v3664, %v3375
    %v3671 = vadd.f32 %v3667, %v3376
    %3672 = vst.msk [vmem:[#allocation2] sm:$0xff] %vm775, %v3670
    %3673 = vst.msk [vmem:[#allocation2 + $0x8] sm:$0xff] %vm775, %v3671
    // Predicated region
    $region18: #{tpu_custom_call.1} parent=1 // pred_check
      _
    $region19: #{tpu_custom_call.1} parent=1 // pred_check_branch
      %3675 = sbr.rel (0) target = $region21
    $region20: #{tpu_custom_call.1} parent=1 // pred_region
      %s3677 = ssub.s32 256, 256
      %3678 = vsyncadd [#allocation3], %s3677
      %s3679 = sshll.u32 [#allocation2], 4
      %s3680 = int_to_ptr.vmem [resolvable:$true] %s3679
      %3685 = dma.vmem_to_hbm [thread:$0]  %s3680, 256, %s4, [#allocation3], 128, 128, 8
    $region21: #{tpu_custom_call.1} parent=1 // pred_fallthru
      _
    // Predicated region
    $region22: #{tpu_custom_call.1} parent=1 // pred_check
      _
    $region23: #{tpu_custom_call.1} parent=1 // pred_check_branch
      %3687 = sbr.rel (0) target = $region25
    $region24: #{tpu_custom_call.1} parent=1 // pred_region
      %3688 = dma.done [#allocation3], 256
    $region25: #{tpu_custom_call.1} parent=1 // pred_fallthru
      _
    %3689 = vsyncpa [#allocation3], 1

</llo_original>
